<compile_context>
chip_gen: v7x
topology: tpu7x:2x2x1
jax: 0.10.0
libtpu: 0.0.40
codegen_flags: <defaults>
</compile_context>

<pallas_src>
import functools

import jax
import jax.numpy as jnp
from jax.experimental import pallas as pl
from jax.experimental.pallas import tpu as pltpu

_BN_EPS = 1e-5          # torch.nn.BatchNorm1d default eps
_NORM_EPS = 1e-12       # F.normalize default eps
_LANE = 128             # TPU lane width: pad feature dims to this
_MXU_DTYPE = jnp.bfloat16   # operand dtype for MXU dots (f32 accumulation)
_G_PACK = 16            # pad graph rows of the stacked [A; P] to bf16 sublane packing


def _round_up(x, m):
    return (x + m - 1) // m * m


def _vmem_spec():
    return pl.BlockSpec(memory_space=pltpu.MemorySpace.VMEM)


@functools.lru_cache(maxsize=None)
def _vmem_limit_bytes():
    """48 MiB on 64-MiB-VMEM parts (v7x), 64 MiB on 128-MiB parts (v5e/v6e)."""
    try:
        cap = int(getattr(pltpu.get_tpu_info(), "vmem_capacity_bytes",
                          128 * 1024 * 1024))
    except Exception:
        cap = 128 * 1024 * 1024
    if cap <= 64 * 1024 * 1024:
        return 48 * 1024 * 1024       # v7x: leave headroom for scratch/spill
    return 64 * 1024 * 1024           # v5e/v6e; raise toward ~100 MiB for large N


# ---------------- fused Pallas kernel: whole forward pass for one batch ----------------

def _make_fused_kernel(num_layers, n_pad, d_pad, n_real):
    """All GIN layers + per-layer global_add_pool + final L2 normalize."""
    inv_n = 1.0 / float(n_real)

    def kernel(ap_ref, x_ref, *rest):
        o_ref = rest[-1]
        layer_refs = rest[:-1]

        ap = ap_ref[...]        # bf16 (n_pad + g_pad, n_pad): [A (+I folded) ; P]
        h_in = x_ref[...]       # bf16 (n_pad, f_pad) node features

        # Row mask of real node rows, as a matmul LHS: BN column sums run on the
        # MXU instead of masked-VPU-multiply + XLU cross-sublane reductions.
        rmask = (jax.lax.broadcasted_iota(jnp.int32, (1, n_pad), 1)
                 < n_real).astype(jnp.float32)

        # Layer-0 GIN aggregation: only the A rows of the stacked operand.
        agg = jnp.dot(ap[:n_pad], h_in, preferred_element_type=jnp.float32)

        pooled = []
        for l in range(num_layers):
            w1, b1, w2, b2, gamma, beta = layer_refs[6 * l:6 * l + 6]
            # GIN MLP: Linear -> ReLU -> Linear, then the outer F.relu.
            z = jnp.dot(agg.astype(_MXU_DTYPE), w1[...],
                        preferred_element_type=jnp.float32) + b1[...]
            z = jnp.maximum(z, 0.0)
            z = jnp.dot(z.astype(_MXU_DTYPE), w2[...],
                        preferred_element_type=jnp.float32) + b2[...]
            z = jnp.maximum(z, 0.0)
            # BatchNorm1d, training-mode batch statistics (biased variance),
            # two-pass, restricted to the real node rows via the MXU mask dots.
            mean = jnp.dot(rmask, z, preferred_element_type=jnp.float32) * inv_n
            c = z - mean
            var = jnp.dot(rmask, c * c, preferred_element_type=jnp.float32) * inv_n
            h = gamma[...] * c * jax.lax.rsqrt(var + _BN_EPS) + beta[...]

            if l + 1 < num_layers:
                # One stacked matmul: [A; P] @ h -> next layer's aggregation
                # (top n_pad rows) AND this layer's global_add_pool (bottom
                # rows), with a single bf16 cast of h per layer.
                full = jnp.dot(ap, h.astype(_MXU_DTYPE),
                               preferred_element_type=jnp.float32)
                agg = full[:n_pad]
                pooled.append(full[n_pad:])
            else:
                # Final layer only needs the pooling; keep it f32 (tiny dot) so
                # the returned embedding is not bf16-rounded at this step.
                p_f32 = ap[n_pad:].astype(jnp.float32)   # 0/1 entries: exact
                pooled.append(jnp.dot(p_f32, h,
                                      preferred_element_type=jnp.float32))

        # F.normalize(cat(pooled, 1), dim=1).  Padded lanes / padded graph rows
        # are exactly zero, so the norm over the padded width equals the norm
        # over the real columns, and padded rows stay zero.
        ss = pooled[0] * pooled[0]
        for l in range(1, num_layers):
            ss = ss + pooled[l] * pooled[l]
        ss = jnp.sum(ss, axis=1, keepdims=True)
        inv_norm = jax.lax.rsqrt(jnp.maximum(ss, _NORM_EPS * _NORM_EPS))
        for l in range(num_layers):
            o_ref[:, l * d_pad:(l + 1) * d_pad] = pooled[l] * inv_norm

    return kernel


# ---------------- jitted per-batch wrapper (operand build + pallas_call) ----------------

@functools.partial(jax.jit, static_argnames=("num_graphs", "dim"))
def _forward_batch(layer_params, x, edge_index, batch, *, num_graphs, dim):
    n, f = x.shape
    num_layers = len(layer_params) // 6
    f_pad = layer_params[0].shape[0]     # padded input dim of layer-0 w1
    d_pad = layer_params[2].shape[0]     # padded hidden dim
    n_pad = _round_up(n, _LANE)          # lane axis of [A; P]
    g_pad = _round_up(num_graphs, _G_PACK)

    # bf16 node features (padded lanes exactly zero).
    x_pad = jnp.zeros((n_pad, f_pad), _MXU_DTYPE).at[:n, :f].set(
        x.astype(_MXU_DTYPE))

    # Dense adjacency A[i, j] = #edges j -> i, GIN (1+eps)*x_i self term folded
    # in as the identity (eps = 0).
    # TODO(synk): replace this O(N_pad^2) scatter build + dense A@h with a CSR
    # scalar-prefetch segment-sum kernel for realistic graph sizes.
    src, dst = edge_index[0], edge_index[1]
    a = jnp.zeros((n_pad, n_pad), jnp.float32).at[dst, src].add(1.0)
    idx = jnp.arange(n)
    a = a.at[idx, idx].add(1.0)

    # One-hot pooling matrix; padded nodes get graph id -1 so they match nothing.
    batch_pad = jnp.full((n_pad,), -1, jnp.int32).at[:n].set(batch.astype(jnp.int32))
    p = (batch_pad[None, :]
         == jnp.arange(g_pad, dtype=jnp.int32)[:, None]).astype(jnp.float32)

    # Stacked bf16 LHS [A; P]: half the DMA bytes of an f32 A, and one matmul
    # per layer yields both the next-layer aggregation and the pooled output.
    ap = jnp.concatenate([a, p], axis=0).astype(_MXU_DTYPE)

    out_pad = pl.pallas_call(
        _make_fused_kernel(num_layers, n_pad, d_pad, n),
        out_shape=jax.ShapeDtypeStruct((g_pad, num_layers * d_pad), jnp.float32),
        in_specs=[_vmem_spec()] * (2 + len(layer_params)),
        out_specs=_vmem_spec(),
        compiler_params=pltpu.CompilerParams(vmem_limit_bytes=_vmem_limit_bytes()),
    )(ap, x_pad, *layer_params)

    # Strip graph-row and lane padding: (G_pad, L*d_pad) -> (G, L*dim).
    emb = out_pad[:num_graphs].reshape(num_graphs, num_layers, d_pad)[:, :, :dim]
    return emb.reshape(num_graphs, num_layers * dim)


# ---------------- parameter setup + module glue ----------------

def _init_linear(key, fan_in, fan_out, fan_in_pad, fan_out_pad):
    """PyTorch nn.Linear default init, zero-padded to lane-friendly shapes."""
    k1, k2 = jax.random.split(key)
    bound = 1.0 / float(fan_in) ** 0.5
    w = jax.random.uniform(k1, (fan_in, fan_out), jnp.float32, -bound, bound)
    b = jax.random.uniform(k2, (1, fan_out), jnp.float32, -bound, bound)
    w_pad = jnp.zeros((fan_in_pad, fan_out_pad), jnp.float32).at[:fan_in, :fan_out].set(w)
    b_pad = jnp.zeros((1, fan_out_pad), jnp.float32).at[:, :fan_out].set(b)
    return w_pad, b_pad


class GNNPregraphPallas:
    """JAX/Pallas port of GNN_pregraph.forward (Encoder_Core GIN stack)."""

    def __init__(self, num_features, dim, num_gc_layers, num_task, key):
        if num_gc_layers < 2:
            raise ValueError('num_gc_layers must be bigger than 1')
        self.num_features = num_features
        self.dim = dim
        self.num_gc_layers = num_gc_layers
        self.embedding_dim = dim * num_gc_layers
        f_pad = _round_up(num_features, _LANE)
        d_pad = _round_up(dim, _LANE)
        keys = jax.random.split(key, 2 * num_gc_layers + 3)
        params = []
        for i in range(num_gc_layers):
            fin, fin_pad = (num_features, f_pad) if i == 0 else (dim, d_pad)
            w1, b1 = _init_linear(keys[2 * i], fin, dim, fin_pad, d_pad)
            w2, b2 = _init_linear(keys[2 * i + 1], dim, dim, d_pad, d_pad)
            gamma = jnp.zeros((1, d_pad), jnp.float32).at[:, :dim].set(1.0)
            beta = jnp.zeros((1, d_pad), jnp.float32)
            # Weights live in bf16 (MXU operands); biases / BN params stay f32.
            params += [w1.astype(_MXU_DTYPE), b1, w2.astype(_MXU_DTYPE), b2,
                       gamma, beta]
        self.layer_params = tuple(params)
        # proj_head exists in the PyTorch module but its output `y` is discarded
        # by GNN_pregraph.forward (Encoder_Core.forward returns emb + labels).
        ed = self.embedding_dim
        self.proj_w1, self.proj_b1 = _init_linear(keys[-3], ed, ed, ed, ed)
        self.proj_w2, self.proj_b2 = _init_linear(keys[-2], ed, ed, ed, ed)
        # classifier is declared in __init__ but never used in forward.
        self.classifier_w = 0.02 * jax.random.normal(
            keys[-1], (ed, num_task), jnp.float32)

    def forward(self, loader):
        # loader: iterable of (x, edge_index, batch, y) mirroring the PyG
        # DataLoader loop.  y has one label per graph, so the graph count is
        # y.shape[0] (static -> no int(jnp.max(batch)) device sync).
        rets, ys = [], []
        for x, edge_index, batch, y in loader:
            emb = _forward_batch(self.layer_params, x, edge_index, batch,
                                 num_graphs=int(y.shape[0]), dim=self.dim)
            rets.append(emb)
            ys.append(y)
        return jnp.concatenate(rets, axis=0), jnp.concatenate(ys, axis=0)

    # TODO(synk): loss() wraps sklearn SVC cross-validation (svc_classify_loss);
    # no Pallas/JAX equivalent, intentionally not implemented.
    # TODO(synk): BatchNorm1d is modeled with training-mode batch statistics;
    # eval-mode running_mean/running_var are not modeled.
    # TODO(synk): add a node-row-parallel grid / core_map so both v7x
    # TensorCores are used at realistic N (cross-core BN partial-sum exchange).


if __name__ == "__main__":
    num_features, dim, num_gc_layers, num_task = 8, 32, 3, 4
    key = jax.random.PRNGKey(0)
    kp, kx, ky = jax.random.split(key, 3)
    model = GNNPregraphPallas(num_features, dim, num_gc_layers, num_task, kp)

    # Two graphs of 8 nodes each (N = 16), undirected ring edges within each graph.
    n_per, n_graphs = 8, 2
    n = n_per * n_graphs
    src, dst = [], []
    for gi in range(n_graphs):
        off = gi * n_per
        for v in range(n_per):
            u, w = off + v, off + (v + 1) % n_per
            src += [u, w]
            dst += [w, u]
    edge_index = jnp.array([src, dst], dtype=jnp.int32)
    batch = jnp.repeat(jnp.arange(n_graphs, dtype=jnp.int32), n_per)
    x = jax.random.normal(kx, (n, num_features), jnp.float32)
    y = jax.random.randint(ky, (n_graphs,), 0, num_task)

    loader = [(x, edge_index, batch, y)]          # single-batch "DataLoader"
    represent, label = model.forward(loader)
    jax.block_until_ready(represent)
    jax.block_until_ready(label)
    assert represent.shape == (n_graphs, dim * num_gc_layers)
    assert label.shape == (n_graphs,)
    assert bool(jnp.all(jnp.isfinite(represent)))
    print("KERNEL_OK")
</pallas_src>

<mosaic_0001>
module attributes {stable_mosaic.version = 11 : i64} {
  func.func private @main(%arg0: i32) attributes {dimension_semantics = [#tpu.dimension_semantics<core_parallel>], iteration_bounds = array<i64: 2>, tpu.core_type = #tpu.core_type<sc_scalar_subcore>, window_params = []} {
    return
  }
}

module attributes {stable_mosaic.version = 11 : i64} {
  func.func private @main(%arg0: i32) attributes {dimension_semantics = [#tpu.dimension_semantics<core_parallel>], iteration_bounds = array<i64: 2>, tpu.core_type = #tpu.core_type<sc_scalar_subcore>, window_params = []} {
    return
  }
}

module attributes {stable_mosaic.version = 11 : i64} {
  func.func @kernel(%arg0: memref<144x128xbf16, #tpu.memory_space<vmem>>, %arg1: memref<128x128xbf16, #tpu.memory_space<vmem>>, %arg2: memref<128x128xbf16, #tpu.memory_space<vmem>>, %arg3: memref<1x128xf32, #tpu.memory_space<vmem>>, %arg4: memref<128x128xbf16, #tpu.memory_space<vmem>>, %arg5: memref<1x128xf32, #tpu.memory_space<vmem>>, %arg6: memref<1x128xf32, #tpu.memory_space<vmem>>, %arg7: memref<1x128xf32, #tpu.memory_space<vmem>>, %arg8: memref<128x128xbf16, #tpu.memory_space<vmem>>, %arg9: memref<1x128xf32, #tpu.memory_space<vmem>>, %arg10: memref<128x128xbf16, #tpu.memory_space<vmem>>, %arg11: memref<1x128xf32, #tpu.memory_space<vmem>>, %arg12: memref<1x128xf32, #tpu.memory_space<vmem>>, %arg13: memref<1x128xf32, #tpu.memory_space<vmem>>, %arg14: memref<128x128xbf16, #tpu.memory_space<vmem>>, %arg15: memref<1x128xf32, #tpu.memory_space<vmem>>, %arg16: memref<128x128xbf16, #tpu.memory_space<vmem>>, %arg17: memref<1x128xf32, #tpu.memory_space<vmem>>, %arg18: memref<1x128xf32, #tpu.memory_space<vmem>>, %arg19: memref<1x128xf32, #tpu.memory_space<vmem>>, %arg20: memref<16x384xf32, #tpu.memory_space<vmem>>) attributes {dimension_semantics = [], scalar_prefetch = 0 : i64, scratch_operands = 0 : i64, tpu.core_type = #tpu.core_type<tc>} {
    %c0 = arith.constant 0 : index
    %c0_0 = arith.constant 0 : index
    %0 = vector.load %arg0[%c0, %c0_0] : memref<144x128xbf16, #tpu.memory_space<vmem>>, vector<144x128xbf16>
    %c0_1 = arith.constant 0 : index
    %c0_2 = arith.constant 0 : index
    %1 = vector.load %arg1[%c0_1, %c0_2] : memref<128x128xbf16, #tpu.memory_space<vmem>>, vector<128x128xbf16>
    %2 = tpu.iota {dimensions = array<i32: 1>} : vector<1x128xi32>
    %c16_i32 = arith.constant 16 : i32
    %3 = vector.broadcast %c16_i32 : i32 to vector<1x128xi32>
    %4 = arith.cmpi slt, %2, %3 : vector<1x128xi32>
    %5 = arith.extui %4 : vector<1x128xi1> to vector<1x128xi32>
    %6 = arith.sitofp %5 : vector<1x128xi32> to vector<1x128xf32>
    %7 = vector.extract_strided_slice %0 {offsets = [0, 0], sizes = [128, 128], strides = [1, 1]} : vector<144x128xbf16> to vector<128x128xbf16>
    %cst = arith.constant dense<0.000000e+00> : vector<128x128xf32>
    %8 = tpu.matmul %7, %1, %cst {dimension_numbers = #tpu.dot_dimension_numbers<[1], [0], [0], [1], [0, 0, 1, 1], [], []>} : vector<128x128xbf16>, vector<128x128xbf16>, vector<128x128xf32> -> vector<128x128xf32>
    %9 = arith.truncf %8 : vector<128x128xf32> to vector<128x128xbf16>
    %c0_3 = arith.constant 0 : index
    %c0_4 = arith.constant 0 : index
    %10 = vector.load %arg2[%c0_3, %c0_4] : memref<128x128xbf16, #tpu.memory_space<vmem>>, vector<128x128xbf16>
    %cst_5 = arith.constant dense<0.000000e+00> : vector<128x128xf32>
    %11 = tpu.matmul %9, %10, %cst_5 {dimension_numbers = #tpu.dot_dimension_numbers<[1], [0], [0], [1], [0, 0, 1, 1], [], []>} : vector<128x128xbf16>, vector<128x128xbf16>, vector<128x128xf32> -> vector<128x128xf32>
    %c0_6 = arith.constant 0 : index
    %c0_7 = arith.constant 0 : index
    %12 = vector.load %arg3[%c0_6, %c0_7] : memref<1x128xf32, #tpu.memory_space<vmem>>, vector<1x128xf32>
    %13 = vector.broadcast %12 : vector<1x128xf32> to vector<128x128xf32>
    %14 = arith.addf %11, %13 : vector<128x128xf32>
    %cst_8 = arith.constant 0.000000e+00 : f32
    %15 = vector.broadcast %cst_8 : f32 to vector<128x128xf32>
    %16 = arith.maximumf %14, %15 : vector<128x128xf32>
    %17 = arith.truncf %16 : vector<128x128xf32> to vector<128x128xbf16>
    %c0_9 = arith.constant 0 : index
    %c0_10 = arith.constant 0 : index
    %18 = vector.load %arg4[%c0_9, %c0_10] : memref<128x128xbf16, #tpu.memory_space<vmem>>, vector<128x128xbf16>
    %cst_11 = arith.constant dense<0.000000e+00> : vector<128x128xf32>
    %19 = tpu.matmul %17, %18, %cst_11 {dimension_numbers = #tpu.dot_dimension_numbers<[1], [0], [0], [1], [0, 0, 1, 1], [], []>} : vector<128x128xbf16>, vector<128x128xbf16>, vector<128x128xf32> -> vector<128x128xf32>
    %c0_12 = arith.constant 0 : index
    %c0_13 = arith.constant 0 : index
    %20 = vector.load %arg5[%c0_12, %c0_13] : memref<1x128xf32, #tpu.memory_space<vmem>>, vector<1x128xf32>
    %21 = vector.broadcast %20 : vector<1x128xf32> to vector<128x128xf32>
    %22 = arith.addf %19, %21 : vector<128x128xf32>
    %cst_14 = arith.constant 0.000000e+00 : f32
    %23 = vector.broadcast %cst_14 : f32 to vector<128x128xf32>
    %24 = arith.maximumf %22, %23 : vector<128x128xf32>
    %cst_15 = arith.constant dense<0.000000e+00> : vector<1x128xf32>
    %25 = tpu.matmul %6, %24, %cst_15 {dimension_numbers = #tpu.dot_dimension_numbers<[1], [0], [0], [1], [0, 0, 1, 1], [], []>} : vector<1x128xf32>, vector<128x128xf32>, vector<1x128xf32> -> vector<1x128xf32>
    %cst_16 = arith.constant 6.250000e-02 : f32
    %26 = vector.broadcast %cst_16 : f32 to vector<1x128xf32>
    %27 = arith.mulf %25, %26 : vector<1x128xf32>
    %28 = vector.broadcast %27 : vector<1x128xf32> to vector<128x128xf32>
    %29 = arith.subf %24, %28 : vector<128x128xf32>
    %30 = arith.mulf %29, %29 : vector<128x128xf32>
    %cst_17 = arith.constant dense<0.000000e+00> : vector<1x128xf32>
    %31 = tpu.matmul %6, %30, %cst_17 {dimension_numbers = #tpu.dot_dimension_numbers<[1], [0], [0], [1], [0, 0, 1, 1], [], []>} : vector<1x128xf32>, vector<128x128xf32>, vector<1x128xf32> -> vector<1x128xf32>
    %cst_18 = arith.constant 6.250000e-02 : f32
    %32 = vector.broadcast %cst_18 : f32 to vector<1x128xf32>
    %33 = arith.mulf %31, %32 : vector<1x128xf32>
    %c0_19 = arith.constant 0 : index
    %c0_20 = arith.constant 0 : index
    %34 = vector.load %arg6[%c0_19, %c0_20] : memref<1x128xf32, #tpu.memory_space<vmem>>, vector<1x128xf32>
    %35 = vector.broadcast %34 : vector<1x128xf32> to vector<128x128xf32>
    %36 = arith.mulf %35, %29 : vector<128x128xf32>
    %cst_21 = arith.constant 9.99999974E-6 : f32
    %37 = vector.broadcast %cst_21 : f32 to vector<1x128xf32>
    %38 = arith.addf %33, %37 : vector<1x128xf32>
    %39 = math.rsqrt %38 : vector<1x128xf32>
    %40 = vector.broadcast %39 : vector<1x128xf32> to vector<128x128xf32>
    %41 = arith.mulf %36, %40 : vector<128x128xf32>
    %c0_22 = arith.constant 0 : index
    %c0_23 = arith.constant 0 : index
    %42 = vector.load %arg7[%c0_22, %c0_23] : memref<1x128xf32, #tpu.memory_space<vmem>>, vector<1x128xf32>
    %43 = vector.broadcast %42 : vector<1x128xf32> to vector<128x128xf32>
    %44 = arith.addf %41, %43 : vector<128x128xf32>
    %45 = arith.truncf %44 : vector<128x128xf32> to vector<128x128xbf16>
    %cst_24 = arith.constant dense<0.000000e+00> : vector<144x128xf32>
    %46 = tpu.matmul %0, %45, %cst_24 {dimension_numbers = #tpu.dot_dimension_numbers<[1], [0], [0], [1], [0, 0, 1, 1], [], []>} : vector<144x128xbf16>, vector<128x128xbf16>, vector<144x128xf32> -> vector<144x128xf32>
    %47 = vector.extract_strided_slice %46 {offsets = [0, 0], sizes = [128, 128], strides = [1, 1]} : vector<144x128xf32> to vector<128x128xf32>
    %48 = vector.extract_strided_slice %46 {offsets = [128, 0], sizes = [16, 128], strides = [1, 1]} : vector<144x128xf32> to vector<16x128xf32>
    %49 = arith.truncf %47 : vector<128x128xf32> to vector<128x128xbf16>
    %c0_25 = arith.constant 0 : index
    %c0_26 = arith.constant 0 : index
    %50 = vector.load %arg8[%c0_25, %c0_26] : memref<128x128xbf16, #tpu.memory_space<vmem>>, vector<128x128xbf16>
    %cst_27 = arith.constant dense<0.000000e+00> : vector<128x128xf32>
    %51 = tpu.matmul %49, %50, %cst_27 {dimension_numbers = #tpu.dot_dimension_numbers<[1], [0], [0], [1], [0, 0, 1, 1], [], []>} : vector<128x128xbf16>, vector<128x128xbf16>, vector<128x128xf32> -> vector<128x128xf32>
    %c0_28 = arith.constant 0 : index
    %c0_29 = arith.constant 0 : index
    %52 = vector.load %arg9[%c0_28, %c0_29] : memref<1x128xf32, #tpu.memory_space<vmem>>, vector<1x128xf32>
    %53 = vector.broadcast %52 : vector<1x128xf32> to vector<128x128xf32>
    %54 = arith.addf %51, %53 : vector<128x128xf32>
    %cst_30 = arith.constant 0.000000e+00 : f32
    %55 = vector.broadcast %cst_30 : f32 to vector<128x128xf32>
    %56 = arith.maximumf %54, %55 : vector<128x128xf32>
    %57 = arith.truncf %56 : vector<128x128xf32> to vector<128x128xbf16>
    %c0_31 = arith.constant 0 : index
    %c0_32 = arith.constant 0 : index
    %58 = vector.load %arg10[%c0_31, %c0_32] : memref<128x128xbf16, #tpu.memory_space<vmem>>, vector<128x128xbf16>
    %cst_33 = arith.constant dense<0.000000e+00> : vector<128x128xf32>
    %59 = tpu.matmul %57, %58, %cst_33 {dimension_numbers = #tpu.dot_dimension_numbers<[1], [0], [0], [1], [0, 0, 1, 1], [], []>} : vector<128x128xbf16>, vector<128x128xbf16>, vector<128x128xf32> -> vector<128x128xf32>
    %c0_34 = arith.constant 0 : index
    %c0_35 = arith.constant 0 : index
    %60 = vector.load %arg11[%c0_34, %c0_35] : memref<1x128xf32, #tpu.memory_space<vmem>>, vector<1x128xf32>
    %61 = vector.broadcast %60 : vector<1x128xf32> to vector<128x128xf32>
    %62 = arith.addf %59, %61 : vector<128x128xf32>
    %cst_36 = arith.constant 0.000000e+00 : f32
    %63 = vector.broadcast %cst_36 : f32 to vector<128x128xf32>
    %64 = arith.maximumf %62, %63 : vector<128x128xf32>
    %cst_37 = arith.constant dense<0.000000e+00> : vector<1x128xf32>
    %65 = tpu.matmul %6, %64, %cst_37 {dimension_numbers = #tpu.dot_dimension_numbers<[1], [0], [0], [1], [0, 0, 1, 1], [], []>} : vector<1x128xf32>, vector<128x128xf32>, vector<1x128xf32> -> vector<1x128xf32>
    %cst_38 = arith.constant 6.250000e-02 : f32
    %66 = vector.broadcast %cst_38 : f32 to vector<1x128xf32>
    %67 = arith.mulf %65, %66 : vector<1x128xf32>
    %68 = vector.broadcast %67 : vector<1x128xf32> to vector<128x128xf32>
    %69 = arith.subf %64, %68 : vector<128x128xf32>
    %70 = arith.mulf %69, %69 : vector<128x128xf32>
    %cst_39 = arith.constant dense<0.000000e+00> : vector<1x128xf32>
    %71 = tpu.matmul %6, %70, %cst_39 {dimension_numbers = #tpu.dot_dimension_numbers<[1], [0], [0], [1], [0, 0, 1, 1], [], []>} : vector<1x128xf32>, vector<128x128xf32>, vector<1x128xf32> -> vector<1x128xf32>
    %cst_40 = arith.constant 6.250000e-02 : f32
    %72 = vector.broadcast %cst_40 : f32 to vector<1x128xf32>
    %73 = arith.mulf %71, %72 : vector<1x128xf32>
    %c0_41 = arith.constant 0 : index
    %c0_42 = arith.constant 0 : index
    %74 = vector.load %arg12[%c0_41, %c0_42] : memref<1x128xf32, #tpu.memory_space<vmem>>, vector<1x128xf32>
    %75 = vector.broadcast %74 : vector<1x128xf32> to vector<128x128xf32>
    %76 = arith.mulf %75, %69 : vector<128x128xf32>
    %cst_43 = arith.constant 9.99999974E-6 : f32
    %77 = vector.broadcast %cst_43 : f32 to vector<1x128xf32>
    %78 = arith.addf %73, %77 : vector<1x128xf32>
    %79 = math.rsqrt %78 : vector<1x128xf32>
    %80 = vector.broadcast %79 : vector<1x128xf32> to vector<128x128xf32>
    %81 = arith.mulf %76, %80 : vector<128x128xf32>
    %c0_44 = arith.constant 0 : index
    %c0_45 = arith.constant 0 : index
    %82 = vector.load %arg13[%c0_44, %c0_45] : memref<1x128xf32, #tpu.memory_space<vmem>>, vector<1x128xf32>
    %83 = vector.broadcast %82 : vector<1x128xf32> to vector<128x128xf32>
    %84 = arith.addf %81, %83 : vector<128x128xf32>
    %85 = arith.truncf %84 : vector<128x128xf32> to vector<128x128xbf16>
    %cst_46 = arith.constant dense<0.000000e+00> : vector<144x128xf32>
    %86 = tpu.matmul %0, %85, %cst_46 {dimension_numbers = #tpu.dot_dimension_numbers<[1], [0], [0], [1], [0, 0, 1, 1], [], []>} : vector<144x128xbf16>, vector<128x128xbf16>, vector<144x128xf32> -> vector<144x128xf32>
    %87 = vector.extract_strided_slice %86 {offsets = [0, 0], sizes = [128, 128], strides = [1, 1]} : vector<144x128xf32> to vector<128x128xf32>
    %88 = vector.extract_strided_slice %86 {offsets = [128, 0], sizes = [16, 128], strides = [1, 1]} : vector<144x128xf32> to vector<16x128xf32>
    %89 = arith.truncf %87 : vector<128x128xf32> to vector<128x128xbf16>
    %c0_47 = arith.constant 0 : index
    %c0_48 = arith.constant 0 : index
    %90 = vector.load %arg14[%c0_47, %c0_48] : memref<128x128xbf16, #tpu.memory_space<vmem>>, vector<128x128xbf16>
    %cst_49 = arith.constant dense<0.000000e+00> : vector<128x128xf32>
    %91 = tpu.matmul %89, %90, %cst_49 {dimension_numbers = #tpu.dot_dimension_numbers<[1], [0], [0], [1], [0, 0, 1, 1], [], []>} : vector<128x128xbf16>, vector<128x128xbf16>, vector<128x128xf32> -> vector<128x128xf32>
    %c0_50 = arith.constant 0 : index
    %c0_51 = arith.constant 0 : index
    %92 = vector.load %arg15[%c0_50, %c0_51] : memref<1x128xf32, #tpu.memory_space<vmem>>, vector<1x128xf32>
    %93 = vector.broadcast %92 : vector<1x128xf32> to vector<128x128xf32>
    %94 = arith.addf %91, %93 : vector<128x128xf32>
    %cst_52 = arith.constant 0.000000e+00 : f32
    %95 = vector.broadcast %cst_52 : f32 to vector<128x128xf32>
    %96 = arith.maximumf %94, %95 : vector<128x128xf32>
    %97 = arith.truncf %96 : vector<128x128xf32> to vector<128x128xbf16>
    %c0_53 = arith.constant 0 : index
    %c0_54 = arith.constant 0 : index
    %98 = vector.load %arg16[%c0_53, %c0_54] : memref<128x128xbf16, #tpu.memory_space<vmem>>, vector<128x128xbf16>
    %cst_55 = arith.constant dense<0.000000e+00> : vector<128x128xf32>
    %99 = tpu.matmul %97, %98, %cst_55 {dimension_numbers = #tpu.dot_dimension_numbers<[1], [0], [0], [1], [0, 0, 1, 1], [], []>} : vector<128x128xbf16>, vector<128x128xbf16>, vector<128x128xf32> -> vector<128x128xf32>
    %c0_56 = arith.constant 0 : index
    %c0_57 = arith.constant 0 : index
    %100 = vector.load %arg17[%c0_56, %c0_57] : memref<1x128xf32, #tpu.memory_space<vmem>>, vector<1x128xf32>
    %101 = vector.broadcast %100 : vector<1x128xf32> to vector<128x128xf32>
    %102 = arith.addf %99, %101 : vector<128x128xf32>
    %cst_58 = arith.constant 0.000000e+00 : f32
    %103 = vector.broadcast %cst_58 : f32 to vector<128x128xf32>
    %104 = arith.maximumf %102, %103 : vector<128x128xf32>
    %cst_59 = arith.constant dense<0.000000e+00> : vector<1x128xf32>
    %105 = tpu.matmul %6, %104, %cst_59 {dimension_numbers = #tpu.dot_dimension_numbers<[1], [0], [0], [1], [0, 0, 1, 1], [], []>} : vector<1x128xf32>, vector<128x128xf32>, vector<1x128xf32> -> vector<1x128xf32>
    %cst_60 = arith.constant 6.250000e-02 : f32
    %106 = vector.broadcast %cst_60 : f32 to vector<1x128xf32>
    %107 = arith.mulf %105, %106 : vector<1x128xf32>
    %108 = vector.broadcast %107 : vector<1x128xf32> to vector<128x128xf32>
    %109 = arith.subf %104, %108 : vector<128x128xf32>
    %110 = arith.mulf %109, %109 : vector<128x128xf32>
    %cst_61 = arith.constant dense<0.000000e+00> : vector<1x128xf32>
    %111 = tpu.matmul %6, %110, %cst_61 {dimension_numbers = #tpu.dot_dimension_numbers<[1], [0], [0], [1], [0, 0, 1, 1], [], []>} : vector<1x128xf32>, vector<128x128xf32>, vector<1x128xf32> -> vector<1x128xf32>
    %cst_62 = arith.constant 6.250000e-02 : f32
    %112 = vector.broadcast %cst_62 : f32 to vector<1x128xf32>
    %113 = arith.mulf %111, %112 : vector<1x128xf32>
    %c0_63 = arith.constant 0 : index
    %c0_64 = arith.constant 0 : index
    %114 = vector.load %arg18[%c0_63, %c0_64] : memref<1x128xf32, #tpu.memory_space<vmem>>, vector<1x128xf32>
    %115 = vector.broadcast %114 : vector<1x128xf32> to vector<128x128xf32>
    %116 = arith.mulf %115, %109 : vector<128x128xf32>
    %cst_65 = arith.constant 9.99999974E-6 : f32
    %117 = vector.broadcast %cst_65 : f32 to vector<1x128xf32>
    %118 = arith.addf %113, %117 : vector<1x128xf32>
    %119 = math.rsqrt %118 : vector<1x128xf32>
    %120 = vector.broadcast %119 : vector<1x128xf32> to vector<128x128xf32>
    %121 = arith.mulf %116, %120 : vector<128x128xf32>
    %c0_66 = arith.constant 0 : index
    %c0_67 = arith.constant 0 : index
    %122 = vector.load %arg19[%c0_66, %c0_67] : memref<1x128xf32, #tpu.memory_space<vmem>>, vector<1x128xf32>
    %123 = vector.broadcast %122 : vector<1x128xf32> to vector<128x128xf32>
    %124 = arith.addf %121, %123 : vector<128x128xf32>
    %125 = vector.extract_strided_slice %0 {offsets = [128, 0], sizes = [16, 128], strides = [1, 1]} : vector<144x128xbf16> to vector<16x128xbf16>
    %126 = arith.extf %125 : vector<16x128xbf16> to vector<16x128xf32>
    %cst_68 = arith.constant dense<0.000000e+00> : vector<16x128xf32>
    %127 = tpu.matmul %126, %124, %cst_68 {dimension_numbers = #tpu.dot_dimension_numbers<[1], [0], [0], [1], [0, 0, 1, 1], [], []>} : vector<16x128xf32>, vector<128x128xf32>, vector<16x128xf32> -> vector<16x128xf32>
    %128 = arith.mulf %48, %48 : vector<16x128xf32>
    %129 = arith.mulf %88, %88 : vector<16x128xf32>
    %130 = arith.addf %128, %129 : vector<16x128xf32>
    %131 = arith.mulf %127, %127 : vector<16x128xf32>
    %132 = arith.addf %130, %131 : vector<16x128xf32>
    %cst_69 = arith.constant dense<0.000000e+00> : vector<16xf32>
    %133 = vector.multi_reduction <add>, %132, %cst_69 [1] : vector<16x128xf32> to vector<16xf32>
    %134 = vector.shape_cast %133 : vector<16xf32> to vector<16x1xf32>
    %cst_70 = arith.constant 1.000000e-24 : f32
    %135 = vector.broadcast %cst_70 : f32 to vector<16x1xf32>
    %136 = arith.maximumf %134, %135 : vector<16x1xf32>
    %137 = math.rsqrt %136 : vector<16x1xf32>
    %138 = vector.broadcast %137 : vector<16x1xf32> to vector<16x128xf32>
    %139 = arith.mulf %48, %138 : vector<16x128xf32>
    %c0_71 = arith.constant 0 : index
    %c0_72 = arith.constant 0 : index
    %140 = vector.load %arg20[%c0_71, %c0_72] : memref<16x384xf32, #tpu.memory_space<vmem>>, vector<16x128xf32>
    tpu.vector_store %arg20[%c0_71, %c0_72], %139 {strides = array<i32>} : memref<16x384xf32, #tpu.memory_space<vmem>>, vector<16x128xf32>,
    %141 = vector.broadcast %137 : vector<16x1xf32> to vector<16x128xf32>
    %142 = arith.mulf %88, %141 : vector<16x128xf32>
    %c0_73 = arith.constant 0 : index
    %c128 = arith.constant 128 : index
    %143 = vector.load %arg20[%c0_73, %c128] : memref<16x384xf32, #tpu.memory_space<vmem>>, vector<16x128xf32>
    tpu.vector_store %arg20[%c0_73, %c128], %142 {strides = array<i32>} : memref<16x384xf32, #tpu.memory_space<vmem>>, vector<16x128xf32>,
    %144 = vector.broadcast %137 : vector<16x1xf32> to vector<16x128xf32>
    %145 = arith.mulf %127, %144 : vector<16x128xf32>
    %c0_74 = arith.constant 0 : index
    %c256 = arith.constant 256 : index
    %146 = vector.load %arg20[%c0_74, %c256] : memref<16x384xf32, #tpu.memory_space<vmem>>, vector<16x128xf32>
    tpu.vector_store %arg20[%c0_74, %c256], %145 {strides = array<i32>} : memref<16x384xf32, #tpu.memory_space<vmem>>, vector<16x128xf32>,
    return
  }
}

</mosaic_0001>

<llo_original>
// kernel: _forward_batch.1
$region0: #{_forward_batch.1}
  #allocation0 [shape = 'u32[]', space=smem, size = 0x4, offset = 0x4, fixed_abs, tag = 'smem constant byte address 0x4 - core index']
  #allocation1 [shape = 'u32[144,128]{1,0:T(1,128)}', space=vmem, size = 0x12000, scoped, tag = 'internal scratch']
  %s0 = inlined_call_operand.hbm [shape: bf16[144,128], index: 0, kind: input, shape index: {}]
  %s1 = inlined_call_operand.hbm [shape: bf16[128,128], index: 1, kind: input, shape index: {}]
  %s2 = inlined_call_operand.hbm [shape: bf16[128,128], index: 2, kind: input, shape index: {}]
  %s3 = inlined_call_operand.hbm [shape: f32[1,128], index: 3, kind: input, shape index: {}]
  %s4 = inlined_call_operand.hbm [shape: bf16[128,128], index: 4, kind: input, shape index: {}]
  %s5 = inlined_call_operand.hbm [shape: f32[1,128], index: 5, kind: input, shape index: {}]
  %s6 = inlined_call_operand.hbm [shape: f32[1,128], index: 6, kind: input, shape index: {}]
  %s7 = inlined_call_operand.hbm [shape: f32[1,128], index: 7, kind: input, shape index: {}]
  %s8 = inlined_call_operand.hbm [shape: bf16[128,128], index: 8, kind: input, shape index: {}]
  %s9 = inlined_call_operand.hbm [shape: f32[1,128], index: 9, kind: input, shape index: {}]
  %s10 = inlined_call_operand.hbm [shape: bf16[128,128], index: 10, kind: input, shape index: {}]
  %s11 = inlined_call_operand.hbm [shape: f32[1,128], index: 11, kind: input, shape index: {}]
  %s12 = inlined_call_operand.hbm [shape: f32[1,128], index: 12, kind: input, shape index: {}]
  %s13 = inlined_call_operand.hbm [shape: f32[1,128], index: 13, kind: input, shape index: {}]
  %s14 = inlined_call_operand.hbm [shape: bf16[128,128], index: 14, kind: input, shape index: {}]
  %s15 = inlined_call_operand.hbm [shape: f32[1,128], index: 15, kind: input, shape index: {}]
  %s16 = inlined_call_operand.hbm [shape: bf16[128,128], index: 16, kind: input, shape index: {}]
  %s17 = inlined_call_operand.hbm [shape: f32[1,128], index: 17, kind: input, shape index: {}]
  %s18 = inlined_call_operand.hbm [shape: f32[1,128], index: 18, kind: input, shape index: {}]
  %s19 = inlined_call_operand.hbm [shape: f32[1,128], index: 19, kind: input, shape index: {}]
  %s20 = inlined_call_operand.hbm [shape: f32[16,384], index: 20, kind: output, shape index: {}]
  %s21 = sld [smem:[#allocation0]]
  $region170: #{_forward_batch.1} parent=0
    _
  %s23 = ssub.s32 1, %s21
  %s24 = scalar_select 0, %s23, %s21
  $region1: #{_forward_batch.1} parent=0
    #allocation2 [shape = 'u8[36864]{0}', space=vmem, size = 0x9000, scoped, tag = 'input window, operand 0, single buffered']
    #allocation3 [shape = 's32[1]{0}', space=sflag, size = 0x4, scoped, tag = 'scoped memory for _forward_batch.1']
    #allocation4 [shape = 's32[1]{0}', space=sflag, size = 0x4, scoped, tag = 'scoped memory for _forward_batch.1']
    #allocation5 [shape = 'u8[32768]{0}', space=vmem, size = 0x8000, scoped, tag = 'input window, operand 1, single buffered']
    #allocation6 [shape = 's32[1]{0}', space=sflag, size = 0x4, scoped, tag = 'scoped memory for _forward_batch.1']
    #allocation7 [shape = 'u8[32768]{0}', space=vmem, size = 0x8000, scoped, tag = 'input window, operand 2, single buffered']
    #allocation8 [shape = 'u8[512]{0}', space=vmem, size = 0x400, scoped, tag = 'input window, operand 3, single buffered']
    #allocation9 [shape = 's32[1]{0}', space=sflag, size = 0x4, scoped, tag = 'scoped memory for _forward_batch.1']
    #allocation10 [shape = 'u8[32768]{0}', space=vmem, size = 0x8000, scoped, tag = 'input window, operand 4, single buffered']
    #allocation11 [shape = 'u8[512]{0}', space=vmem, size = 0x400, scoped, tag = 'input window, operand 5, single buffered']
    #allocation12 [shape = 's32[1]{0}', space=sflag, size = 0x4, scoped, tag = 'scoped memory for _forward_batch.1']
    #allocation13 [shape = 'u8[512]{0}', space=vmem, size = 0x400, scoped, tag = 'input window, operand 6, single buffered']
    #allocation14 [shape = 'u8[512]{0}', space=vmem, size = 0x400, scoped, tag = 'input window, operand 7, single buffered']
    #allocation15 [shape = 's32[1]{0}', space=sflag, size = 0x4, scoped, tag = 'scoped memory for _forward_batch.1']
    #allocation16 [shape = 'u8[32768]{0}', space=vmem, size = 0x8000, scoped, tag = 'input window, operand 8, single buffered']
    #allocation17 [shape = 'u8[512]{0}', space=vmem, size = 0x400, scoped, tag = 'input window, operand 9, single buffered']
    #allocation18 [shape = 's32[1]{0}', space=sflag, size = 0x4, scoped, tag = 'scoped memory for _forward_batch.1']
    #allocation19 [shape = 'u8[32768]{0}', space=vmem, size = 0x8000, scoped, tag = 'input window, operand 10, single buffered']
    #allocation20 [shape = 'u8[512]{0}', space=vmem, size = 0x400, scoped, tag = 'input window, operand 11, single buffered']
    #allocation21 [shape = 's32[1]{0}', space=sflag, size = 0x4, scoped, tag = 'scoped memory for _forward_batch.1']
    #allocation22 [shape = 'u8[512]{0}', space=vmem, size = 0x400, scoped, tag = 'input window, operand 12, single buffered']
    #allocation23 [shape = 'u8[512]{0}', space=vmem, size = 0x400, scoped, tag = 'input window, operand 13, single buffered']
    #allocation24 [shape = 's32[1]{0}', space=sflag, size = 0x4, scoped, tag = 'scoped memory for _forward_batch.1']
    #allocation25 [shape = 'u8[32768]{0}', space=vmem, size = 0x8000, scoped, tag = 'input window, operand 14, single buffered']
    #allocation26 [shape = 'u8[512]{0}', space=vmem, size = 0x400, scoped, tag = 'input window, operand 15, single buffered']
    #allocation27 [shape = 's32[1]{0}', space=sflag, size = 0x4, scoped, tag = 'scoped memory for _forward_batch.1']
    #allocation28 [shape = 'u8[32768]{0}', space=vmem, size = 0x8000, scoped, tag = 'input window, operand 16, single buffered']
    #allocation29 [shape = 'u8[512]{0}', space=vmem, size = 0x400, scoped, tag = 'input window, operand 17, single buffered']
    #allocation30 [shape = 's32[1]{0}', space=sflag, size = 0x4, scoped, tag = 'scoped memory for _forward_batch.1']
    #allocation31 [shape = 'u8[512]{0}', space=vmem, size = 0x400, scoped, tag = 'input window, operand 18, single buffered']
    #allocation32 [shape = 'u8[512]{0}', space=vmem, size = 0x400, scoped, tag = 'input window, operand 19, single buffered']
    #allocation33 [shape = 's32[1]{0}', space=sflag, size = 0x4, scoped, tag = 'scoped memory for _forward_batch.1']
    #allocation34 [shape = 'u8[24576]{0}', space=vmem, size = 0x6000, scoped, tag = 'output window, operand 0, single buffered']
    %25 = vsyncpa [#allocation3], 0
    %26 = vsyncpa [#allocation6], 0
    %27 = vsyncpa [#allocation9], 0
    %28 = vsyncpa [#allocation12], 0
    %29 = vsyncpa [#allocation15], 0
    %30 = vsyncpa [#allocation18], 0
    %31 = vsyncpa [#allocation21], 0
    %32 = vsyncpa [#allocation24], 0
    %33 = vsyncpa [#allocation27], 0
    %34 = vsyncpa [#allocation30], 0
    %35 = vsyncpa [#allocation33], 0
    %36 = vsyncpa [#allocation4], 0
    // Predicated region
    $region2: #{_forward_batch.1} parent=1 // pred_check
      _
    $region3: #{_forward_batch.1} parent=1 // pred_check_branch
      %38 = sbr.rel (0) target = $region5
    $region4: #{_forward_batch.1} parent=1 // pred_region
      %s40 = ssub.s32 1152, 1152
      %41 = vsyncadd [#allocation3], %s40
      %s42 = sshll.u32 [#allocation2], 4
      %s43 = int_to_ptr.vmem [resolvable:$true] %s42
      %48 = dma.hbm_to_vmem [thread:$0]  %s0, 1152, %s43, [#allocation3], 64, 64, 4
    $region5: #{_forward_batch.1} parent=1 // pred_fallthru
      _
    // Predicated region
    $region6: #{_forward_batch.1} parent=1 // pred_check
      _
    $region7: #{_forward_batch.1} parent=1 // pred_check_branch
      %50 = sbr.rel (0) target = $region9
    $region8: #{_forward_batch.1} parent=1 // pred_region
      %s52 = ssub.s32 1024, 1024
      %53 = vsyncadd [#allocation6], %s52
      %s54 = sshll.u32 [#allocation5], 4
      %s55 = int_to_ptr.vmem [resolvable:$true] %s54
      %60 = dma.hbm_to_vmem [thread:$0]  %s1, 1024, %s55, [#allocation6], 64, 64, 4
    $region9: #{_forward_batch.1} parent=1 // pred_fallthru
      _
    // Predicated region
    $region10: #{_forward_batch.1} parent=1 // pred_check
      _
    $region11: #{_forward_batch.1} parent=1 // pred_check_branch
      %62 = sbr.rel (0) target = $region13
    $region12: #{_forward_batch.1} parent=1 // pred_region
      %s64 = ssub.s32 1024, 1024
      %65 = vsyncadd [#allocation6], %s64
      %s66 = sshll.u32 [#allocation7], 4
      %s67 = int_to_ptr.vmem [resolvable:$true] %s66
      %72 = dma.hbm_to_vmem [thread:$0]  %s2, 1024, %s67, [#allocation6], 64, 64, 4
    $region13: #{_forward_batch.1} parent=1 // pred_fallthru
      _
    // Predicated region
    $region14: #{_forward_batch.1} parent=1 // pred_check
      _
    $region15: #{_forward_batch.1} parent=1 // pred_check_branch
      %74 = sbr.rel (0) target = $region17
    $region16: #{_forward_batch.1} parent=1 // pred_region
      %s76 = ssub.s32 16, 16
      %77 = vsyncadd [#allocation9], %s76
      %s79 = sshll.u32 [#allocation8], 4
      %s80 = int_to_ptr.vmem [resolvable:$true] %s79
      %82 = dma.hbm_to_vmem [thread:$0]  %s3, 16, %s80, [#allocation9]
    $region17: #{_forward_batch.1} parent=1 // pred_fallthru
      _
    // Predicated region
    $region18: #{_forward_batch.1} parent=1 // pred_check
      _
    $region19: #{_forward_batch.1} parent=1 // pred_check_branch
      %84 = sbr.rel (0) target = $region21
    $region20: #{_forward_batch.1} parent=1 // pred_region
      %s86 = ssub.s32 1024, 1024
      %87 = vsyncadd [#allocation9], %s86
      %s88 = sshll.u32 [#allocation10], 4
      %s89 = int_to_ptr.vmem [resolvable:$true] %s88
      %94 = dma.hbm_to_vmem [thread:$0]  %s4, 1024, %s89, [#allocation9], 64, 64, 4
    $region21: #{_forward_batch.1} parent=1 // pred_fallthru
      _
    // Predicated region
    $region22: #{_forward_batch.1} parent=1 // pred_check
      _
    $region23: #{_forward_batch.1} parent=1 // pred_check_branch
      %96 = sbr.rel (0) target = $region25
    $region24: #{_forward_batch.1} parent=1 // pred_region
      %s98 = ssub.s32 16, 16
      %99 = vsyncadd [#allocation12], %s98
      %s101 = sshll.u32 [#allocation11], 4
      %s102 = int_to_ptr.vmem [resolvable:$true] %s101
      %104 = dma.hbm_to_vmem [thread:$0]  %s5, 16, %s102, [#allocation12]
    $region25: #{_forward_batch.1} parent=1 // pred_fallthru
      _
    // Predicated region
    $region26: #{_forward_batch.1} parent=1 // pred_check
      _
    $region27: #{_forward_batch.1} parent=1 // pred_check_branch
      %106 = sbr.rel (0) target = $region29
    $region28: #{_forward_batch.1} parent=1 // pred_region
      %s108 = ssub.s32 16, 16
      %109 = vsyncadd [#allocation12], %s108
      %s111 = sshll.u32 [#allocation13], 4
      %s112 = int_to_ptr.vmem [resolvable:$true] %s111
      %114 = dma.hbm_to_vmem [thread:$0]  %s6, 16, %s112, [#allocation12]
    $region29: #{_forward_batch.1} parent=1 // pred_fallthru
      _
    // Predicated region
    $region30: #{_forward_batch.1} parent=1 // pred_check
      _
    $region31: #{_forward_batch.1} parent=1 // pred_check_branch
      %116 = sbr.rel (0) target = $region33
    $region32: #{_forward_batch.1} parent=1 // pred_region
      %s118 = ssub.s32 16, 16
      %119 = vsyncadd [#allocation15], %s118
      %s121 = sshll.u32 [#allocation14], 4
      %s122 = int_to_ptr.vmem [resolvable:$true] %s121
      %124 = dma.hbm_to_vmem [thread:$0]  %s7, 16, %s122, [#allocation15]
    $region33: #{_forward_batch.1} parent=1 // pred_fallthru
      _
    // Predicated region
    $region34: #{_forward_batch.1} parent=1 // pred_check
      _
    $region35: #{_forward_batch.1} parent=1 // pred_check_branch
      %126 = sbr.rel (0) target = $region37
    $region36: #{_forward_batch.1} parent=1 // pred_region
      %s128 = ssub.s32 1024, 1024
      %129 = vsyncadd [#allocation15], %s128
      %s130 = sshll.u32 [#allocation16], 4
      %s131 = int_to_ptr.vmem [resolvable:$true] %s130
      %136 = dma.hbm_to_vmem [thread:$0]  %s8, 1024, %s131, [#allocation15], 64, 64, 4
    $region37: #{_forward_batch.1} parent=1 // pred_fallthru
      _
    // Predicated region
    $region38: #{_forward_batch.1} parent=1 // pred_check
      _
    $region39: #{_forward_batch.1} parent=1 // pred_check_branch
      %138 = sbr.rel (0) target = $region41
    $region40: #{_forward_batch.1} parent=1 // pred_region
      %s140 = ssub.s32 16, 16
      %141 = vsyncadd [#allocation18], %s140
      %s143 = sshll.u32 [#allocation17], 4
      %s144 = int_to_ptr.vmem [resolvable:$true] %s143
      %146 = dma.hbm_to_vmem [thread:$0]  %s9, 16, %s144, [#allocation18]
    $region41: #{_forward_batch.1} parent=1 // pred_fallthru
      _
    // Predicated region
    $region42: #{_forward_batch.1} parent=1 // pred_check
      _
    $region43: #{_forward_batch.1} parent=1 // pred_check_branch
      %148 = sbr.rel (0) target = $region45
    $region44: #{_forward_batch.1} parent=1 // pred_region
      %s150 = ssub.s32 1024, 1024
      %151 = vsyncadd [#allocation18], %s150
      %s152 = sshll.u32 [#allocation19], 4
      %s153 = int_to_ptr.vmem [resolvable:$true] %s152
      %158 = dma.hbm_to_vmem [thread:$0]  %s10, 1024, %s153, [#allocation18], 64, 64, 4
    $region45: #{_forward_batch.1} parent=1 // pred_fallthru
      _
    // Predicated region
    $region46: #{_forward_batch.1} parent=1 // pred_check
      _
    $region47: #{_forward_batch.1} parent=1 // pred_check_branch
      %160 = sbr.rel (0) target = $region49
    $region48: #{_forward_batch.1} parent=1 // pred_region
      %s162 = ssub.s32 16, 16
      %163 = vsyncadd [#allocation21], %s162
      %s165 = sshll.u32 [#allocation20], 4
      %s166 = int_to_ptr.vmem [resolvable:$true] %s165
      %168 = dma.hbm_to_vmem [thread:$0]  %s11, 16, %s166, [#allocation21]
    $region49: #{_forward_batch.1} parent=1 // pred_fallthru
      _
    // Predicated region
    $region50: #{_forward_batch.1} parent=1 // pred_check
      _
    $region51: #{_forward_batch.1} parent=1 // pred_check_branch
      %170 = sbr.rel (0) target = $region53
    $region52: #{_forward_batch.1} parent=1 // pred_region
      %s172 = ssub.s32 16, 16
      %173 = vsyncadd [#allocation21], %s172
      %s175 = sshll.u32 [#allocation22], 4
      %s176 = int_to_ptr.vmem [resolvable:$true] %s175
      %178 = dma.hbm_to_vmem [thread:$0]  %s12, 16, %s176, [#allocation21]
    $region53: #{_forward_batch.1} parent=1 // pred_fallthru
      _
    // Predicated region
    $region54: #{_forward_batch.1} parent=1 // pred_check
      _
    $region55: #{_forward_batch.1} parent=1 // pred_check_branch
      %180 = sbr.rel (0) target = $region57
    $region56: #{_forward_batch.1} parent=1 // pred_region
      %s182 = ssub.s32 16, 16
      %183 = vsyncadd [#allocation24], %s182
      %s185 = sshll.u32 [#allocation23], 4
      %s186 = int_to_ptr.vmem [resolvable:$true] %s185
      %188 = dma.hbm_to_vmem [thread:$0]  %s13, 16, %s186, [#allocation24]
    $region57: #{_forward_batch.1} parent=1 // pred_fallthru
      _
    // Predicated region
    $region58: #{_forward_batch.1} parent=1 // pred_check
      _
    $region59: #{_forward_batch.1} parent=1 // pred_check_branch
      %190 = sbr.rel (0) target = $region61
    $region60: #{_forward_batch.1} parent=1 // pred_region
      %s192 = ssub.s32 1024, 1024
      %193 = vsyncadd [#allocation24], %s192
      %s194 = sshll.u32 [#allocation25], 4
      %s195 = int_to_ptr.vmem [resolvable:$true] %s194
      %200 = dma.hbm_to_vmem [thread:$0]  %s14, 1024, %s195, [#allocation24], 64, 64, 4
    $region61: #{_forward_batch.1} parent=1 // pred_fallthru
      _
    // Predicated region
    $region62: #{_forward_batch.1} parent=1 // pred_check
      _
    $region63: #{_forward_batch.1} parent=1 // pred_check_branch
      %202 = sbr.rel (0) target = $region65
    $region64: #{_forward_batch.1} parent=1 // pred_region
      %s204 = ssub.s32 16, 16
      %205 = vsyncadd [#allocation27], %s204
      %s207 = sshll.u32 [#allocation26], 4
      %s208 = int_to_ptr.vmem [resolvable:$true] %s207
      %210 = dma.hbm_to_vmem [thread:$0]  %s15, 16, %s208, [#allocation27]
    $region65: #{_forward_batch.1} parent=1 // pred_fallthru
      _
    // Predicated region
    $region66: #{_forward_batch.1} parent=1 // pred_check
      _
    $region67: #{_forward_batch.1} parent=1 // pred_check_branch
      %212 = sbr.rel (0) target = $region69
    $region68: #{_forward_batch.1} parent=1 // pred_region
      %s214 = ssub.s32 1024, 1024
      %215 = vsyncadd [#allocation27], %s214
      %s216 = sshll.u32 [#allocation28], 4
      %s217 = int_to_ptr.vmem [resolvable:$true] %s216
      %222 = dma.hbm_to_vmem [thread:$0]  %s16, 1024, %s217, [#allocation27], 64, 64, 4
    $region69: #{_forward_batch.1} parent=1 // pred_fallthru
      _
    // Predicated region
    $region70: #{_forward_batch.1} parent=1 // pred_check
      _
    $region71: #{_forward_batch.1} parent=1 // pred_check_branch
      %224 = sbr.rel (0) target = $region73
    $region72: #{_forward_batch.1} parent=1 // pred_region
      %s226 = ssub.s32 16, 16
      %227 = vsyncadd [#allocation30], %s226
      %s229 = sshll.u32 [#allocation29], 4
      %s230 = int_to_ptr.vmem [resolvable:$true] %s229
      %232 = dma.hbm_to_vmem [thread:$0]  %s17, 16, %s230, [#allocation30]
    $region73: #{_forward_batch.1} parent=1 // pred_fallthru
      _
    // Predicated region
    $region74: #{_forward_batch.1} parent=1 // pred_check
      _
    $region75: #{_forward_batch.1} parent=1 // pred_check_branch
      %234 = sbr.rel (0) target = $region77
    $region76: #{_forward_batch.1} parent=1 // pred_region
      %s236 = ssub.s32 16, 16
      %237 = vsyncadd [#allocation30], %s236
      %s239 = sshll.u32 [#allocation31], 4
      %s240 = int_to_ptr.vmem [resolvable:$true] %s239
      %242 = dma.hbm_to_vmem [thread:$0]  %s18, 16, %s240, [#allocation30]
    $region77: #{_forward_batch.1} parent=1 // pred_fallthru
      _
    // Predicated region
    $region78: #{_forward_batch.1} parent=1 // pred_check
      _
    $region79: #{_forward_batch.1} parent=1 // pred_check_branch
      %244 = sbr.rel (0) target = $region81
    $region80: #{_forward_batch.1} parent=1 // pred_region
      %s246 = ssub.s32 16, 16
      %247 = vsyncadd [#allocation33], %s246
      %s249 = sshll.u32 [#allocation32], 4
      %s250 = int_to_ptr.vmem [resolvable:$true] %s249
      %252 = dma.hbm_to_vmem [thread:$0]  %s19, 16, %s250, [#allocation33]
    $region81: #{_forward_batch.1} parent=1 // pred_fallthru
      _
    // Predicated region
    $region82: #{_forward_batch.1} parent=1 // pred_check
      _
    $region83: #{_forward_batch.1} parent=1 // pred_check_branch
      %254 = sbr.rel (0) target = $region85
    $region84: #{_forward_batch.1} parent=1 // pred_region
      %255 = dma.done [#allocation3], 1152
    $region85: #{_forward_batch.1} parent=1 // pred_fallthru
      _
    // Predicated region
    $region86: #{_forward_batch.1} parent=1 // pred_check
      _
    $region87: #{_forward_batch.1} parent=1 // pred_check_branch
      %257 = sbr.rel (0) target = $region89
    $region88: #{_forward_batch.1} parent=1 // pred_region
      %258 = dma.done [#allocation6], 1024
    $region89: #{_forward_batch.1} parent=1 // pred_fallthru
      _
    // Predicated region
    $region90: #{_forward_batch.1} parent=1 // pred_check
      _
    $region91: #{_forward_batch.1} parent=1 // pred_check_branch
      %260 = sbr.rel (0) target = $region93
    $region92: #{_forward_batch.1} parent=1 // pred_region
      %261 = dma.done [#allocation6], 1024
    $region93: #{_forward_batch.1} parent=1 // pred_fallthru
      _
    // Predicated region
    $region94: #{_forward_batch.1} parent=1 // pred_check
      _
    $region95: #{_forward_batch.1} parent=1 // pred_check_branch
      %263 = sbr.rel (0) target = $region97
    $region96: #{_forward_batch.1} parent=1 // pred_region
      %264 = dma.done [#allocation9], 16
    $region97: #{_forward_batch.1} parent=1 // pred_fallthru
      _
    // Predicated region
    $region98: #{_forward_batch.1} parent=1 // pred_check
      _
    $region99: #{_forward_batch.1} parent=1 // pred_check_branch
      %266 = sbr.rel (0) target = $region101
    $region100: #{_forward_batch.1} parent=1 // pred_region
      %267 = dma.done [#allocation9], 1024
    $region101: #{_forward_batch.1} parent=1 // pred_fallthru
      _
    // Predicated region
    $region102: #{_forward_batch.1} parent=1 // pred_check
      _
    $region103: #{_forward_batch.1} parent=1 // pred_check_branch
      %269 = sbr.rel (0) target = $region105
    $region104: #{_forward_batch.1} parent=1 // pred_region
      %270 = dma.done [#allocation12], 16
    $region105: #{_forward_batch.1} parent=1 // pred_fallthru
      _
    // Predicated region
    $region106: #{_forward_batch.1} parent=1 // pred_check
      _
    $region107: #{_forward_batch.1} parent=1 // pred_check_branch
      %272 = sbr.rel (0) target = $region109
    $region108: #{_forward_batch.1} parent=1 // pred_region
      %273 = dma.done [#allocation12], 16
    $region109: #{_forward_batch.1} parent=1 // pred_fallthru
      _
    // Predicated region
    $region110: #{_forward_batch.1} parent=1 // pred_check
      _
    $region111: #{_forward_batch.1} parent=1 // pred_check_branch
      %275 = sbr.rel (0) target = $region113
    $region112: #{_forward_batch.1} parent=1 // pred_region
      %276 = dma.done [#allocation15], 16
    $region113: #{_forward_batch.1} parent=1 // pred_fallthru
      _
    // Predicated region
    $region114: #{_forward_batch.1} parent=1 // pred_check
      _
    $region115: #{_forward_batch.1} parent=1 // pred_check_branch
      %278 = sbr.rel (0) target = $region117
    $region116: #{_forward_batch.1} parent=1 // pred_region
      %279 = dma.done [#allocation15], 1024
    $region117: #{_forward_batch.1} parent=1 // pred_fallthru
      _
    // Predicated region
    $region118: #{_forward_batch.1} parent=1 // pred_check
      _
    $region119: #{_forward_batch.1} parent=1 // pred_check_branch
      %281 = sbr.rel (0) target = $region121
    $region120: #{_forward_batch.1} parent=1 // pred_region
      %282 = dma.done [#allocation18], 16
    $region121: #{_forward_batch.1} parent=1 // pred_fallthru
      _
    // Predicated region
    $region122: #{_forward_batch.1} parent=1 // pred_check
      _
    $region123: #{_forward_batch.1} parent=1 // pred_check_branch
      %284 = sbr.rel (0) target = $region125
    $region124: #{_forward_batch.1} parent=1 // pred_region
      %285 = dma.done [#allocation18], 1024
    $region125: #{_forward_batch.1} parent=1 // pred_fallthru
      _
    // Predicated region
    $region126: #{_forward_batch.1} parent=1 // pred_check
      _
    $region127: #{_forward_batch.1} parent=1 // pred_check_branch
      %287 = sbr.rel (0) target = $region129
    $region128: #{_forward_batch.1} parent=1 // pred_region
      %288 = dma.done [#allocation21], 16
    $region129: #{_forward_batch.1} parent=1 // pred_fallthru
      _
    // Predicated region
    $region130: #{_forward_batch.1} parent=1 // pred_check
      _
    $region131: #{_forward_batch.1} parent=1 // pred_check_branch
      %290 = sbr.rel (0) target = $region133
    $region132: #{_forward_batch.1} parent=1 // pred_region
      %291 = dma.done [#allocation21], 16
    $region133: #{_forward_batch.1} parent=1 // pred_fallthru
      _
    // Predicated region
    $region134: #{_forward_batch.1} parent=1 // pred_check
      _
    $region135: #{_forward_batch.1} parent=1 // pred_check_branch
      %293 = sbr.rel (0) target = $region137
    $region136: #{_forward_batch.1} parent=1 // pred_region
      %294 = dma.done [#allocation24], 16
    $region137: #{_forward_batch.1} parent=1 // pred_fallthru
      _
    // Predicated region
    $region138: #{_forward_batch.1} parent=1 // pred_check
      _
    $region139: #{_forward_batch.1} parent=1 // pred_check_branch
      %296 = sbr.rel (0) target = $region141
    $region140: #{_forward_batch.1} parent=1 // pred_region
      %297 = dma.done [#allocation24], 1024
    $region141: #{_forward_batch.1} parent=1 // pred_fallthru
      _
    // Predicated region
    $region142: #{_forward_batch.1} parent=1 // pred_check
      _
    $region143: #{_forward_batch.1} parent=1 // pred_check_branch
      %299 = sbr.rel (0) target = $region145
    $region144: #{_forward_batch.1} parent=1 // pred_region
      %300 = dma.done [#allocation27], 16
    $region145: #{_forward_batch.1} parent=1 // pred_fallthru
      _
    // Predicated region
    $region146: #{_forward_batch.1} parent=1 // pred_check
      _
    $region147: #{_forward_batch.1} parent=1 // pred_check_branch
      %302 = sbr.rel (0) target = $region149
    $region148: #{_forward_batch.1} parent=1 // pred_region
      %303 = dma.done [#allocation27], 1024
    $region149: #{_forward_batch.1} parent=1 // pred_fallthru
      _
    // Predicated region
    $region150: #{_forward_batch.1} parent=1 // pred_check
      _
    $region151: #{_forward_batch.1} parent=1 // pred_check_branch
      %305 = sbr.rel (0) target = $region153
    $region152: #{_forward_batch.1} parent=1 // pred_region
      %306 = dma.done [#allocation30], 16
    $region153: #{_forward_batch.1} parent=1 // pred_fallthru
      _
    // Predicated region
    $region154: #{_forward_batch.1} parent=1 // pred_check
      _
    $region155: #{_forward_batch.1} parent=1 // pred_check_branch
      %308 = sbr.rel (0) target = $region157
    $region156: #{_forward_batch.1} parent=1 // pred_region
      %309 = dma.done [#allocation30], 16
    $region157: #{_forward_batch.1} parent=1 // pred_fallthru
      _
    // Predicated region
    $region158: #{_forward_batch.1} parent=1 // pred_check
      _
    $region159: #{_forward_batch.1} parent=1 // pred_check_branch
      %311 = sbr.rel (0) target = $region161
    $region160: #{_forward_batch.1} parent=1 // pred_region
      %312 = dma.done [#allocation33], 16
    $region161: #{_forward_batch.1} parent=1 // pred_fallthru
      _
    %v314 = vld [vmem:[#allocation2] sm:$0xf]
    %v315 = vld [vmem:[#allocation2 + $0x4] sm:$0xf]
    %v316 = vld [vmem:[#allocation2 + $0x8] sm:$0xf]
    %v317 = vld [vmem:[#allocation2 + $0xc] sm:$0xf]
    %v318 = vld [vmem:[#allocation2 + $0x10] sm:$0xf]
    %v319 = vld [vmem:[#allocation2 + $0x14] sm:$0xf]
    %v320 = vld [vmem:[#allocation2 + $0x18] sm:$0xf]
    %v321 = vld [vmem:[#allocation2 + $0x1c] sm:$0xf]
    %v322 = vld [vmem:[#allocation2 + $0x20] sm:$0xf]
    %v323 = vld [vmem:[#allocation2 + $0x24] sm:$0xf]
    %v324 = vld [vmem:[#allocation2 + $0x28] sm:$0xf]
    %v325 = vld [vmem:[#allocation2 + $0x2c] sm:$0xf]
    %v326 = vld [vmem:[#allocation2 + $0x30] sm:$0xf]
    %v327 = vld [vmem:[#allocation2 + $0x34] sm:$0xf]
    %v328 = vld [vmem:[#allocation2 + $0x38] sm:$0xf]
    %v329 = vld [vmem:[#allocation2 + $0x3c] sm:$0xf]
    %v330 = vld [vmem:[#allocation2 + $0x40] sm:$0xf]
    %v331 = vld [vmem:[#allocation2 + $0x44] sm:$0xf]
    %v332 = vld [vmem:[#allocation5] sm:$0xf]
    %v333 = vld [vmem:[#allocation5 + $0x4] sm:$0xf]
    %v334 = vld [vmem:[#allocation5 + $0x8] sm:$0xf]
    %v335 = vld [vmem:[#allocation5 + $0xc] sm:$0xf]
    %v336 = vld [vmem:[#allocation5 + $0x10] sm:$0xf]
    %v337 = vld [vmem:[#allocation5 + $0x14] sm:$0xf]
    %v338 = vld [vmem:[#allocation5 + $0x18] sm:$0xf]
    %v339 = vld [vmem:[#allocation5 + $0x1c] sm:$0xf]
    %v340 = vld [vmem:[#allocation5 + $0x20] sm:$0xf]
    %v341 = vld [vmem:[#allocation5 + $0x24] sm:$0xf]
    %v342 = vld [vmem:[#allocation5 + $0x28] sm:$0xf]
    %v343 = vld [vmem:[#allocation5 + $0x2c] sm:$0xf]
    %v344 = vld [vmem:[#allocation5 + $0x30] sm:$0xf]
    %v345 = vld [vmem:[#allocation5 + $0x34] sm:$0xf]
    %v346 = vld [vmem:[#allocation5 + $0x38] sm:$0xf]
    %v347 = vld [vmem:[#allocation5 + $0x3c] sm:$0xf]
    %v348 = vlaneseq
    %v349 = vand.u32 %v348, 127
    %vm350 = vcmp.lt.s32.totalorder %v349, 16
    %v351 = vsel %vm350, 1, 0
    %v352 = vcvt.s32.f32 %v351
    %v369 = vunpack.c.l.b16 %v314
    %v370 = vunpack.c.l.b16 %v315
    %v371 = vunpack.c.l.b16 %v316
    %v372 = vunpack.c.l.b16 %v317
    %v373 = vunpack.c.l.b16 %v318
    %v374 = vunpack.c.l.b16 %v319
    %v375 = vunpack.c.l.b16 %v320
    %v376 = vunpack.c.l.b16 %v321
    %v377 = vunpack.c.l.b16 %v322
    %v378 = vunpack.c.l.b16 %v323
    %v379 = vunpack.c.l.b16 %v324
    %v380 = vunpack.c.l.b16 %v325
    %v381 = vunpack.c.l.b16 %v326
    %v382 = vunpack.c.l.b16 %v327
    %v383 = vunpack.c.l.b16 %v328
    %v384 = vunpack.c.l.b16 %v329
    %v385 = vpack.c.b16 %v370, %v369
    %v386 = vpack.c.b16 %v372, %v371
    %v387 = vpack.c.b16 %v374, %v373
    %v388 = vpack.c.b16 %v376, %v375
    %v389 = vpack.c.b16 %v378, %v377
    %v390 = vpack.c.b16 %v380, %v379
    %v391 = vpack.c.b16 %v382, %v381
    %v392 = vpack.c.b16 %v384, %v383
    %v417 = vunpack.c.l.b16 %v332
    %v418 = vunpack.c.l.b16 %v333
    %v419 = vunpack.c.l.b16 %v334
    %v420 = vunpack.c.l.b16 %v335
    %v421 = vunpack.c.l.b16 %v336
    %v422 = vunpack.c.l.b16 %v337
    %v423 = vunpack.c.l.b16 %v338
    %v424 = vunpack.c.l.b16 %v339
    %v425 = vunpack.c.l.b16 %v340
    %v426 = vunpack.c.l.b16 %v341
    %v427 = vunpack.c.l.b16 %v342
    %v428 = vunpack.c.l.b16 %v343
    %v429 = vunpack.c.l.b16 %v344
    %v430 = vunpack.c.l.b16 %v345
    %v431 = vunpack.c.l.b16 %v346
    %v432 = vunpack.c.l.b16 %v347
    %v433 = vpack.c.b16 %v418, %v417
    %v434 = vpack.c.b16 %v420, %v419
    %v435 = vpack.c.b16 %v422, %v421
    %v436 = vpack.c.b16 %v424, %v423
    %v437 = vpack.c.b16 %v426, %v425
    %v438 = vpack.c.b16 %v428, %v427
    %v439 = vpack.c.b16 %v430, %v429
    %v440 = vpack.c.b16 %v432, %v431
    %449 = vmatprep.subr.bf16.mxu0 0
    %450 = vmatpush1.bf16.msra.mxu0 %v433
    %451 = vmatprep.subr.bf16.mxu0 0
    %452 = vmatpush1.bf16.msra.mxu0 %v434
    %453 = vmatprep.subr.bf16.mxu0 0
    %454 = vmatpush1.bf16.msra.mxu0 %v435
    %455 = vmatprep.subr.bf16.mxu0 0
    %456 = vmatpush1.bf16.msra.mxu0 %v436
    %457 = vmatprep.subr.bf16.mxu0 0
    %458 = vmatpush1.bf16.msra.mxu0 %v437
    %459 = vmatprep.subr.bf16.mxu0 0
    %460 = vmatpush1.bf16.msra.mxu0 %v438
    %461 = vmatprep.subr.bf16.mxu0 0
    %462 = vmatpush1.bf16.msra.mxu0 %v439
    %463 = vmatprep.subr.bf16.mxu0 0
    %464 = vmatpush1.bf16.msra.mxu0 %v440
    %465 = vmatprep.subr.bf16.mxu0 0
    %466 = vmatpush1.bf16.msra.mxu0 0
    %467 = vmatprep.subr.bf16.mxu0 0
    %468 = vmatpush1.bf16.msra.mxu0 0
    %469 = vmatprep.subr.bf16.mxu0 0
    %470 = vmatpush1.bf16.msra.mxu0 0
    %471 = vmatprep.subr.bf16.mxu0 0
    %472 = vmatpush1.bf16.msra.mxu0 0
    %473 = vmatprep.subr.bf16.mxu0 0
    %474 = vmatpush1.bf16.msra.mxu0 0
    %475 = vmatprep.subr.bf16.mxu0 0
    %476 = vmatpush1.bf16.msra.mxu0 0
    %477 = vmatprep.subr.bf16.mxu0 0
    %478 = vmatpush1.bf16.msra.mxu0 0
    %479 = vmatprep.subr.bf16.mxu0 0
    %480 = vmatpush1.bf16.msra.mxu0 0
    %481 = vmatprep.mubr.bf16.mxu0 0
    %482 = vmatmul.mubr.bf16.gmra.mrb[0].mxu0 %v385
    %v483 = vpop.f32.mrb[0].mxu0
    %v484 = vadd.f32 0.0, %v483
    %v485 = vpop.f32.mrb[0].mxu0
    %v486 = vpop.f32.mrb[0].mxu0
    %v487 = vadd.f32 0.0, %v486
    %v488 = vpop.f32.mrb[0].mxu0
    %489 = vmatprep.mubr.bf16.mxu0 0
    %490 = vmatmul.mubr.bf16.gmra.mrb[0].mxu0 %v386
    %v491 = vpop.f32.mrb[0].mxu0
    %v492 = vadd.f32 0.0, %v491
    %v493 = vpop.f32.mrb[0].mxu0
    %v494 = vpop.f32.mrb[0].mxu0
    %v495 = vadd.f32 0.0, %v494
    %v496 = vpop.f32.mrb[0].mxu0
    %497 = vmatprep.mubr.bf16.mxu0 0
    %498 = vmatmul.mubr.bf16.gmra.mrb[0].mxu0 %v387
    %v499 = vpop.f32.mrb[0].mxu0
    %v500 = vadd.f32 0.0, %v499
    %v501 = vpop.f32.mrb[0].mxu0
    %v502 = vpop.f32.mrb[0].mxu0
    %v503 = vadd.f32 0.0, %v502
    %v504 = vpop.f32.mrb[0].mxu0
    %505 = vmatprep.mubr.bf16.mxu0 0
    %506 = vmatmul.mubr.bf16.gmra.mrb[0].mxu0 %v388
    %v507 = vpop.f32.mrb[0].mxu0
    %v508 = vadd.f32 0.0, %v507
    %v509 = vpop.f32.mrb[0].mxu0
    %v510 = vpop.f32.mrb[0].mxu0
    %v511 = vadd.f32 0.0, %v510
    %v512 = vpop.f32.mrb[0].mxu0
    %513 = vmatprep.mubr.bf16.mxu0 0
    %514 = vmatmul.mubr.bf16.gmra.mrb[0].mxu0 %v389
    %v515 = vpop.f32.mrb[0].mxu0
    %v516 = vadd.f32 0.0, %v515
    %v517 = vpop.f32.mrb[0].mxu0
    %v518 = vpop.f32.mrb[0].mxu0
    %v519 = vadd.f32 0.0, %v518
    %v520 = vpop.f32.mrb[0].mxu0
    %521 = vmatprep.mubr.bf16.mxu0 0
    %522 = vmatmul.mubr.bf16.gmra.mrb[0].mxu0 %v390
    %v523 = vpop.f32.mrb[0].mxu0
    %v524 = vadd.f32 0.0, %v523
    %v525 = vpop.f32.mrb[0].mxu0
    %v526 = vpop.f32.mrb[0].mxu0
    %v527 = vadd.f32 0.0, %v526
    %v528 = vpop.f32.mrb[0].mxu0
    %529 = vmatprep.mubr.bf16.mxu0 0
    %530 = vmatmul.mubr.bf16.gmra.mrb[0].mxu0 %v391
    %v531 = vpop.f32.mrb[0].mxu0
    %v532 = vadd.f32 0.0, %v531
    %v533 = vpop.f32.mrb[0].mxu0
    %v534 = vpop.f32.mrb[0].mxu0
    %v535 = vadd.f32 0.0, %v534
    %v536 = vpop.f32.mrb[0].mxu0
    %537 = vmatprep.mubr.bf16.mxu0 0
    %538 = vmatmul.mubr.bf16.gmra.mrb[0].mxu0 %v392
    %v539 = vpop.f32.mrb[0].mxu0
    %v540 = vadd.f32 0.0, %v539
    %v541 = vpop.f32.mrb[0].mxu0
    %v542 = vpop.f32.mrb[0].mxu0
    %v543 = vadd.f32 0.0, %v542
    %v544 = vpop.f32.mrb[0].mxu0
    %545 = vdwg.mxu0
    %v546 = vpack.c.bf16 %v487, %v484
    %v547 = vpack.c.bf16 %v495, %v492
    %v548 = vpack.c.bf16 %v503, %v500
    %v549 = vpack.c.bf16 %v511, %v508
    %v550 = vpack.c.bf16 %v519, %v516
    %v551 = vpack.c.bf16 %v527, %v524
    %v552 = vpack.c.bf16 %v535, %v532
    %v553 = vpack.c.bf16 %v543, %v540
    %v554 = vld [vmem:[#allocation7] sm:$0xf]
    %v555 = vld [vmem:[#allocation7 + $0x4] sm:$0xf]
    %v556 = vld [vmem:[#allocation7 + $0x8] sm:$0xf]
    %v557 = vld [vmem:[#allocation7 + $0xc] sm:$0xf]
    %v558 = vld [vmem:[#allocation7 + $0x10] sm:$0xf]
    %v559 = vld [vmem:[#allocation7 + $0x14] sm:$0xf]
    %v560 = vld [vmem:[#allocation7 + $0x18] sm:$0xf]
    %v561 = vld [vmem:[#allocation7 + $0x1c] sm:$0xf]
    %v562 = vld [vmem:[#allocation7 + $0x20] sm:$0xf]
    %v563 = vld [vmem:[#allocation7 + $0x24] sm:$0xf]
    %v564 = vld [vmem:[#allocation7 + $0x28] sm:$0xf]
    %v565 = vld [vmem:[#allocation7 + $0x2c] sm:$0xf]
    %v566 = vld [vmem:[#allocation7 + $0x30] sm:$0xf]
    %v567 = vld [vmem:[#allocation7 + $0x34] sm:$0xf]
    %v568 = vld [vmem:[#allocation7 + $0x38] sm:$0xf]
    %v569 = vld [vmem:[#allocation7 + $0x3c] sm:$0xf]
    %v570 = vld [vmem:[#allocation8] sm:$0x1]
    %v572 = vlaneseq
    %v573 = vshrl.u32 %v572, 7
    %v574 = vsub.s32 0, %v573
    %v575 = vrot.slane %v570, %v574
    %v593 = vunpack.c.l.b16 %v554
    %v594 = vunpack.c.l.b16 %v555
    %v595 = vunpack.c.l.b16 %v556
    %v596 = vunpack.c.l.b16 %v557
    %v597 = vunpack.c.l.b16 %v558
    %v598 = vunpack.c.l.b16 %v559
    %v599 = vunpack.c.l.b16 %v560
    %v600 = vunpack.c.l.b16 %v561
    %v601 = vunpack.c.l.b16 %v562
    %v602 = vunpack.c.l.b16 %v563
    %v603 = vunpack.c.l.b16 %v564
    %v604 = vunpack.c.l.b16 %v565
    %v605 = vunpack.c.l.b16 %v566
    %v606 = vunpack.c.l.b16 %v567
    %v607 = vunpack.c.l.b16 %v568
    %v608 = vunpack.c.l.b16 %v569
    %v609 = vpack.c.b16 %v594, %v593
    %v610 = vpack.c.b16 %v596, %v595
    %v611 = vpack.c.b16 %v598, %v597
    %v612 = vpack.c.b16 %v600, %v599
    %v613 = vpack.c.b16 %v602, %v601
    %v614 = vpack.c.b16 %v604, %v603
    %v615 = vpack.c.b16 %v606, %v605
    %v616 = vpack.c.b16 %v608, %v607
    %625 = vmatprep.subr.bf16.mxu0 0
    %626 = vmatpush1.bf16.msra.mxu0 %v609
    %627 = vmatprep.subr.bf16.mxu0 0
    %628 = vmatpush1.bf16.msra.mxu0 %v610
    %629 = vmatprep.subr.bf16.mxu0 0
    %630 = vmatpush1.bf16.msra.mxu0 %v611
    %631 = vmatprep.subr.bf16.mxu0 0
    %632 = vmatpush1.bf16.msra.mxu0 %v612
    %633 = vmatprep.subr.bf16.mxu0 0
    %634 = vmatpush1.bf16.msra.mxu0 %v613
    %635 = vmatprep.subr.bf16.mxu0 0
    %636 = vmatpush1.bf16.msra.mxu0 %v614
    %637 = vmatprep.subr.bf16.mxu0 0
    %638 = vmatpush1.bf16.msra.mxu0 %v615
    %639 = vmatprep.subr.bf16.mxu0 0
    %640 = vmatpush1.bf16.msra.mxu0 %v616
    %641 = vmatprep.subr.bf16.mxu0 0
    %642 = vmatpush1.bf16.msra.mxu0 0
    %643 = vmatprep.subr.bf16.mxu0 0
    %644 = vmatpush1.bf16.msra.mxu0 0
    %645 = vmatprep.subr.bf16.mxu0 0
    %646 = vmatpush1.bf16.msra.mxu0 0
    %647 = vmatprep.subr.bf16.mxu0 0
    %648 = vmatpush1.bf16.msra.mxu0 0
    %649 = vmatprep.subr.bf16.mxu0 0
    %650 = vmatpush1.bf16.msra.mxu0 0
    %651 = vmatprep.subr.bf16.mxu0 0
    %652 = vmatpush1.bf16.msra.mxu0 0
    %653 = vmatprep.subr.bf16.mxu0 0
    %654 = vmatpush1.bf16.msra.mxu0 0
    %655 = vmatprep.subr.bf16.mxu0 0
    %656 = vmatpush1.bf16.msra.mxu0 0
    %657 = vmatprep.mubr.bf16.mxu0 0
    %658 = vmatmul.mubr.bf16.gmra.mrb[0].mxu0 %v546
    %v659 = vpop.f32.mrb[0].mxu0
    %v660 = vadd.f32 %v575, %v659
    %v661 = vpop.f32.mrb[0].mxu0
    %v662 = vpop.f32.mrb[0].mxu0
    %v663 = vadd.f32 %v575, %v662
    %v664 = vpop.f32.mrb[0].mxu0
    %665 = vmatprep.mubr.bf16.mxu0 0
    %666 = vmatmul.mubr.bf16.gmra.mrb[0].mxu0 %v547
    %v667 = vpop.f32.mrb[0].mxu0
    %v668 = vadd.f32 %v575, %v667
    %v669 = vpop.f32.mrb[0].mxu0
    %v670 = vpop.f32.mrb[0].mxu0
    %v671 = vadd.f32 %v575, %v670
    %v672 = vpop.f32.mrb[0].mxu0
    %673 = vmatprep.mubr.bf16.mxu0 0
    %674 = vmatmul.mubr.bf16.gmra.mrb[0].mxu0 %v548
    %v675 = vpop.f32.mrb[0].mxu0
    %v676 = vadd.f32 %v575, %v675
    %v677 = vpop.f32.mrb[0].mxu0
    %v678 = vpop.f32.mrb[0].mxu0
    %v679 = vadd.f32 %v575, %v678
    %v680 = vpop.f32.mrb[0].mxu0
    %681 = vmatprep.mubr.bf16.mxu0 0
    %682 = vmatmul.mubr.bf16.gmra.mrb[0].mxu0 %v549
    %v683 = vpop.f32.mrb[0].mxu0
    %v684 = vadd.f32 %v575, %v683
    %v685 = vpop.f32.mrb[0].mxu0
    %v686 = vpop.f32.mrb[0].mxu0
    %v687 = vadd.f32 %v575, %v686
    %v688 = vpop.f32.mrb[0].mxu0
    %689 = vmatprep.mubr.bf16.mxu0 0
    %690 = vmatmul.mubr.bf16.gmra.mrb[0].mxu0 %v550
    %v691 = vpop.f32.mrb[0].mxu0
    %v692 = vadd.f32 %v575, %v691
    %v693 = vpop.f32.mrb[0].mxu0
    %v694 = vpop.f32.mrb[0].mxu0
    %v695 = vadd.f32 %v575, %v694
    %v696 = vpop.f32.mrb[0].mxu0
    %697 = vmatprep.mubr.bf16.mxu0 0
    %698 = vmatmul.mubr.bf16.gmra.mrb[0].mxu0 %v551
    %v699 = vpop.f32.mrb[0].mxu0
    %v700 = vadd.f32 %v575, %v699
    %v701 = vpop.f32.mrb[0].mxu0
    %v702 = vpop.f32.mrb[0].mxu0
    %v703 = vadd.f32 %v575, %v702
    %v704 = vpop.f32.mrb[0].mxu0
    %705 = vmatprep.mubr.bf16.mxu0 0
    %706 = vmatmul.mubr.bf16.gmra.mrb[0].mxu0 %v552
    %v707 = vpop.f32.mrb[0].mxu0
    %v708 = vadd.f32 %v575, %v707
    %v709 = vpop.f32.mrb[0].mxu0
    %v710 = vpop.f32.mrb[0].mxu0
    %v711 = vadd.f32 %v575, %v710
    %v712 = vpop.f32.mrb[0].mxu0
    %713 = vmatprep.mubr.bf16.mxu0 0
    %714 = vmatmul.mubr.bf16.gmra.mrb[0].mxu0 %v553
    %v715 = vpop.f32.mrb[0].mxu0
    %v716 = vadd.f32 %v575, %v715
    %v717 = vpop.f32.mrb[0].mxu0
    %v718 = vpop.f32.mrb[0].mxu0
    %v719 = vadd.f32 %v575, %v718
    %v720 = vpop.f32.mrb[0].mxu0
    %721 = vdwg.mxu0
    %v722 = vmax.f32 %v660, 0.0
    %v723 = vmax.f32 %v663, 0.0
    %v724 = vmax.f32 %v668, 0.0
    %v725 = vmax.f32 %v671, 0.0
    %v726 = vmax.f32 %v676, 0.0
    %v727 = vmax.f32 %v679, 0.0
    %v728 = vmax.f32 %v684, 0.0
    %v729 = vmax.f32 %v687, 0.0
    %v730 = vmax.f32 %v692, 0.0
    %v731 = vmax.f32 %v695, 0.0
    %v732 = vmax.f32 %v700, 0.0
    %v733 = vmax.f32 %v703, 0.0
    %v734 = vmax.f32 %v708, 0.0
    %v735 = vmax.f32 %v711, 0.0
    %v736 = vmax.f32 %v716, 0.0
    %v737 = vmax.f32 %v719, 0.0
    %v738 = vpack.c.bf16 %v723, %v722
    %v739 = vpack.c.bf16 %v725, %v724
    %v740 = vpack.c.bf16 %v727, %v726
    %v741 = vpack.c.bf16 %v729, %v728
    %v742 = vpack.c.bf16 %v731, %v730
    %v743 = vpack.c.bf16 %v733, %v732
    %v744 = vpack.c.bf16 %v735, %v734
    %v745 = vpack.c.bf16 %v737, %v736
    %v746 = vld [vmem:[#allocation10] sm:$0xf]
    %v747 = vld [vmem:[#allocation10 + $0x4] sm:$0xf]
    %v748 = vld [vmem:[#allocation10 + $0x8] sm:$0xf]
    %v749 = vld [vmem:[#allocation10 + $0xc] sm:$0xf]
    %v750 = vld [vmem:[#allocation10 + $0x10] sm:$0xf]
    %v751 = vld [vmem:[#allocation10 + $0x14] sm:$0xf]
    %v752 = vld [vmem:[#allocation10 + $0x18] sm:$0xf]
    %v753 = vld [vmem:[#allocation10 + $0x1c] sm:$0xf]
    %v754 = vld [vmem:[#allocation10 + $0x20] sm:$0xf]
    %v755 = vld [vmem:[#allocation10 + $0x24] sm:$0xf]
    %v756 = vld [vmem:[#allocation10 + $0x28] sm:$0xf]
    %v757 = vld [vmem:[#allocation10 + $0x2c] sm:$0xf]
    %v758 = vld [vmem:[#allocation10 + $0x30] sm:$0xf]
    %v759 = vld [vmem:[#allocation10 + $0x34] sm:$0xf]
    %v760 = vld [vmem:[#allocation10 + $0x38] sm:$0xf]
    %v761 = vld [vmem:[#allocation10 + $0x3c] sm:$0xf]
    %v762 = vld [vmem:[#allocation11] sm:$0x1]
    %v764 = vlaneseq
    %v765 = vshrl.u32 %v764, 7
    %v766 = vsub.s32 0, %v765
    %v767 = vrot.slane %v762, %v766
    %v785 = vunpack.c.l.b16 %v746
    %v786 = vunpack.c.l.b16 %v747
    %v787 = vunpack.c.l.b16 %v748
    %v788 = vunpack.c.l.b16 %v749
    %v789 = vunpack.c.l.b16 %v750
    %v790 = vunpack.c.l.b16 %v751
    %v791 = vunpack.c.l.b16 %v752
    %v792 = vunpack.c.l.b16 %v753
    %v793 = vunpack.c.l.b16 %v754
    %v794 = vunpack.c.l.b16 %v755
    %v795 = vunpack.c.l.b16 %v756
    %v796 = vunpack.c.l.b16 %v757
    %v797 = vunpack.c.l.b16 %v758
    %v798 = vunpack.c.l.b16 %v759
    %v799 = vunpack.c.l.b16 %v760
    %v800 = vunpack.c.l.b16 %v761
    %v801 = vpack.c.b16 %v786, %v785
    %v802 = vpack.c.b16 %v788, %v787
    %v803 = vpack.c.b16 %v790, %v789
    %v804 = vpack.c.b16 %v792, %v791
    %v805 = vpack.c.b16 %v794, %v793
    %v806 = vpack.c.b16 %v796, %v795
    %v807 = vpack.c.b16 %v798, %v797
    %v808 = vpack.c.b16 %v800, %v799
    %817 = vmatprep.subr.bf16.mxu0 0
    %818 = vmatpush1.bf16.msra.mxu0 %v801
    %819 = vmatprep.subr.bf16.mxu0 0
    %820 = vmatpush1.bf16.msra.mxu0 %v802
    %821 = vmatprep.subr.bf16.mxu0 0
    %822 = vmatpush1.bf16.msra.mxu0 %v803
    %823 = vmatprep.subr.bf16.mxu0 0
    %824 = vmatpush1.bf16.msra.mxu0 %v804
    %825 = vmatprep.subr.bf16.mxu0 0
    %826 = vmatpush1.bf16.msra.mxu0 %v805
    %827 = vmatprep.subr.bf16.mxu0 0
    %828 = vmatpush1.bf16.msra.mxu0 %v806
    %829 = vmatprep.subr.bf16.mxu0 0
    %830 = vmatpush1.bf16.msra.mxu0 %v807
    %831 = vmatprep.subr.bf16.mxu0 0
    %832 = vmatpush1.bf16.msra.mxu0 %v808
    %833 = vmatprep.subr.bf16.mxu0 0
    %834 = vmatpush1.bf16.msra.mxu0 0
    %835 = vmatprep.subr.bf16.mxu0 0
    %836 = vmatpush1.bf16.msra.mxu0 0
    %837 = vmatprep.subr.bf16.mxu0 0
    %838 = vmatpush1.bf16.msra.mxu0 0
    %839 = vmatprep.subr.bf16.mxu0 0
    %840 = vmatpush1.bf16.msra.mxu0 0
    %841 = vmatprep.subr.bf16.mxu0 0
    %842 = vmatpush1.bf16.msra.mxu0 0
    %843 = vmatprep.subr.bf16.mxu0 0
    %844 = vmatpush1.bf16.msra.mxu0 0
    %845 = vmatprep.subr.bf16.mxu0 0
    %846 = vmatpush1.bf16.msra.mxu0 0
    %847 = vmatprep.subr.bf16.mxu0 0
    %848 = vmatpush1.bf16.msra.mxu0 0
    %849 = vmatprep.mubr.bf16.mxu0 0
    %850 = vmatmul.mubr.bf16.gmra.mrb[0].mxu0 %v738
    %v851 = vpop.f32.mrb[0].mxu0
    %v852 = vadd.f32 %v767, %v851
    %v853 = vpop.f32.mrb[0].mxu0
    %v854 = vpop.f32.mrb[0].mxu0
    %v855 = vadd.f32 %v767, %v854
    %v856 = vpop.f32.mrb[0].mxu0
    %857 = vmatprep.mubr.bf16.mxu0 0
    %858 = vmatmul.mubr.bf16.gmra.mrb[0].mxu0 %v739
    %v859 = vpop.f32.mrb[0].mxu0
    %v860 = vadd.f32 %v767, %v859
    %v861 = vpop.f32.mrb[0].mxu0
    %v862 = vpop.f32.mrb[0].mxu0
    %v863 = vadd.f32 %v767, %v862
    %v864 = vpop.f32.mrb[0].mxu0
    %865 = vmatprep.mubr.bf16.mxu0 0
    %866 = vmatmul.mubr.bf16.gmra.mrb[0].mxu0 %v740
    %v867 = vpop.f32.mrb[0].mxu0
    %v868 = vadd.f32 %v767, %v867
    %v869 = vpop.f32.mrb[0].mxu0
    %v870 = vpop.f32.mrb[0].mxu0
    %v871 = vadd.f32 %v767, %v870
    %v872 = vpop.f32.mrb[0].mxu0
    %873 = vmatprep.mubr.bf16.mxu0 0
    %874 = vmatmul.mubr.bf16.gmra.mrb[0].mxu0 %v741
    %v875 = vpop.f32.mrb[0].mxu0
    %v876 = vadd.f32 %v767, %v875
    %v877 = vpop.f32.mrb[0].mxu0
    %v878 = vpop.f32.mrb[0].mxu0
    %v879 = vadd.f32 %v767, %v878
    %v880 = vpop.f32.mrb[0].mxu0
    %881 = vmatprep.mubr.bf16.mxu0 0
    %882 = vmatmul.mubr.bf16.gmra.mrb[0].mxu0 %v742
    %v883 = vpop.f32.mrb[0].mxu0
    %v884 = vadd.f32 %v767, %v883
    %v885 = vpop.f32.mrb[0].mxu0
    %v886 = vpop.f32.mrb[0].mxu0
    %v887 = vadd.f32 %v767, %v886
    %v888 = vpop.f32.mrb[0].mxu0
    %889 = vmatprep.mubr.bf16.mxu0 0
    %890 = vmatmul.mubr.bf16.gmra.mrb[0].mxu0 %v743
    %v891 = vpop.f32.mrb[0].mxu0
    %v892 = vadd.f32 %v767, %v891
    %v893 = vpop.f32.mrb[0].mxu0
    %v894 = vpop.f32.mrb[0].mxu0
    %v895 = vadd.f32 %v767, %v894
    %v896 = vpop.f32.mrb[0].mxu0
    %897 = vmatprep.mubr.bf16.mxu0 0
    %898 = vmatmul.mubr.bf16.gmra.mrb[0].mxu0 %v744
    %v899 = vpop.f32.mrb[0].mxu0
    %v900 = vadd.f32 %v767, %v899
    %v901 = vpop.f32.mrb[0].mxu0
    %v902 = vpop.f32.mrb[0].mxu0
    %v903 = vadd.f32 %v767, %v902
    %v904 = vpop.f32.mrb[0].mxu0
    %905 = vmatprep.mubr.bf16.mxu0 0
    %906 = vmatmul.mubr.bf16.gmra.mrb[0].mxu0 %v745
    %v907 = vpop.f32.mrb[0].mxu0
    %v908 = vadd.f32 %v767, %v907
    %v909 = vpop.f32.mrb[0].mxu0
    %v910 = vpop.f32.mrb[0].mxu0
    %v911 = vadd.f32 %v767, %v910
    %v912 = vpop.f32.mrb[0].mxu0
    %913 = vdwg.mxu0
    %v914 = vmax.f32 %v852, 0.0
    %v915 = vmax.f32 %v855, 0.0
    %v916 = vmax.f32 %v860, 0.0
    %v917 = vmax.f32 %v863, 0.0
    %v918 = vmax.f32 %v868, 0.0
    %v919 = vmax.f32 %v871, 0.0
    %v920 = vmax.f32 %v876, 0.0
    %v921 = vmax.f32 %v879, 0.0
    %v922 = vmax.f32 %v884, 0.0
    %v923 = vmax.f32 %v887, 0.0
    %v924 = vmax.f32 %v892, 0.0
    %v925 = vmax.f32 %v895, 0.0
    %v926 = vmax.f32 %v900, 0.0
    %v927 = vmax.f32 %v903, 0.0
    %v928 = vmax.f32 %v908, 0.0
    %v929 = vmax.f32 %v911, 0.0
    %930 = vmatprep.subr.mxu0 0.0
    %931 = vmatpush1.msra.mxu0 %v914
    %932 = vmatprep.subr.mxu0 0.0
    %933 = vmatpush1.msra.mxu0 %v915
    %934 = vmatprep.subr.mxu0 0.0
    %935 = vmatpush1.msra.mxu0 %v916
    %936 = vmatprep.subr.mxu0 0.0
    %937 = vmatpush1.msra.mxu0 %v917
    %938 = vmatprep.subr.mxu0 0.0
    %939 = vmatpush1.msra.mxu0 %v918
    %940 = vmatprep.subr.mxu0 0.0
    %941 = vmatpush1.msra.mxu0 %v919
    %942 = vmatprep.subr.mxu0 0.0
    %943 = vmatpush1.msra.mxu0 %v920
    %944 = vmatprep.subr.mxu0 0.0
    %945 = vmatpush1.msra.mxu0 %v921
    %946 = vmatprep.subr.mxu0 0.0
    %947 = vmatpush1.msra.mxu0 %v922
    %948 = vmatprep.subr.mxu0 0.0
    %949 = vmatpush1.msra.mxu0 %v923
    %950 = vmatprep.subr.mxu0 0.0
    %951 = vmatpush1.msra.mxu0 %v924
    %952 = vmatprep.subr.mxu0 0.0
    %953 = vmatpush1.msra.mxu0 %v925
    %954 = vmatprep.subr.mxu0 0.0
    %955 = vmatpush1.msra.mxu0 %v926
    %956 = vmatprep.subr.mxu0 0.0
    %957 = vmatpush1.msra.mxu0 %v927
    %958 = vmatprep.subr.mxu0 0.0
    %959 = vmatpush1.msra.mxu0 %v928
    %960 = vmatprep.subr.mxu0 0.0
    %961 = vmatpush1.msra.mxu0 %v929
    %962 = vmatprep.subr.mxu0 0.0
    %963 = vmatpush1.msra.mxu0 0.0
    %964 = vmatprep.subr.mxu0 0.0
    %965 = vmatpush1.msra.mxu0 0.0
    %966 = vmatprep.subr.mxu0 0.0
    %967 = vmatpush1.msra.mxu0 0.0
    %968 = vmatprep.subr.mxu0 0.0
    %969 = vmatpush1.msra.mxu0 0.0
    %970 = vmatprep.subr.mxu0 0.0
    %971 = vmatpush1.msra.mxu0 0.0
    %972 = vmatprep.subr.mxu0 0.0
    %973 = vmatpush1.msra.mxu0 0.0
    %974 = vmatprep.subr.mxu0 0.0
    %975 = vmatpush1.msra.mxu0 0.0
    %976 = vmatprep.subr.mxu0 0.0
    %977 = vmatpush1.msra.mxu0 0.0
    %978 = vmatprep.subr.mxu0 0.0
    %979 = vmatpush1.msra.mxu0 0.0
    %980 = vmatprep.subr.mxu0 0.0
    %981 = vmatpush1.msra.mxu0 0.0
    %982 = vmatprep.subr.mxu0 0.0
    %983 = vmatpush1.msra.mxu0 0.0
    %984 = vmatprep.subr.mxu0 0.0
    %985 = vmatpush1.msra.mxu0 0.0
    %986 = vmatprep.subr.mxu0 0.0
    %987 = vmatpush1.msra.mxu0 0.0
    %988 = vmatprep.subr.mxu0 0.0
    %989 = vmatpush1.msra.mxu0 0.0
    %990 = vmatprep.subr.mxu0 0.0
    %991 = vmatpush1.msra.mxu0 0.0
    %992 = vmatprep.subr.mxu0 0.0
    %993 = vmatpush1.msra.mxu0 0.0
    %994 = vmatprep.mubr.f32.mxu0 0.0
    %995 = vmatmul.mubr.f32.gmra.mrb[0].mxu0 %v352
    %v996 = vpop.f32.mrb[0].mxu0
    %v997 = vadd.f32 0.0, %v996
    %v998 = vpop.f32.mrb[0].mxu0
    %999 = vdwg.mxu0
    %v1000 = vmul.f32 %v997, 0.0625
    %v1001 = vlaneseq
    %v1002 = vshrl.u32 %v1001, 7
    %v1003 = vsub.s32 0, %v1002
    %v1004 = vrot.slane %v1000, %v1003
    %v1005 = vsub.f32 %v914, %v1004
    %v1006 = vsub.f32 %v915, %v1004
    %v1007 = vsub.f32 %v916, %v1004
    %v1008 = vsub.f32 %v917, %v1004
    %v1009 = vsub.f32 %v918, %v1004
    %v1010 = vsub.f32 %v919, %v1004
    %v1011 = vsub.f32 %v920, %v1004
    %v1012 = vsub.f32 %v921, %v1004
    %v1013 = vsub.f32 %v922, %v1004
    %v1014 = vsub.f32 %v923, %v1004
    %v1015 = vsub.f32 %v924, %v1004
    %v1016 = vsub.f32 %v925, %v1004
    %v1017 = vsub.f32 %v926, %v1004
    %v1018 = vsub.f32 %v927, %v1004
    %v1019 = vsub.f32 %v928, %v1004
    %v1020 = vsub.f32 %v929, %v1004
    %v1021 = vmul.f32 %v1005, %v1005
    %v1022 = vmul.f32 %v1006, %v1006
    %v1023 = vmul.f32 %v1007, %v1007
    %v1024 = vmul.f32 %v1008, %v1008
    %v1025 = vmul.f32 %v1009, %v1009
    %v1026 = vmul.f32 %v1010, %v1010
    %v1027 = vmul.f32 %v1011, %v1011
    %v1028 = vmul.f32 %v1012, %v1012
    %v1029 = vmul.f32 %v1013, %v1013
    %v1030 = vmul.f32 %v1014, %v1014
    %v1031 = vmul.f32 %v1015, %v1015
    %v1032 = vmul.f32 %v1016, %v1016
    %v1033 = vmul.f32 %v1017, %v1017
    %v1034 = vmul.f32 %v1018, %v1018
    %v1035 = vmul.f32 %v1019, %v1019
    %v1036 = vmul.f32 %v1020, %v1020
    %1037 = vmatprep.subr.mxu0 0.0
    %1038 = vmatpush1.msra.mxu0 %v1021
    %1039 = vmatprep.subr.mxu0 0.0
    %1040 = vmatpush1.msra.mxu0 %v1022
    %1041 = vmatprep.subr.mxu0 0.0
    %1042 = vmatpush1.msra.mxu0 %v1023
    %1043 = vmatprep.subr.mxu0 0.0
    %1044 = vmatpush1.msra.mxu0 %v1024
    %1045 = vmatprep.subr.mxu0 0.0
    %1046 = vmatpush1.msra.mxu0 %v1025
    %1047 = vmatprep.subr.mxu0 0.0
    %1048 = vmatpush1.msra.mxu0 %v1026
    %1049 = vmatprep.subr.mxu0 0.0
    %1050 = vmatpush1.msra.mxu0 %v1027
    %1051 = vmatprep.subr.mxu0 0.0
    %1052 = vmatpush1.msra.mxu0 %v1028
    %1053 = vmatprep.subr.mxu0 0.0
    %1054 = vmatpush1.msra.mxu0 %v1029
    %1055 = vmatprep.subr.mxu0 0.0
    %1056 = vmatpush1.msra.mxu0 %v1030
    %1057 = vmatprep.subr.mxu0 0.0
    %1058 = vmatpush1.msra.mxu0 %v1031
    %1059 = vmatprep.subr.mxu0 0.0
    %1060 = vmatpush1.msra.mxu0 %v1032
    %1061 = vmatprep.subr.mxu0 0.0
    %1062 = vmatpush1.msra.mxu0 %v1033
    %1063 = vmatprep.subr.mxu0 0.0
    %1064 = vmatpush1.msra.mxu0 %v1034
    %1065 = vmatprep.subr.mxu0 0.0
    %1066 = vmatpush1.msra.mxu0 %v1035
    %1067 = vmatprep.subr.mxu0 0.0
    %1068 = vmatpush1.msra.mxu0 %v1036
    %1069 = vmatprep.subr.mxu0 0.0
    %1070 = vmatpush1.msra.mxu0 0.0
    %1071 = vmatprep.subr.mxu0 0.0
    %1072 = vmatpush1.msra.mxu0 0.0
    %1073 = vmatprep.subr.mxu0 0.0
    %1074 = vmatpush1.msra.mxu0 0.0
    %1075 = vmatprep.subr.mxu0 0.0
    %1076 = vmatpush1.msra.mxu0 0.0
    %1077 = vmatprep.subr.mxu0 0.0
    %1078 = vmatpush1.msra.mxu0 0.0
    %1079 = vmatprep.subr.mxu0 0.0
    %1080 = vmatpush1.msra.mxu0 0.0
    %1081 = vmatprep.subr.mxu0 0.0
    %1082 = vmatpush1.msra.mxu0 0.0
    %1083 = vmatprep.subr.mxu0 0.0
    %1084 = vmatpush1.msra.mxu0 0.0
    %1085 = vmatprep.subr.mxu0 0.0
    %1086 = vmatpush1.msra.mxu0 0.0
    %1087 = vmatprep.subr.mxu0 0.0
    %1088 = vmatpush1.msra.mxu0 0.0
    %1089 = vmatprep.subr.mxu0 0.0
    %1090 = vmatpush1.msra.mxu0 0.0
    %1091 = vmatprep.subr.mxu0 0.0
    %1092 = vmatpush1.msra.mxu0 0.0
    %1093 = vmatprep.subr.mxu0 0.0
    %1094 = vmatpush1.msra.mxu0 0.0
    %1095 = vmatprep.subr.mxu0 0.0
    %1096 = vmatpush1.msra.mxu0 0.0
    %1097 = vmatprep.subr.mxu0 0.0
    %1098 = vmatpush1.msra.mxu0 0.0
    %1099 = vmatprep.subr.mxu0 0.0
    %1100 = vmatpush1.msra.mxu0 0.0
    %1101 = vmatprep.mubr.f32.mxu0 0.0
    %1102 = vmatmul.mubr.f32.gmra.mrb[0].mxu0 %v352
    %v1103 = vpop.f32.mrb[0].mxu0
    %v1104 = vadd.f32 0.0, %v1103
    %v1105 = vpop.f32.mrb[0].mxu0
    %1106 = vdwg.mxu0
    %v1107 = vmul.f32 %v1104, 0.0625
    %v1108 = vld [vmem:[#allocation13] sm:$0x1]
    %v1110 = vlaneseq
    %v1111 = vshrl.u32 %v1110, 7
    %v1112 = vsub.s32 0, %v1111
    %v1113 = vrot.slane %v1108, %v1112
    %v1115 = vmul.f32 %v1113, %v1005
    %v1116 = vmul.f32 %v1113, %v1006
    %v1117 = vmul.f32 %v1113, %v1007
    %v1118 = vmul.f32 %v1113, %v1008
    %v1119 = vmul.f32 %v1113, %v1009
    %v1120 = vmul.f32 %v1113, %v1010
    %v1121 = vmul.f32 %v1113, %v1011
    %v1122 = vmul.f32 %v1113, %v1012
    %v1123 = vmul.f32 %v1113, %v1013
    %v1124 = vmul.f32 %v1113, %v1014
    %v1125 = vmul.f32 %v1113, %v1015
    %v1126 = vmul.f32 %v1113, %v1016
    %v1127 = vmul.f32 %v1113, %v1017
    %v1128 = vmul.f32 %v1113, %v1018
    %v1129 = vmul.f32 %v1113, %v1019
    %v1130 = vmul.f32 %v1113, %v1020
    %v1131 = vadd.f32 %v1107, 1e-05
    %v1132 = vrsqrt.pop %v1131
    %v1133 = vlaneseq
    %v1134 = vshrl.u32 %v1133, 7
    %v1135 = vsub.s32 0, %v1134
    %v1136 = vrot.slane %v1132, %v1135
    %v1137 = vmul.f32 %v1115, %v1136
    %v1138 = vmul.f32 %v1116, %v1136
    %v1139 = vmul.f32 %v1117, %v1136
    %v1140 = vmul.f32 %v1118, %v1136
    %v1141 = vmul.f32 %v1119, %v1136
    %v1142 = vmul.f32 %v1120, %v1136
    %v1143 = vmul.f32 %v1121, %v1136
    %v1144 = vmul.f32 %v1122, %v1136
    %v1145 = vmul.f32 %v1123, %v1136
    %v1146 = vmul.f32 %v1124, %v1136
    %v1147 = vmul.f32 %v1125, %v1136
    %v1148 = vmul.f32 %v1126, %v1136
    %v1149 = vmul.f32 %v1127, %v1136
    %v1150 = vmul.f32 %v1128, %v1136
    %v1151 = vmul.f32 %v1129, %v1136
    %v1152 = vmul.f32 %v1130, %v1136
    %v1153 = vld [vmem:[#allocation14] sm:$0x1]
    %v1155 = vlaneseq
    %v1156 = vshrl.u32 %v1155, 7
    %v1157 = vsub.s32 0, %v1156
    %v1158 = vrot.slane %v1153, %v1157
    %v1160 = vadd.f32 %v1137, %v1158
    %v1161 = vadd.f32 %v1138, %v1158
    %v1162 = vadd.f32 %v1139, %v1158
    %v1163 = vadd.f32 %v1140, %v1158
    %v1164 = vadd.f32 %v1141, %v1158
    %v1165 = vadd.f32 %v1142, %v1158
    %v1166 = vadd.f32 %v1143, %v1158
    %v1167 = vadd.f32 %v1144, %v1158
    %v1168 = vadd.f32 %v1145, %v1158
    %v1169 = vadd.f32 %v1146, %v1158
    %v1170 = vadd.f32 %v1147, %v1158
    %v1171 = vadd.f32 %v1148, %v1158
    %v1172 = vadd.f32 %v1149, %v1158
    %v1173 = vadd.f32 %v1150, %v1158
    %v1174 = vadd.f32 %v1151, %v1158
    %v1175 = vadd.f32 %v1152, %v1158
    %v1176 = vpack.c.bf16 %v1161, %v1160
    %v1177 = vpack.c.bf16 %v1163, %v1162
    %v1178 = vpack.c.bf16 %v1165, %v1164
    %v1179 = vpack.c.bf16 %v1167, %v1166
    %v1180 = vpack.c.bf16 %v1169, %v1168
    %v1181 = vpack.c.bf16 %v1171, %v1170
    %v1182 = vpack.c.bf16 %v1173, %v1172
    %v1183 = vpack.c.bf16 %v1175, %v1174
    %v1186 = vunpack.c.l.b16 %v330
    %v1187 = vunpack.c.l.b16 %v331
    %v1188 = vpack.c.b16 %v1187, %v1186
    %1190 = vmatprep.subr.bf16.mxu0 0
    %1191 = vmatpush1.bf16.msra.mxu0 %v1176
    %1192 = vmatprep.subr.bf16.mxu0 0
    %1193 = vmatpush1.bf16.msra.mxu0 %v1177
    %1194 = vmatprep.subr.bf16.mxu0 0
    %1195 = vmatpush1.bf16.msra.mxu0 %v1178
    %1196 = vmatprep.subr.bf16.mxu0 0
    %1197 = vmatpush1.bf16.msra.mxu0 %v1179
    %1198 = vmatprep.subr.bf16.mxu0 0
    %1199 = vmatpush1.bf16.msra.mxu0 %v1180
    %1200 = vmatprep.subr.bf16.mxu0 0
    %1201 = vmatpush1.bf16.msra.mxu0 %v1181
    %1202 = vmatprep.subr.bf16.mxu0 0
    %1203 = vmatpush1.bf16.msra.mxu0 %v1182
    %1204 = vmatprep.subr.bf16.mxu0 0
    %1205 = vmatpush1.bf16.msra.mxu0 %v1183
    %1206 = vmatprep.subr.bf16.mxu0 0
    %1207 = vmatpush1.bf16.msra.mxu0 0
    %1208 = vmatprep.subr.bf16.mxu0 0
    %1209 = vmatpush1.bf16.msra.mxu0 0
    %1210 = vmatprep.subr.bf16.mxu0 0
    %1211 = vmatpush1.bf16.msra.mxu0 0
    %1212 = vmatprep.subr.bf16.mxu0 0
    %1213 = vmatpush1.bf16.msra.mxu0 0
    %1214 = vmatprep.subr.bf16.mxu0 0
    %1215 = vmatpush1.bf16.msra.mxu0 0
    %1216 = vmatprep.subr.bf16.mxu0 0
    %1217 = vmatpush1.bf16.msra.mxu0 0
    %1218 = vmatprep.subr.bf16.mxu0 0
    %1219 = vmatpush1.bf16.msra.mxu0 0
    %1220 = vmatprep.subr.bf16.mxu0 0
    %1221 = vmatpush1.bf16.msra.mxu0 0
    %1222 = vmatprep.mubr.bf16.mxu0 0
    %1223 = vmatmul.mubr.bf16.gmra.mrb[0].mxu0 %v385
    %v1224 = vpop.f32.mrb[0].mxu0
    %v1225 = vadd.f32 0.0, %v1224
    %v1226 = vpop.f32.mrb[0].mxu0
    %v1227 = vpop.f32.mrb[0].mxu0
    %v1228 = vadd.f32 0.0, %v1227
    %v1229 = vpop.f32.mrb[0].mxu0
    %1230 = vmatprep.mubr.bf16.mxu0 0
    %1231 = vmatmul.mubr.bf16.gmra.mrb[0].mxu0 %v386
    %v1232 = vpop.f32.mrb[0].mxu0
    %v1233 = vadd.f32 0.0, %v1232
    %v1234 = vpop.f32.mrb[0].mxu0
    %v1235 = vpop.f32.mrb[0].mxu0
    %v1236 = vadd.f32 0.0, %v1235
    %v1237 = vpop.f32.mrb[0].mxu0
    %1238 = vmatprep.mubr.bf16.mxu0 0
    %1239 = vmatmul.mubr.bf16.gmra.mrb[0].mxu0 %v387
    %v1240 = vpop.f32.mrb[0].mxu0
    %v1241 = vadd.f32 0.0, %v1240
    %v1242 = vpop.f32.mrb[0].mxu0
    %v1243 = vpop.f32.mrb[0].mxu0
    %v1244 = vadd.f32 0.0, %v1243
    %v1245 = vpop.f32.mrb[0].mxu0
    %1246 = vmatprep.mubr.bf16.mxu0 0
    %1247 = vmatmul.mubr.bf16.gmra.mrb[0].mxu0 %v388
    %v1248 = vpop.f32.mrb[0].mxu0
    %v1249 = vadd.f32 0.0, %v1248
    %v1250 = vpop.f32.mrb[0].mxu0
    %v1251 = vpop.f32.mrb[0].mxu0
    %v1252 = vadd.f32 0.0, %v1251
    %v1253 = vpop.f32.mrb[0].mxu0
    %1254 = vmatprep.mubr.bf16.mxu0 0
    %1255 = vmatmul.mubr.bf16.gmra.mrb[0].mxu0 %v389
    %v1256 = vpop.f32.mrb[0].mxu0
    %v1257 = vadd.f32 0.0, %v1256
    %v1258 = vpop.f32.mrb[0].mxu0
    %v1259 = vpop.f32.mrb[0].mxu0
    %v1260 = vadd.f32 0.0, %v1259
    %v1261 = vpop.f32.mrb[0].mxu0
    %1262 = vmatprep.mubr.bf16.mxu0 0
    %1263 = vmatmul.mubr.bf16.gmra.mrb[0].mxu0 %v390
    %v1264 = vpop.f32.mrb[0].mxu0
    %v1265 = vadd.f32 0.0, %v1264
    %v1266 = vpop.f32.mrb[0].mxu0
    %v1267 = vpop.f32.mrb[0].mxu0
    %v1268 = vadd.f32 0.0, %v1267
    %v1269 = vpop.f32.mrb[0].mxu0
    %1270 = vmatprep.mubr.bf16.mxu0 0
    %1271 = vmatmul.mubr.bf16.gmra.mrb[0].mxu0 %v391
    %v1272 = vpop.f32.mrb[0].mxu0
    %v1273 = vadd.f32 0.0, %v1272
    %v1274 = vpop.f32.mrb[0].mxu0
    %v1275 = vpop.f32.mrb[0].mxu0
    %v1276 = vadd.f32 0.0, %v1275
    %v1277 = vpop.f32.mrb[0].mxu0
    %1278 = vmatprep.mubr.bf16.mxu0 0
    %1279 = vmatmul.mubr.bf16.gmra.mrb[0].mxu0 %v392
    %v1280 = vpop.f32.mrb[0].mxu0
    %v1281 = vadd.f32 0.0, %v1280
    %v1282 = vpop.f32.mrb[0].mxu0
    %v1283 = vpop.f32.mrb[0].mxu0
    %v1284 = vadd.f32 0.0, %v1283
    %v1285 = vpop.f32.mrb[0].mxu0
    %1286 = vmatprep.mubr.bf16.mxu0 0
    %1287 = vmatmul.mubr.bf16.gmra.mrb[0].mxu0 %v1188
    %v1288 = vpop.f32.mrb[0].mxu0
    %v1289 = vadd.f32 0.0, %v1288
    %v1290 = vpop.f32.mrb[0].mxu0
    %v1291 = vpop.f32.mrb[0].mxu0
    %v1292 = vadd.f32 0.0, %v1291
    %v1293 = vpop.f32.mrb[0].mxu0
    %1294 = vdwg.mxu0
    %v1295 = vpack.c.bf16 %v1228, %v1225
    %v1296 = vpack.c.bf16 %v1236, %v1233
    %v1297 = vpack.c.bf16 %v1244, %v1241
    %v1298 = vpack.c.bf16 %v1252, %v1249
    %v1299 = vpack.c.bf16 %v1260, %v1257
    %v1300 = vpack.c.bf16 %v1268, %v1265
    %v1301 = vpack.c.bf16 %v1276, %v1273
    %v1302 = vpack.c.bf16 %v1284, %v1281
    %v1303 = vld [vmem:[#allocation16] sm:$0xf]
    %v1304 = vld [vmem:[#allocation16 + $0x4] sm:$0xf]
    %v1305 = vld [vmem:[#allocation16 + $0x8] sm:$0xf]
    %v1306 = vld [vmem:[#allocation16 + $0xc] sm:$0xf]
    %v1307 = vld [vmem:[#allocation16 + $0x10] sm:$0xf]
    %v1308 = vld [vmem:[#allocation16 + $0x14] sm:$0xf]
    %v1309 = vld [vmem:[#allocation16 + $0x18] sm:$0xf]
    %v1310 = vld [vmem:[#allocation16 + $0x1c] sm:$0xf]
    %v1311 = vld [vmem:[#allocation16 + $0x20] sm:$0xf]
    %v1312 = vld [vmem:[#allocation16 + $0x24] sm:$0xf]
    %v1313 = vld [vmem:[#allocation16 + $0x28] sm:$0xf]
    %v1314 = vld [vmem:[#allocation16 + $0x2c] sm:$0xf]
    %v1315 = vld [vmem:[#allocation16 + $0x30] sm:$0xf]
    %v1316 = vld [vmem:[#allocation16 + $0x34] sm:$0xf]
    %v1317 = vld [vmem:[#allocation16 + $0x38] sm:$0xf]
    %v1318 = vld [vmem:[#allocation16 + $0x3c] sm:$0xf]
    %v1319 = vld [vmem:[#allocation17] sm:$0x1]
    %v1321 = vlaneseq
    %v1322 = vshrl.u32 %v1321, 7
    %v1323 = vsub.s32 0, %v1322
    %v1324 = vrot.slane %v1319, %v1323
    %v1342 = vunpack.c.l.b16 %v1303
    %v1343 = vunpack.c.l.b16 %v1304
    %v1344 = vunpack.c.l.b16 %v1305
    %v1345 = vunpack.c.l.b16 %v1306
    %v1346 = vunpack.c.l.b16 %v1307
    %v1347 = vunpack.c.l.b16 %v1308
    %v1348 = vunpack.c.l.b16 %v1309
    %v1349 = vunpack.c.l.b16 %v1310
    %v1350 = vunpack.c.l.b16 %v1311
    %v1351 = vunpack.c.l.b16 %v1312
    %v1352 = vunpack.c.l.b16 %v1313
    %v1353 = vunpack.c.l.b16 %v1314
    %v1354 = vunpack.c.l.b16 %v1315
    %v1355 = vunpack.c.l.b16 %v1316
    %v1356 = vunpack.c.l.b16 %v1317
    %v1357 = vunpack.c.l.b16 %v1318
    %v1358 = vpack.c.b16 %v1343, %v1342
    %v1359 = vpack.c.b16 %v1345, %v1344
    %v1360 = vpack.c.b16 %v1347, %v1346
    %v1361 = vpack.c.b16 %v1349, %v1348
    %v1362 = vpack.c.b16 %v1351, %v1350
    %v1363 = vpack.c.b16 %v1353, %v1352
    %v1364 = vpack.c.b16 %v1355, %v1354
    %v1365 = vpack.c.b16 %v1357, %v1356
    %1374 = vmatprep.subr.bf16.mxu0 0
    %1375 = vmatpush1.bf16.msra.mxu0 %v1358
    %1376 = vmatprep.subr.bf16.mxu0 0
    %1377 = vmatpush1.bf16.msra.mxu0 %v1359
    %1378 = vmatprep.subr.bf16.mxu0 0
    %1379 = vmatpush1.bf16.msra.mxu0 %v1360
    %1380 = vmatprep.subr.bf16.mxu0 0
    %1381 = vmatpush1.bf16.msra.mxu0 %v1361
    %1382 = vmatprep.subr.bf16.mxu0 0
    %1383 = vmatpush1.bf16.msra.mxu0 %v1362
    %1384 = vmatprep.subr.bf16.mxu0 0
    %1385 = vmatpush1.bf16.msra.mxu0 %v1363
    %1386 = vmatprep.subr.bf16.mxu0 0
    %1387 = vmatpush1.bf16.msra.mxu0 %v1364
    %1388 = vmatprep.subr.bf16.mxu0 0
    %1389 = vmatpush1.bf16.msra.mxu0 %v1365
    %1390 = vmatprep.subr.bf16.mxu0 0
    %1391 = vmatpush1.bf16.msra.mxu0 0
    %1392 = vmatprep.subr.bf16.mxu0 0
    %1393 = vmatpush1.bf16.msra.mxu0 0
    %1394 = vmatprep.subr.bf16.mxu0 0
    %1395 = vmatpush1.bf16.msra.mxu0 0
    %1396 = vmatprep.subr.bf16.mxu0 0
    %1397 = vmatpush1.bf16.msra.mxu0 0
    %1398 = vmatprep.subr.bf16.mxu0 0
    %1399 = vmatpush1.bf16.msra.mxu0 0
    %1400 = vmatprep.subr.bf16.mxu0 0
    %1401 = vmatpush1.bf16.msra.mxu0 0
    %1402 = vmatprep.subr.bf16.mxu0 0
    %1403 = vmatpush1.bf16.msra.mxu0 0
    %1404 = vmatprep.subr.bf16.mxu0 0
    %1405 = vmatpush1.bf16.msra.mxu0 0
    %1406 = vmatprep.mubr.bf16.mxu0 0
    %1407 = vmatmul.mubr.bf16.gmra.mrb[0].mxu0 %v1295
    %v1408 = vpop.f32.mrb[0].mxu0
    %v1409 = vadd.f32 %v1324, %v1408
    %v1410 = vpop.f32.mrb[0].mxu0
    %v1411 = vpop.f32.mrb[0].mxu0
    %v1412 = vadd.f32 %v1324, %v1411
    %v1413 = vpop.f32.mrb[0].mxu0
    %1414 = vmatprep.mubr.bf16.mxu0 0
    %1415 = vmatmul.mubr.bf16.gmra.mrb[0].mxu0 %v1296
    %v1416 = vpop.f32.mrb[0].mxu0
    %v1417 = vadd.f32 %v1324, %v1416
    %v1418 = vpop.f32.mrb[0].mxu0
    %v1419 = vpop.f32.mrb[0].mxu0
    %v1420 = vadd.f32 %v1324, %v1419
    %v1421 = vpop.f32.mrb[0].mxu0
    %1422 = vmatprep.mubr.bf16.mxu0 0
    %1423 = vmatmul.mubr.bf16.gmra.mrb[0].mxu0 %v1297
    %v1424 = vpop.f32.mrb[0].mxu0
    %v1425 = vadd.f32 %v1324, %v1424
    %v1426 = vpop.f32.mrb[0].mxu0
    %v1427 = vpop.f32.mrb[0].mxu0
    %v1428 = vadd.f32 %v1324, %v1427
    %v1429 = vpop.f32.mrb[0].mxu0
    %1430 = vmatprep.mubr.bf16.mxu0 0
    %1431 = vmatmul.mubr.bf16.gmra.mrb[0].mxu0 %v1298
    %v1432 = vpop.f32.mrb[0].mxu0
    %v1433 = vadd.f32 %v1324, %v1432
    %v1434 = vpop.f32.mrb[0].mxu0
    %v1435 = vpop.f32.mrb[0].mxu0
    %v1436 = vadd.f32 %v1324, %v1435
    %v1437 = vpop.f32.mrb[0].mxu0
    %1438 = vmatprep.mubr.bf16.mxu0 0
    %1439 = vmatmul.mubr.bf16.gmra.mrb[0].mxu0 %v1299
    %v1440 = vpop.f32.mrb[0].mxu0
    %v1441 = vadd.f32 %v1324, %v1440
    %v1442 = vpop.f32.mrb[0].mxu0
    %v1443 = vpop.f32.mrb[0].mxu0
    %v1444 = vadd.f32 %v1324, %v1443
    %v1445 = vpop.f32.mrb[0].mxu0
    %1446 = vmatprep.mubr.bf16.mxu0 0
    %1447 = vmatmul.mubr.bf16.gmra.mrb[0].mxu0 %v1300
    %v1448 = vpop.f32.mrb[0].mxu0
    %v1449 = vadd.f32 %v1324, %v1448
    %v1450 = vpop.f32.mrb[0].mxu0
    %v1451 = vpop.f32.mrb[0].mxu0
    %v1452 = vadd.f32 %v1324, %v1451
    %v1453 = vpop.f32.mrb[0].mxu0
    %1454 = vmatprep.mubr.bf16.mxu0 0
    %1455 = vmatmul.mubr.bf16.gmra.mrb[0].mxu0 %v1301
    %v1456 = vpop.f32.mrb[0].mxu0
    %v1457 = vadd.f32 %v1324, %v1456
    %v1458 = vpop.f32.mrb[0].mxu0
    %v1459 = vpop.f32.mrb[0].mxu0
    %v1460 = vadd.f32 %v1324, %v1459
    %v1461 = vpop.f32.mrb[0].mxu0
    %1462 = vmatprep.mubr.bf16.mxu0 0
    %1463 = vmatmul.mubr.bf16.gmra.mrb[0].mxu0 %v1302
    %v1464 = vpop.f32.mrb[0].mxu0
    %v1465 = vadd.f32 %v1324, %v1464
    %v1466 = vpop.f32.mrb[0].mxu0
    %v1467 = vpop.f32.mrb[0].mxu0
    %v1468 = vadd.f32 %v1324, %v1467
    %v1469 = vpop.f32.mrb[0].mxu0
    %1470 = vdwg.mxu0
    %v1471 = vmax.f32 %v1409, 0.0
    %v1472 = vmax.f32 %v1412, 0.0
    %v1473 = vmax.f32 %v1417, 0.0
    %v1474 = vmax.f32 %v1420, 0.0
    %v1475 = vmax.f32 %v1425, 0.0
    %v1476 = vmax.f32 %v1428, 0.0
    %v1477 = vmax.f32 %v1433, 0.0
    %v1478 = vmax.f32 %v1436, 0.0
    %v1479 = vmax.f32 %v1441, 0.0
    %v1480 = vmax.f32 %v1444, 0.0
    %v1481 = vmax.f32 %v1449, 0.0
    %v1482 = vmax.f32 %v1452, 0.0
    %v1483 = vmax.f32 %v1457, 0.0
    %v1484 = vmax.f32 %v1460, 0.0
    %v1485 = vmax.f32 %v1465, 0.0
    %v1486 = vmax.f32 %v1468, 0.0
    %v1487 = vpack.c.bf16 %v1472, %v1471
    %v1488 = vpack.c.bf16 %v1474, %v1473
    %v1489 = vpack.c.bf16 %v1476, %v1475
    %v1490 = vpack.c.bf16 %v1478, %v1477
    %v1491 = vpack.c.bf16 %v1480, %v1479
    %v1492 = vpack.c.bf16 %v1482, %v1481
    %v1493 = vpack.c.bf16 %v1484, %v1483
    %v1494 = vpack.c.bf16 %v1486, %v1485
    %v1495 = vld [vmem:[#allocation19] sm:$0xf]
    %v1496 = vld [vmem:[#allocation19 + $0x4] sm:$0xf]
    %v1497 = vld [vmem:[#allocation19 + $0x8] sm:$0xf]
    %v1498 = vld [vmem:[#allocation19 + $0xc] sm:$0xf]
    %v1499 = vld [vmem:[#allocation19 + $0x10] sm:$0xf]
    %v1500 = vld [vmem:[#allocation19 + $0x14] sm:$0xf]
    %v1501 = vld [vmem:[#allocation19 + $0x18] sm:$0xf]
    %v1502 = vld [vmem:[#allocation19 + $0x1c] sm:$0xf]
    %v1503 = vld [vmem:[#allocation19 + $0x20] sm:$0xf]
    %v1504 = vld [vmem:[#allocation19 + $0x24] sm:$0xf]
    %v1505 = vld [vmem:[#allocation19 + $0x28] sm:$0xf]
    %v1506 = vld [vmem:[#allocation19 + $0x2c] sm:$0xf]
    %v1507 = vld [vmem:[#allocation19 + $0x30] sm:$0xf]
    %v1508 = vld [vmem:[#allocation19 + $0x34] sm:$0xf]
    %v1509 = vld [vmem:[#allocation19 + $0x38] sm:$0xf]
    %v1510 = vld [vmem:[#allocation19 + $0x3c] sm:$0xf]
    %v1511 = vld [vmem:[#allocation20] sm:$0x1]
    %v1513 = vlaneseq
    %v1514 = vshrl.u32 %v1513, 7
    %v1515 = vsub.s32 0, %v1514
    %v1516 = vrot.slane %v1511, %v1515
    %v1534 = vunpack.c.l.b16 %v1495
    %v1535 = vunpack.c.l.b16 %v1496
    %v1536 = vunpack.c.l.b16 %v1497
    %v1537 = vunpack.c.l.b16 %v1498
    %v1538 = vunpack.c.l.b16 %v1499
    %v1539 = vunpack.c.l.b16 %v1500
    %v1540 = vunpack.c.l.b16 %v1501
    %v1541 = vunpack.c.l.b16 %v1502
    %v1542 = vunpack.c.l.b16 %v1503
    %v1543 = vunpack.c.l.b16 %v1504
    %v1544 = vunpack.c.l.b16 %v1505
    %v1545 = vunpack.c.l.b16 %v1506
    %v1546 = vunpack.c.l.b16 %v1507
    %v1547 = vunpack.c.l.b16 %v1508
    %v1548 = vunpack.c.l.b16 %v1509
    %v1549 = vunpack.c.l.b16 %v1510
    %v1550 = vpack.c.b16 %v1535, %v1534
    %v1551 = vpack.c.b16 %v1537, %v1536
    %v1552 = vpack.c.b16 %v1539, %v1538
    %v1553 = vpack.c.b16 %v1541, %v1540
    %v1554 = vpack.c.b16 %v1543, %v1542
    %v1555 = vpack.c.b16 %v1545, %v1544
    %v1556 = vpack.c.b16 %v1547, %v1546
    %v1557 = vpack.c.b16 %v1549, %v1548
    %1566 = vmatprep.subr.bf16.mxu0 0
    %1567 = vmatpush1.bf16.msra.mxu0 %v1550
    %1568 = vmatprep.subr.bf16.mxu0 0
    %1569 = vmatpush1.bf16.msra.mxu0 %v1551
    %1570 = vmatprep.subr.bf16.mxu0 0
    %1571 = vmatpush1.bf16.msra.mxu0 %v1552
    %1572 = vmatprep.subr.bf16.mxu0 0
    %1573 = vmatpush1.bf16.msra.mxu0 %v1553
    %1574 = vmatprep.subr.bf16.mxu0 0
    %1575 = vmatpush1.bf16.msra.mxu0 %v1554
    %1576 = vmatprep.subr.bf16.mxu0 0
    %1577 = vmatpush1.bf16.msra.mxu0 %v1555
    %1578 = vmatprep.subr.bf16.mxu0 0
    %1579 = vmatpush1.bf16.msra.mxu0 %v1556
    %1580 = vmatprep.subr.bf16.mxu0 0
    %1581 = vmatpush1.bf16.msra.mxu0 %v1557
    %1582 = vmatprep.subr.bf16.mxu0 0
    %1583 = vmatpush1.bf16.msra.mxu0 0
    %1584 = vmatprep.subr.bf16.mxu0 0
    %1585 = vmatpush1.bf16.msra.mxu0 0
    %1586 = vmatprep.subr.bf16.mxu0 0
    %1587 = vmatpush1.bf16.msra.mxu0 0
    %1588 = vmatprep.subr.bf16.mxu0 0
    %1589 = vmatpush1.bf16.msra.mxu0 0
    %1590 = vmatprep.subr.bf16.mxu0 0
    %1591 = vmatpush1.bf16.msra.mxu0 0
    %1592 = vmatprep.subr.bf16.mxu0 0
    %1593 = vmatpush1.bf16.msra.mxu0 0
    %1594 = vmatprep.subr.bf16.mxu0 0
    %1595 = vmatpush1.bf16.msra.mxu0 0
    %1596 = vmatprep.subr.bf16.mxu0 0
    %1597 = vmatpush1.bf16.msra.mxu0 0
    %1598 = vmatprep.mubr.bf16.mxu0 0
    %1599 = vmatmul.mubr.bf16.gmra.mrb[0].mxu0 %v1487
    %v1600 = vpop.f32.mrb[0].mxu0
    %v1601 = vadd.f32 %v1516, %v1600
    %v1602 = vpop.f32.mrb[0].mxu0
    %v1603 = vpop.f32.mrb[0].mxu0
    %v1604 = vadd.f32 %v1516, %v1603
    %v1605 = vpop.f32.mrb[0].mxu0
    %1606 = vmatprep.mubr.bf16.mxu0 0
    %1607 = vmatmul.mubr.bf16.gmra.mrb[0].mxu0 %v1488
    %v1608 = vpop.f32.mrb[0].mxu0
    %v1609 = vadd.f32 %v1516, %v1608
    %v1610 = vpop.f32.mrb[0].mxu0
    %v1611 = vpop.f32.mrb[0].mxu0
    %v1612 = vadd.f32 %v1516, %v1611
    %v1613 = vpop.f32.mrb[0].mxu0
    %1614 = vmatprep.mubr.bf16.mxu0 0
    %1615 = vmatmul.mubr.bf16.gmra.mrb[0].mxu0 %v1489
    %v1616 = vpop.f32.mrb[0].mxu0
    %v1617 = vadd.f32 %v1516, %v1616
    %v1618 = vpop.f32.mrb[0].mxu0
    %v1619 = vpop.f32.mrb[0].mxu0
    %v1620 = vadd.f32 %v1516, %v1619
    %v1621 = vpop.f32.mrb[0].mxu0
    %1622 = vmatprep.mubr.bf16.mxu0 0
    %1623 = vmatmul.mubr.bf16.gmra.mrb[0].mxu0 %v1490
    %v1624 = vpop.f32.mrb[0].mxu0
    %v1625 = vadd.f32 %v1516, %v1624
    %v1626 = vpop.f32.mrb[0].mxu0
    %v1627 = vpop.f32.mrb[0].mxu0
    %v1628 = vadd.f32 %v1516, %v1627
    %v1629 = vpop.f32.mrb[0].mxu0
    %1630 = vmatprep.mubr.bf16.mxu0 0
    %1631 = vmatmul.mubr.bf16.gmra.mrb[0].mxu0 %v1491
    %v1632 = vpop.f32.mrb[0].mxu0
    %v1633 = vadd.f32 %v1516, %v1632
    %v1634 = vpop.f32.mrb[0].mxu0
    %v1635 = vpop.f32.mrb[0].mxu0
    %v1636 = vadd.f32 %v1516, %v1635
    %v1637 = vpop.f32.mrb[0].mxu0
    %1638 = vmatprep.mubr.bf16.mxu0 0
    %1639 = vmatmul.mubr.bf16.gmra.mrb[0].mxu0 %v1492
    %v1640 = vpop.f32.mrb[0].mxu0
    %v1641 = vadd.f32 %v1516, %v1640
    %v1642 = vpop.f32.mrb[0].mxu0
    %v1643 = vpop.f32.mrb[0].mxu0
    %v1644 = vadd.f32 %v1516, %v1643
    %v1645 = vpop.f32.mrb[0].mxu0
    %1646 = vmatprep.mubr.bf16.mxu0 0
    %1647 = vmatmul.mubr.bf16.gmra.mrb[0].mxu0 %v1493
    %v1648 = vpop.f32.mrb[0].mxu0
    %v1649 = vadd.f32 %v1516, %v1648
    %v1650 = vpop.f32.mrb[0].mxu0
    %v1651 = vpop.f32.mrb[0].mxu0
    %v1652 = vadd.f32 %v1516, %v1651
    %v1653 = vpop.f32.mrb[0].mxu0
    %1654 = vmatprep.mubr.bf16.mxu0 0
    %1655 = vmatmul.mubr.bf16.gmra.mrb[0].mxu0 %v1494
    %v1656 = vpop.f32.mrb[0].mxu0
    %v1657 = vadd.f32 %v1516, %v1656
    %v1658 = vpop.f32.mrb[0].mxu0
    %v1659 = vpop.f32.mrb[0].mxu0
    %v1660 = vadd.f32 %v1516, %v1659
    %v1661 = vpop.f32.mrb[0].mxu0
    %1662 = vdwg.mxu0
    %v1663 = vmax.f32 %v1601, 0.0
    %v1664 = vmax.f32 %v1604, 0.0
    %v1665 = vmax.f32 %v1609, 0.0
    %v1666 = vmax.f32 %v1612, 0.0
    %v1667 = vmax.f32 %v1617, 0.0
    %v1668 = vmax.f32 %v1620, 0.0
    %v1669 = vmax.f32 %v1625, 0.0
    %v1670 = vmax.f32 %v1628, 0.0
    %v1671 = vmax.f32 %v1633, 0.0
    %v1672 = vmax.f32 %v1636, 0.0
    %v1673 = vmax.f32 %v1641, 0.0
    %v1674 = vmax.f32 %v1644, 0.0
    %v1675 = vmax.f32 %v1649, 0.0
    %v1676 = vmax.f32 %v1652, 0.0
    %v1677 = vmax.f32 %v1657, 0.0
    %v1678 = vmax.f32 %v1660, 0.0
    %1679 = vmatprep.subr.mxu0 0.0
    %1680 = vmatpush1.msra.mxu0 %v1663
    %1681 = vmatprep.subr.mxu0 0.0
    %1682 = vmatpush1.msra.mxu0 %v1664
    %1683 = vmatprep.subr.mxu0 0.0
    %1684 = vmatpush1.msra.mxu0 %v1665
    %1685 = vmatprep.subr.mxu0 0.0
    %1686 = vmatpush1.msra.mxu0 %v1666
    %1687 = vmatprep.subr.mxu0 0.0
    %1688 = vmatpush1.msra.mxu0 %v1667
    %1689 = vmatprep.subr.mxu0 0.0
    %1690 = vmatpush1.msra.mxu0 %v1668
    %1691 = vmatprep.subr.mxu0 0.0
    %1692 = vmatpush1.msra.mxu0 %v1669
    %1693 = vmatprep.subr.mxu0 0.0
    %1694 = vmatpush1.msra.mxu0 %v1670
    %1695 = vmatprep.subr.mxu0 0.0
    %1696 = vmatpush1.msra.mxu0 %v1671
    %1697 = vmatprep.subr.mxu0 0.0
    %1698 = vmatpush1.msra.mxu0 %v1672
    %1699 = vmatprep.subr.mxu0 0.0
    %1700 = vmatpush1.msra.mxu0 %v1673
    %1701 = vmatprep.subr.mxu0 0.0
    %1702 = vmatpush1.msra.mxu0 %v1674
    %1703 = vmatprep.subr.mxu0 0.0
    %1704 = vmatpush1.msra.mxu0 %v1675
    %1705 = vmatprep.subr.mxu0 0.0
    %1706 = vmatpush1.msra.mxu0 %v1676
    %1707 = vmatprep.subr.mxu0 0.0
    %1708 = vmatpush1.msra.mxu0 %v1677
    %1709 = vmatprep.subr.mxu0 0.0
    %1710 = vmatpush1.msra.mxu0 %v1678
    %1711 = vmatprep.subr.mxu0 0.0
    %1712 = vmatpush1.msra.mxu0 0.0
    %1713 = vmatprep.subr.mxu0 0.0
    %1714 = vmatpush1.msra.mxu0 0.0
    %1715 = vmatprep.subr.mxu0 0.0
    %1716 = vmatpush1.msra.mxu0 0.0
    %1717 = vmatprep.subr.mxu0 0.0
    %1718 = vmatpush1.msra.mxu0 0.0
    %1719 = vmatprep.subr.mxu0 0.0
    %1720 = vmatpush1.msra.mxu0 0.0
    %1721 = vmatprep.subr.mxu0 0.0
    %1722 = vmatpush1.msra.mxu0 0.0
    %1723 = vmatprep.subr.mxu0 0.0
    %1724 = vmatpush1.msra.mxu0 0.0
    %1725 = vmatprep.subr.mxu0 0.0
    %1726 = vmatpush1.msra.mxu0 0.0
    %1727 = vmatprep.subr.mxu0 0.0
    %1728 = vmatpush1.msra.mxu0 0.0
    %1729 = vmatprep.subr.mxu0 0.0
    %1730 = vmatpush1.msra.mxu0 0.0
    %1731 = vmatprep.subr.mxu0 0.0
    %1732 = vmatpush1.msra.mxu0 0.0
    %1733 = vmatprep.subr.mxu0 0.0
    %1734 = vmatpush1.msra.mxu0 0.0
    %1735 = vmatprep.subr.mxu0 0.0
    %1736 = vmatpush1.msra.mxu0 0.0
    %1737 = vmatprep.subr.mxu0 0.0
    %1738 = vmatpush1.msra.mxu0 0.0
    %1739 = vmatprep.subr.mxu0 0.0
    %1740 = vmatpush1.msra.mxu0 0.0
    %1741 = vmatprep.subr.mxu0 0.0
    %1742 = vmatpush1.msra.mxu0 0.0
    %1743 = vmatprep.mubr.f32.mxu0 0.0
    %1744 = vmatmul.mubr.f32.gmra.mrb[0].mxu0 %v352
    %v1745 = vpop.f32.mrb[0].mxu0
    %v1746 = vadd.f32 0.0, %v1745
    %v1747 = vpop.f32.mrb[0].mxu0
    %1748 = vdwg.mxu0
    %v1749 = vmul.f32 %v1746, 0.0625
    %v1750 = vlaneseq
    %v1751 = vshrl.u32 %v1750, 7
    %v1752 = vsub.s32 0, %v1751
    %v1753 = vrot.slane %v1749, %v1752
    %v1754 = vsub.f32 %v1663, %v1753
    %v1755 = vsub.f32 %v1664, %v1753
    %v1756 = vsub.f32 %v1665, %v1753
    %v1757 = vsub.f32 %v1666, %v1753
    %v1758 = vsub.f32 %v1667, %v1753
    %v1759 = vsub.f32 %v1668, %v1753
    %v1760 = vsub.f32 %v1669, %v1753
    %v1761 = vsub.f32 %v1670, %v1753
    %v1762 = vsub.f32 %v1671, %v1753
    %v1763 = vsub.f32 %v1672, %v1753
    %v1764 = vsub.f32 %v1673, %v1753
    %v1765 = vsub.f32 %v1674, %v1753
    %v1766 = vsub.f32 %v1675, %v1753
    %v1767 = vsub.f32 %v1676, %v1753
    %v1768 = vsub.f32 %v1677, %v1753
    %v1769 = vsub.f32 %v1678, %v1753
    %v1770 = vmul.f32 %v1754, %v1754
    %v1771 = vmul.f32 %v1755, %v1755
    %v1772 = vmul.f32 %v1756, %v1756
    %v1773 = vmul.f32 %v1757, %v1757
    %v1774 = vmul.f32 %v1758, %v1758
    %v1775 = vmul.f32 %v1759, %v1759
    %v1776 = vmul.f32 %v1760, %v1760
    %v1777 = vmul.f32 %v1761, %v1761
    %v1778 = vmul.f32 %v1762, %v1762
    %v1779 = vmul.f32 %v1763, %v1763
    %v1780 = vmul.f32 %v1764, %v1764
    %v1781 = vmul.f32 %v1765, %v1765
    %v1782 = vmul.f32 %v1766, %v1766
    %v1783 = vmul.f32 %v1767, %v1767
    %v1784 = vmul.f32 %v1768, %v1768
    %v1785 = vmul.f32 %v1769, %v1769
    %1786 = vmatprep.subr.mxu0 0.0
    %1787 = vmatpush1.msra.mxu0 %v1770
    %1788 = vmatprep.subr.mxu0 0.0
    %1789 = vmatpush1.msra.mxu0 %v1771
    %1790 = vmatprep.subr.mxu0 0.0
    %1791 = vmatpush1.msra.mxu0 %v1772
    %1792 = vmatprep.subr.mxu0 0.0
    %1793 = vmatpush1.msra.mxu0 %v1773
    %1794 = vmatprep.subr.mxu0 0.0
    %1795 = vmatpush1.msra.mxu0 %v1774
    %1796 = vmatprep.subr.mxu0 0.0
    %1797 = vmatpush1.msra.mxu0 %v1775
    %1798 = vmatprep.subr.mxu0 0.0
    %1799 = vmatpush1.msra.mxu0 %v1776
    %1800 = vmatprep.subr.mxu0 0.0
    %1801 = vmatpush1.msra.mxu0 %v1777
    %1802 = vmatprep.subr.mxu0 0.0
    %1803 = vmatpush1.msra.mxu0 %v1778
    %1804 = vmatprep.subr.mxu0 0.0
    %1805 = vmatpush1.msra.mxu0 %v1779
    %1806 = vmatprep.subr.mxu0 0.0
    %1807 = vmatpush1.msra.mxu0 %v1780
    %1808 = vmatprep.subr.mxu0 0.0
    %1809 = vmatpush1.msra.mxu0 %v1781
    %1810 = vmatprep.subr.mxu0 0.0
    %1811 = vmatpush1.msra.mxu0 %v1782
    %1812 = vmatprep.subr.mxu0 0.0
    %1813 = vmatpush1.msra.mxu0 %v1783
    %1814 = vmatprep.subr.mxu0 0.0
    %1815 = vmatpush1.msra.mxu0 %v1784
    %1816 = vmatprep.subr.mxu0 0.0
    %1817 = vmatpush1.msra.mxu0 %v1785
    %1818 = vmatprep.subr.mxu0 0.0
    %1819 = vmatpush1.msra.mxu0 0.0
    %1820 = vmatprep.subr.mxu0 0.0
    %1821 = vmatpush1.msra.mxu0 0.0
    %1822 = vmatprep.subr.mxu0 0.0
    %1823 = vmatpush1.msra.mxu0 0.0
    %1824 = vmatprep.subr.mxu0 0.0
    %1825 = vmatpush1.msra.mxu0 0.0
    %1826 = vmatprep.subr.mxu0 0.0
    %1827 = vmatpush1.msra.mxu0 0.0
    %1828 = vmatprep.subr.mxu0 0.0
    %1829 = vmatpush1.msra.mxu0 0.0
    %1830 = vmatprep.subr.mxu0 0.0
    %1831 = vmatpush1.msra.mxu0 0.0
    %1832 = vmatprep.subr.mxu0 0.0
    %1833 = vmatpush1.msra.mxu0 0.0
    %1834 = vmatprep.subr.mxu0 0.0
    %1835 = vmatpush1.msra.mxu0 0.0
    %1836 = vmatprep.subr.mxu0 0.0
    %1837 = vmatpush1.msra.mxu0 0.0
    %1838 = vmatprep.subr.mxu0 0.0
    %1839 = vmatpush1.msra.mxu0 0.0
    %1840 = vmatprep.subr.mxu0 0.0
    %1841 = vmatpush1.msra.mxu0 0.0
    %1842 = vmatprep.subr.mxu0 0.0
    %1843 = vmatpush1.msra.mxu0 0.0
    %1844 = vmatprep.subr.mxu0 0.0
    %1845 = vmatpush1.msra.mxu0 0.0
    %1846 = vmatprep.subr.mxu0 0.0
    %1847 = vmatpush1.msra.mxu0 0.0
    %1848 = vmatprep.subr.mxu0 0.0
    %1849 = vmatpush1.msra.mxu0 0.0
    %1850 = vmatprep.mubr.f32.mxu0 0.0
    %1851 = vmatmul.mubr.f32.gmra.mrb[0].mxu0 %v352
    %v1852 = vpop.f32.mrb[0].mxu0
    %v1853 = vadd.f32 0.0, %v1852
    %v1854 = vpop.f32.mrb[0].mxu0
    %1855 = vdwg.mxu0
    %v1856 = vmul.f32 %v1853, 0.0625
    %v1857 = vld [vmem:[#allocation22] sm:$0x1]
    %v1859 = vlaneseq
    %v1860 = vshrl.u32 %v1859, 7
    %v1861 = vsub.s32 0, %v1860
    %v1862 = vrot.slane %v1857, %v1861
    %v1864 = vmul.f32 %v1862, %v1754
    %v1865 = vmul.f32 %v1862, %v1755
    %v1866 = vmul.f32 %v1862, %v1756
    %v1867 = vmul.f32 %v1862, %v1757
    %v1868 = vmul.f32 %v1862, %v1758
    %v1869 = vmul.f32 %v1862, %v1759
    %v1870 = vmul.f32 %v1862, %v1760
    %v1871 = vmul.f32 %v1862, %v1761
    %v1872 = vmul.f32 %v1862, %v1762
    %v1873 = vmul.f32 %v1862, %v1763
    %v1874 = vmul.f32 %v1862, %v1764
    %v1875 = vmul.f32 %v1862, %v1765
    %v1876 = vmul.f32 %v1862, %v1766
    %v1877 = vmul.f32 %v1862, %v1767
    %v1878 = vmul.f32 %v1862, %v1768
    %v1879 = vmul.f32 %v1862, %v1769
    %v1880 = vadd.f32 %v1856, 1e-05
    %v1881 = vrsqrt.pop %v1880
    %v1882 = vlaneseq
    %v1883 = vshrl.u32 %v1882, 7
    %v1884 = vsub.s32 0, %v1883
    %v1885 = vrot.slane %v1881, %v1884
    %v1886 = vmul.f32 %v1864, %v1885
    %v1887 = vmul.f32 %v1865, %v1885
    %v1888 = vmul.f32 %v1866, %v1885
    %v1889 = vmul.f32 %v1867, %v1885
    %v1890 = vmul.f32 %v1868, %v1885
    %v1891 = vmul.f32 %v1869, %v1885
    %v1892 = vmul.f32 %v1870, %v1885
    %v1893 = vmul.f32 %v1871, %v1885
    %v1894 = vmul.f32 %v1872, %v1885
    %v1895 = vmul.f32 %v1873, %v1885
    %v1896 = vmul.f32 %v1874, %v1885
    %v1897 = vmul.f32 %v1875, %v1885
    %v1898 = vmul.f32 %v1876, %v1885
    %v1899 = vmul.f32 %v1877, %v1885
    %v1900 = vmul.f32 %v1878, %v1885
    %v1901 = vmul.f32 %v1879, %v1885
    %v1902 = vld [vmem:[#allocation23] sm:$0x1]
    %v1904 = vlaneseq
    %v1905 = vshrl.u32 %v1904, 7
    %v1906 = vsub.s32 0, %v1905
    %v1907 = vrot.slane %v1902, %v1906
    %v1909 = vadd.f32 %v1886, %v1907
    %v1910 = vadd.f32 %v1887, %v1907
    %v1911 = vadd.f32 %v1888, %v1907
    %v1912 = vadd.f32 %v1889, %v1907
    %v1913 = vadd.f32 %v1890, %v1907
    %v1914 = vadd.f32 %v1891, %v1907
    %v1915 = vadd.f32 %v1892, %v1907
    %v1916 = vadd.f32 %v1893, %v1907
    %v1917 = vadd.f32 %v1894, %v1907
    %v1918 = vadd.f32 %v1895, %v1907
    %v1919 = vadd.f32 %v1896, %v1907
    %v1920 = vadd.f32 %v1897, %v1907
    %v1921 = vadd.f32 %v1898, %v1907
    %v1922 = vadd.f32 %v1899, %v1907
    %v1923 = vadd.f32 %v1900, %v1907
    %v1924 = vadd.f32 %v1901, %v1907
    %v1925 = vpack.c.bf16 %v1910, %v1909
    %v1926 = vpack.c.bf16 %v1912, %v1911
    %v1927 = vpack.c.bf16 %v1914, %v1913
    %v1928 = vpack.c.bf16 %v1916, %v1915
    %v1929 = vpack.c.bf16 %v1918, %v1917
    %v1930 = vpack.c.bf16 %v1920, %v1919
    %v1931 = vpack.c.bf16 %v1922, %v1921
    %v1932 = vpack.c.bf16 %v1924, %v1923
    %1933 = vmatprep.subr.bf16.mxu0 0
    %1934 = vmatpush1.bf16.msra.mxu0 %v1925
    %1935 = vmatprep.subr.bf16.mxu0 0
    %1936 = vmatpush1.bf16.msra.mxu0 %v1926
    %1937 = vmatprep.subr.bf16.mxu0 0
    %1938 = vmatpush1.bf16.msra.mxu0 %v1927
    %1939 = vmatprep.subr.bf16.mxu0 0
    %1940 = vmatpush1.bf16.msra.mxu0 %v1928
    %1941 = vmatprep.subr.bf16.mxu0 0
    %1942 = vmatpush1.bf16.msra.mxu0 %v1929
    %1943 = vmatprep.subr.bf16.mxu0 0
    %1944 = vmatpush1.bf16.msra.mxu0 %v1930
    %1945 = vmatprep.subr.bf16.mxu0 0
    %1946 = vmatpush1.bf16.msra.mxu0 %v1931
    %1947 = vmatprep.subr.bf16.mxu0 0
    %1948 = vmatpush1.bf16.msra.mxu0 %v1932
    %1949 = vmatprep.subr.bf16.mxu0 0
    %1950 = vmatpush1.bf16.msra.mxu0 0
    %1951 = vmatprep.subr.bf16.mxu0 0
    %1952 = vmatpush1.bf16.msra.mxu0 0
    %1953 = vmatprep.subr.bf16.mxu0 0
    %1954 = vmatpush1.bf16.msra.mxu0 0
    %1955 = vmatprep.subr.bf16.mxu0 0
    %1956 = vmatpush1.bf16.msra.mxu0 0
    %1957 = vmatprep.subr.bf16.mxu0 0
    %1958 = vmatpush1.bf16.msra.mxu0 0
    %1959 = vmatprep.subr.bf16.mxu0 0
    %1960 = vmatpush1.bf16.msra.mxu0 0
    %1961 = vmatprep.subr.bf16.mxu0 0
    %1962 = vmatpush1.bf16.msra.mxu0 0
    %1963 = vmatprep.subr.bf16.mxu0 0
    %1964 = vmatpush1.bf16.msra.mxu0 0
    %1965 = vmatprep.mubr.bf16.mxu0 0
    %1966 = vmatmul.mubr.bf16.gmra.mrb[0].mxu0 %v385
    %v1967 = vpop.f32.mrb[0].mxu0
    %v1968 = vadd.f32 0.0, %v1967
    %v1969 = vpop.f32.mrb[0].mxu0
    %v1970 = vpop.f32.mrb[0].mxu0
    %v1971 = vadd.f32 0.0, %v1970
    %v1972 = vpop.f32.mrb[0].mxu0
    %1973 = vmatprep.mubr.bf16.mxu0 0
    %1974 = vmatmul.mubr.bf16.gmra.mrb[0].mxu0 %v386
    %v1975 = vpop.f32.mrb[0].mxu0
    %v1976 = vadd.f32 0.0, %v1975
    %v1977 = vpop.f32.mrb[0].mxu0
    %v1978 = vpop.f32.mrb[0].mxu0
    %v1979 = vadd.f32 0.0, %v1978
    %v1980 = vpop.f32.mrb[0].mxu0
    %1981 = vmatprep.mubr.bf16.mxu0 0
    %1982 = vmatmul.mubr.bf16.gmra.mrb[0].mxu0 %v387
    %v1983 = vpop.f32.mrb[0].mxu0
    %v1984 = vadd.f32 0.0, %v1983
    %v1985 = vpop.f32.mrb[0].mxu0
    %v1986 = vpop.f32.mrb[0].mxu0
    %v1987 = vadd.f32 0.0, %v1986
    %v1988 = vpop.f32.mrb[0].mxu0
    %1989 = vmatprep.mubr.bf16.mxu0 0
    %1990 = vmatmul.mubr.bf16.gmra.mrb[0].mxu0 %v388
    %v1991 = vpop.f32.mrb[0].mxu0
    %v1992 = vadd.f32 0.0, %v1991
    %v1993 = vpop.f32.mrb[0].mxu0
    %v1994 = vpop.f32.mrb[0].mxu0
    %v1995 = vadd.f32 0.0, %v1994
    %v1996 = vpop.f32.mrb[0].mxu0
    %1997 = vmatprep.mubr.bf16.mxu0 0
    %1998 = vmatmul.mubr.bf16.gmra.mrb[0].mxu0 %v389
    %v1999 = vpop.f32.mrb[0].mxu0
    %v2000 = vadd.f32 0.0, %v1999
    %v2001 = vpop.f32.mrb[0].mxu0
    %v2002 = vpop.f32.mrb[0].mxu0
    %v2003 = vadd.f32 0.0, %v2002
    %v2004 = vpop.f32.mrb[0].mxu0
    %2005 = vmatprep.mubr.bf16.mxu0 0
    %2006 = vmatmul.mubr.bf16.gmra.mrb[0].mxu0 %v390
    %v2007 = vpop.f32.mrb[0].mxu0
    %v2008 = vadd.f32 0.0, %v2007
    %v2009 = vpop.f32.mrb[0].mxu0
    %v2010 = vpop.f32.mrb[0].mxu0
    %v2011 = vadd.f32 0.0, %v2010
    %v2012 = vpop.f32.mrb[0].mxu0
    %2013 = vmatprep.mubr.bf16.mxu0 0
    %2014 = vmatmul.mubr.bf16.gmra.mrb[0].mxu0 %v391
    %v2015 = vpop.f32.mrb[0].mxu0
    %v2016 = vadd.f32 0.0, %v2015
    %v2017 = vpop.f32.mrb[0].mxu0
    %v2018 = vpop.f32.mrb[0].mxu0
    %v2019 = vadd.f32 0.0, %v2018
    %v2020 = vpop.f32.mrb[0].mxu0
    %2021 = vmatprep.mubr.bf16.mxu0 0
    %2022 = vmatmul.mubr.bf16.gmra.mrb[0].mxu0 %v392
    %v2023 = vpop.f32.mrb[0].mxu0
    %v2024 = vadd.f32 0.0, %v2023
    %v2025 = vpop.f32.mrb[0].mxu0
    %v2026 = vpop.f32.mrb[0].mxu0
    %v2027 = vadd.f32 0.0, %v2026
    %v2028 = vpop.f32.mrb[0].mxu0
    %2029 = vmatprep.mubr.bf16.mxu0 0
    %2030 = vmatmul.mubr.bf16.gmra.mrb[0].mxu0 %v1188
    %v2031 = vpop.f32.mrb[0].mxu0
    %v2032 = vadd.f32 0.0, %v2031
    %v2033 = vpop.f32.mrb[0].mxu0
    %v2034 = vpop.f32.mrb[0].mxu0
    %v2035 = vadd.f32 0.0, %v2034
    %v2036 = vpop.f32.mrb[0].mxu0
    %2037 = vdwg.mxu0
    %v2038 = vpack.c.bf16 %v1971, %v1968
    %v2039 = vpack.c.bf16 %v1979, %v1976
    %v2040 = vpack.c.bf16 %v1987, %v1984
    %v2041 = vpack.c.bf16 %v1995, %v1992
    %v2042 = vpack.c.bf16 %v2003, %v2000
    %v2043 = vpack.c.bf16 %v2011, %v2008
    %v2044 = vpack.c.bf16 %v2019, %v2016
    %v2045 = vpack.c.bf16 %v2027, %v2024
    %v2046 = vld [vmem:[#allocation25] sm:$0xf]
    %v2047 = vld [vmem:[#allocation25 + $0x4] sm:$0xf]
    %v2048 = vld [vmem:[#allocation25 + $0x8] sm:$0xf]
    %v2049 = vld [vmem:[#allocation25 + $0xc] sm:$0xf]
    %v2050 = vld [vmem:[#allocation25 + $0x10] sm:$0xf]
    %v2051 = vld [vmem:[#allocation25 + $0x14] sm:$0xf]
    %v2052 = vld [vmem:[#allocation25 + $0x18] sm:$0xf]
    %v2053 = vld [vmem:[#allocation25 + $0x1c] sm:$0xf]
    %v2054 = vld [vmem:[#allocation25 + $0x20] sm:$0xf]
    %v2055 = vld [vmem:[#allocation25 + $0x24] sm:$0xf]
    %v2056 = vld [vmem:[#allocation25 + $0x28] sm:$0xf]
    %v2057 = vld [vmem:[#allocation25 + $0x2c] sm:$0xf]
    %v2058 = vld [vmem:[#allocation25 + $0x30] sm:$0xf]
    %v2059 = vld [vmem:[#allocation25 + $0x34] sm:$0xf]
    %v2060 = vld [vmem:[#allocation25 + $0x38] sm:$0xf]
    %v2061 = vld [vmem:[#allocation25 + $0x3c] sm:$0xf]
    %v2062 = vld [vmem:[#allocation26] sm:$0x1]
    %v2064 = vlaneseq
    %v2065 = vshrl.u32 %v2064, 7
    %v2066 = vsub.s32 0, %v2065
    %v2067 = vrot.slane %v2062, %v2066
    %v2085 = vunpack.c.l.b16 %v2046
    %v2086 = vunpack.c.l.b16 %v2047
    %v2087 = vunpack.c.l.b16 %v2048
    %v2088 = vunpack.c.l.b16 %v2049
    %v2089 = vunpack.c.l.b16 %v2050
    %v2090 = vunpack.c.l.b16 %v2051
    %v2091 = vunpack.c.l.b16 %v2052
    %v2092 = vunpack.c.l.b16 %v2053
    %v2093 = vunpack.c.l.b16 %v2054
    %v2094 = vunpack.c.l.b16 %v2055
    %v2095 = vunpack.c.l.b16 %v2056
    %v2096 = vunpack.c.l.b16 %v2057
    %v2097 = vunpack.c.l.b16 %v2058
    %v2098 = vunpack.c.l.b16 %v2059
    %v2099 = vunpack.c.l.b16 %v2060
    %v2100 = vunpack.c.l.b16 %v2061
    %v2101 = vpack.c.b16 %v2086, %v2085
    %v2102 = vpack.c.b16 %v2088, %v2087
    %v2103 = vpack.c.b16 %v2090, %v2089
    %v2104 = vpack.c.b16 %v2092, %v2091
    %v2105 = vpack.c.b16 %v2094, %v2093
    %v2106 = vpack.c.b16 %v2096, %v2095
    %v2107 = vpack.c.b16 %v2098, %v2097
    %v2108 = vpack.c.b16 %v2100, %v2099
    %2117 = vmatprep.subr.bf16.mxu0 0
    %2118 = vmatpush1.bf16.msra.mxu0 %v2101
    %2119 = vmatprep.subr.bf16.mxu0 0
    %2120 = vmatpush1.bf16.msra.mxu0 %v2102
    %2121 = vmatprep.subr.bf16.mxu0 0
    %2122 = vmatpush1.bf16.msra.mxu0 %v2103
    %2123 = vmatprep.subr.bf16.mxu0 0
    %2124 = vmatpush1.bf16.msra.mxu0 %v2104
    %2125 = vmatprep.subr.bf16.mxu0 0
    %2126 = vmatpush1.bf16.msra.mxu0 %v2105
    %2127 = vmatprep.subr.bf16.mxu0 0
    %2128 = vmatpush1.bf16.msra.mxu0 %v2106
    %2129 = vmatprep.subr.bf16.mxu0 0
    %2130 = vmatpush1.bf16.msra.mxu0 %v2107
    %2131 = vmatprep.subr.bf16.mxu0 0
    %2132 = vmatpush1.bf16.msra.mxu0 %v2108
    %2133 = vmatprep.subr.bf16.mxu0 0
    %2134 = vmatpush1.bf16.msra.mxu0 0
    %2135 = vmatprep.subr.bf16.mxu0 0
    %2136 = vmatpush1.bf16.msra.mxu0 0
    %2137 = vmatprep.subr.bf16.mxu0 0
    %2138 = vmatpush1.bf16.msra.mxu0 0
    %2139 = vmatprep.subr.bf16.mxu0 0
    %2140 = vmatpush1.bf16.msra.mxu0 0
    %2141 = vmatprep.subr.bf16.mxu0 0
    %2142 = vmatpush1.bf16.msra.mxu0 0
    %2143 = vmatprep.subr.bf16.mxu0 0
    %2144 = vmatpush1.bf16.msra.mxu0 0
    %2145 = vmatprep.subr.bf16.mxu0 0
    %2146 = vmatpush1.bf16.msra.mxu0 0
    %2147 = vmatprep.subr.bf16.mxu0 0
    %2148 = vmatpush1.bf16.msra.mxu0 0
    %2149 = vmatprep.mubr.bf16.mxu0 0
    %2150 = vmatmul.mubr.bf16.gmra.mrb[0].mxu0 %v2038
    %v2151 = vpop.f32.mrb[0].mxu0
    %v2152 = vadd.f32 %v2067, %v2151
    %v2153 = vpop.f32.mrb[0].mxu0
    %v2154 = vpop.f32.mrb[0].mxu0
    %v2155 = vadd.f32 %v2067, %v2154
    %v2156 = vpop.f32.mrb[0].mxu0
    %2157 = vmatprep.mubr.bf16.mxu0 0
    %2158 = vmatmul.mubr.bf16.gmra.mrb[0].mxu0 %v2039
    %v2159 = vpop.f32.mrb[0].mxu0
    %v2160 = vadd.f32 %v2067, %v2159
    %v2161 = vpop.f32.mrb[0].mxu0
    %v2162 = vpop.f32.mrb[0].mxu0
    %v2163 = vadd.f32 %v2067, %v2162
    %v2164 = vpop.f32.mrb[0].mxu0
    %2165 = vmatprep.mubr.bf16.mxu0 0
    %2166 = vmatmul.mubr.bf16.gmra.mrb[0].mxu0 %v2040
    %v2167 = vpop.f32.mrb[0].mxu0
    %v2168 = vadd.f32 %v2067, %v2167
    %v2169 = vpop.f32.mrb[0].mxu0
    %v2170 = vpop.f32.mrb[0].mxu0
    %v2171 = vadd.f32 %v2067, %v2170
    %v2172 = vpop.f32.mrb[0].mxu0
    %2173 = vmatprep.mubr.bf16.mxu0 0
    %2174 = vmatmul.mubr.bf16.gmra.mrb[0].mxu0 %v2041
    %v2175 = vpop.f32.mrb[0].mxu0
    %v2176 = vadd.f32 %v2067, %v2175
    %v2177 = vpop.f32.mrb[0].mxu0
    %v2178 = vpop.f32.mrb[0].mxu0
    %v2179 = vadd.f32 %v2067, %v2178
    %v2180 = vpop.f32.mrb[0].mxu0
    %2181 = vmatprep.mubr.bf16.mxu0 0
    %2182 = vmatmul.mubr.bf16.gmra.mrb[0].mxu0 %v2042
    %v2183 = vpop.f32.mrb[0].mxu0
    %v2184 = vadd.f32 %v2067, %v2183
    %v2185 = vpop.f32.mrb[0].mxu0
    %v2186 = vpop.f32.mrb[0].mxu0
    %v2187 = vadd.f32 %v2067, %v2186
    %v2188 = vpop.f32.mrb[0].mxu0
    %2189 = vmatprep.mubr.bf16.mxu0 0
    %2190 = vmatmul.mubr.bf16.gmra.mrb[0].mxu0 %v2043
    %v2191 = vpop.f32.mrb[0].mxu0
    %v2192 = vadd.f32 %v2067, %v2191
    %v2193 = vpop.f32.mrb[0].mxu0
    %v2194 = vpop.f32.mrb[0].mxu0
    %v2195 = vadd.f32 %v2067, %v2194
    %v2196 = vpop.f32.mrb[0].mxu0
    %2197 = vmatprep.mubr.bf16.mxu0 0
    %2198 = vmatmul.mubr.bf16.gmra.mrb[0].mxu0 %v2044
    %v2199 = vpop.f32.mrb[0].mxu0
    %v2200 = vadd.f32 %v2067, %v2199
    %v2201 = vpop.f32.mrb[0].mxu0
    %v2202 = vpop.f32.mrb[0].mxu0
    %v2203 = vadd.f32 %v2067, %v2202
    %v2204 = vpop.f32.mrb[0].mxu0
    %2205 = vmatprep.mubr.bf16.mxu0 0
    %2206 = vmatmul.mubr.bf16.gmra.mrb[0].mxu0 %v2045
    %v2207 = vpop.f32.mrb[0].mxu0
    %v2208 = vadd.f32 %v2067, %v2207
    %v2209 = vpop.f32.mrb[0].mxu0
    %v2210 = vpop.f32.mrb[0].mxu0
    %v2211 = vadd.f32 %v2067, %v2210
    %v2212 = vpop.f32.mrb[0].mxu0
    %2213 = vdwg.mxu0
    %v2214 = vmax.f32 %v2152, 0.0
    %v2215 = vmax.f32 %v2155, 0.0
    %v2216 = vmax.f32 %v2160, 0.0
    %v2217 = vmax.f32 %v2163, 0.0
    %v2218 = vmax.f32 %v2168, 0.0
    %v2219 = vmax.f32 %v2171, 0.0
    %v2220 = vmax.f32 %v2176, 0.0
    %v2221 = vmax.f32 %v2179, 0.0
    %v2222 = vmax.f32 %v2184, 0.0
    %v2223 = vmax.f32 %v2187, 0.0
    %v2224 = vmax.f32 %v2192, 0.0
    %v2225 = vmax.f32 %v2195, 0.0
    %v2226 = vmax.f32 %v2200, 0.0
    %v2227 = vmax.f32 %v2203, 0.0
    %v2228 = vmax.f32 %v2208, 0.0
    %v2229 = vmax.f32 %v2211, 0.0
    %v2230 = vpack.c.bf16 %v2215, %v2214
    %v2231 = vpack.c.bf16 %v2217, %v2216
    %v2232 = vpack.c.bf16 %v2219, %v2218
    %v2233 = vpack.c.bf16 %v2221, %v2220
    %v2234 = vpack.c.bf16 %v2223, %v2222
    %v2235 = vpack.c.bf16 %v2225, %v2224
    %v2236 = vpack.c.bf16 %v2227, %v2226
    %v2237 = vpack.c.bf16 %v2229, %v2228
    %v2238 = vld [vmem:[#allocation28] sm:$0xf]
    %v2239 = vld [vmem:[#allocation28 + $0x4] sm:$0xf]
    %v2240 = vld [vmem:[#allocation28 + $0x8] sm:$0xf]
    %v2241 = vld [vmem:[#allocation28 + $0xc] sm:$0xf]
    %v2242 = vld [vmem:[#allocation28 + $0x10] sm:$0xf]
    %v2243 = vld [vmem:[#allocation28 + $0x14] sm:$0xf]
    %v2244 = vld [vmem:[#allocation28 + $0x18] sm:$0xf]
    %v2245 = vld [vmem:[#allocation28 + $0x1c] sm:$0xf]
    %v2246 = vld [vmem:[#allocation28 + $0x20] sm:$0xf]
    %v2247 = vld [vmem:[#allocation28 + $0x24] sm:$0xf]
    %v2248 = vld [vmem:[#allocation28 + $0x28] sm:$0xf]
    %v2249 = vld [vmem:[#allocation28 + $0x2c] sm:$0xf]
    %v2250 = vld [vmem:[#allocation28 + $0x30] sm:$0xf]
    %v2251 = vld [vmem:[#allocation28 + $0x34] sm:$0xf]
    %v2252 = vld [vmem:[#allocation28 + $0x38] sm:$0xf]
    %v2253 = vld [vmem:[#allocation28 + $0x3c] sm:$0xf]
    %v2254 = vld [vmem:[#allocation29] sm:$0x1]
    %v2256 = vlaneseq
    %v2257 = vshrl.u32 %v2256, 7
    %v2258 = vsub.s32 0, %v2257
    %v2259 = vrot.slane %v2254, %v2258
    %v2277 = vunpack.c.l.b16 %v2238
    %v2278 = vunpack.c.l.b16 %v2239
    %v2279 = vunpack.c.l.b16 %v2240
    %v2280 = vunpack.c.l.b16 %v2241
    %v2281 = vunpack.c.l.b16 %v2242
    %v2282 = vunpack.c.l.b16 %v2243
    %v2283 = vunpack.c.l.b16 %v2244
    %v2284 = vunpack.c.l.b16 %v2245
    %v2285 = vunpack.c.l.b16 %v2246
    %v2286 = vunpack.c.l.b16 %v2247
    %v2287 = vunpack.c.l.b16 %v2248
    %v2288 = vunpack.c.l.b16 %v2249
    %v2289 = vunpack.c.l.b16 %v2250
    %v2290 = vunpack.c.l.b16 %v2251
    %v2291 = vunpack.c.l.b16 %v2252
    %v2292 = vunpack.c.l.b16 %v2253
    %v2293 = vpack.c.b16 %v2278, %v2277
    %v2294 = vpack.c.b16 %v2280, %v2279
    %v2295 = vpack.c.b16 %v2282, %v2281
    %v2296 = vpack.c.b16 %v2284, %v2283
    %v2297 = vpack.c.b16 %v2286, %v2285
    %v2298 = vpack.c.b16 %v2288, %v2287
    %v2299 = vpack.c.b16 %v2290, %v2289
    %v2300 = vpack.c.b16 %v2292, %v2291
    %2309 = vmatprep.subr.bf16.mxu0 0
    %2310 = vmatpush1.bf16.msra.mxu0 %v2293
    %2311 = vmatprep.subr.bf16.mxu0 0
    %2312 = vmatpush1.bf16.msra.mxu0 %v2294
    %2313 = vmatprep.subr.bf16.mxu0 0
    %2314 = vmatpush1.bf16.msra.mxu0 %v2295
    %2315 = vmatprep.subr.bf16.mxu0 0
    %2316 = vmatpush1.bf16.msra.mxu0 %v2296
    %2317 = vmatprep.subr.bf16.mxu0 0
    %2318 = vmatpush1.bf16.msra.mxu0 %v2297
    %2319 = vmatprep.subr.bf16.mxu0 0
    %2320 = vmatpush1.bf16.msra.mxu0 %v2298
    %2321 = vmatprep.subr.bf16.mxu0 0
    %2322 = vmatpush1.bf16.msra.mxu0 %v2299
    %2323 = vmatprep.subr.bf16.mxu0 0
    %2324 = vmatpush1.bf16.msra.mxu0 %v2300
    %2325 = vmatprep.subr.bf16.mxu0 0
    %2326 = vmatpush1.bf16.msra.mxu0 0
    %2327 = vmatprep.subr.bf16.mxu0 0
    %2328 = vmatpush1.bf16.msra.mxu0 0
    %2329 = vmatprep.subr.bf16.mxu0 0
    %2330 = vmatpush1.bf16.msra.mxu0 0
    %2331 = vmatprep.subr.bf16.mxu0 0
    %2332 = vmatpush1.bf16.msra.mxu0 0
    %2333 = vmatprep.subr.bf16.mxu0 0
    %2334 = vmatpush1.bf16.msra.mxu0 0
    %2335 = vmatprep.subr.bf16.mxu0 0
    %2336 = vmatpush1.bf16.msra.mxu0 0
    %2337 = vmatprep.subr.bf16.mxu0 0
    %2338 = vmatpush1.bf16.msra.mxu0 0
    %2339 = vmatprep.subr.bf16.mxu0 0
    %2340 = vmatpush1.bf16.msra.mxu0 0
    %2341 = vmatprep.mubr.bf16.mxu0 0
    %2342 = vmatmul.mubr.bf16.gmra.mrb[0].mxu0 %v2230
    %v2343 = vpop.f32.mrb[0].mxu0
    %v2344 = vadd.f32 %v2259, %v2343
    %v2345 = vpop.f32.mrb[0].mxu0
    %v2346 = vpop.f32.mrb[0].mxu0
    %v2347 = vadd.f32 %v2259, %v2346
    %v2348 = vpop.f32.mrb[0].mxu0
    %2349 = vmatprep.mubr.bf16.mxu0 0
    %2350 = vmatmul.mubr.bf16.gmra.mrb[0].mxu0 %v2231
    %v2351 = vpop.f32.mrb[0].mxu0
    %v2352 = vadd.f32 %v2259, %v2351
    %v2353 = vpop.f32.mrb[0].mxu0
    %v2354 = vpop.f32.mrb[0].mxu0
    %v2355 = vadd.f32 %v2259, %v2354
    %v2356 = vpop.f32.mrb[0].mxu0
    %2357 = vmatprep.mubr.bf16.mxu0 0
    %2358 = vmatmul.mubr.bf16.gmra.mrb[0].mxu0 %v2232
    %v2359 = vpop.f32.mrb[0].mxu0
    %v2360 = vadd.f32 %v2259, %v2359
    %v2361 = vpop.f32.mrb[0].mxu0
    %v2362 = vpop.f32.mrb[0].mxu0
    %v2363 = vadd.f32 %v2259, %v2362
    %v2364 = vpop.f32.mrb[0].mxu0
    %2365 = vmatprep.mubr.bf16.mxu0 0
    %2366 = vmatmul.mubr.bf16.gmra.mrb[0].mxu0 %v2233
    %v2367 = vpop.f32.mrb[0].mxu0
    %v2368 = vadd.f32 %v2259, %v2367
    %v2369 = vpop.f32.mrb[0].mxu0
    %v2370 = vpop.f32.mrb[0].mxu0
    %v2371 = vadd.f32 %v2259, %v2370
    %v2372 = vpop.f32.mrb[0].mxu0
    %2373 = vmatprep.mubr.bf16.mxu0 0
    %2374 = vmatmul.mubr.bf16.gmra.mrb[0].mxu0 %v2234
    %v2375 = vpop.f32.mrb[0].mxu0
    %v2376 = vadd.f32 %v2259, %v2375
    %v2377 = vpop.f32.mrb[0].mxu0
    %v2378 = vpop.f32.mrb[0].mxu0
    %v2379 = vadd.f32 %v2259, %v2378
    %v2380 = vpop.f32.mrb[0].mxu0
    %2381 = vmatprep.mubr.bf16.mxu0 0
    %2382 = vmatmul.mubr.bf16.gmra.mrb[0].mxu0 %v2235
    %v2383 = vpop.f32.mrb[0].mxu0
    %v2384 = vadd.f32 %v2259, %v2383
    %v2385 = vpop.f32.mrb[0].mxu0
    %v2386 = vpop.f32.mrb[0].mxu0
    %v2387 = vadd.f32 %v2259, %v2386
    %v2388 = vpop.f32.mrb[0].mxu0
    %2389 = vmatprep.mubr.bf16.mxu0 0
    %2390 = vmatmul.mubr.bf16.gmra.mrb[0].mxu0 %v2236
    %v2391 = vpop.f32.mrb[0].mxu0
    %v2392 = vadd.f32 %v2259, %v2391
    %v2393 = vpop.f32.mrb[0].mxu0
    %v2394 = vpop.f32.mrb[0].mxu0
    %v2395 = vadd.f32 %v2259, %v2394
    %v2396 = vpop.f32.mrb[0].mxu0
    %2397 = vmatprep.mubr.bf16.mxu0 0
    %2398 = vmatmul.mubr.bf16.gmra.mrb[0].mxu0 %v2237
    %v2399 = vpop.f32.mrb[0].mxu0
    %v2400 = vadd.f32 %v2259, %v2399
    %v2401 = vpop.f32.mrb[0].mxu0
    %v2402 = vpop.f32.mrb[0].mxu0
    %v2403 = vadd.f32 %v2259, %v2402
    %v2404 = vpop.f32.mrb[0].mxu0
    %2405 = vdwg.mxu0
    %v2406 = vmax.f32 %v2344, 0.0
    %v2407 = vmax.f32 %v2347, 0.0
    %v2408 = vmax.f32 %v2352, 0.0
    %v2409 = vmax.f32 %v2355, 0.0
    %v2410 = vmax.f32 %v2360, 0.0
    %v2411 = vmax.f32 %v2363, 0.0
    %v2412 = vmax.f32 %v2368, 0.0
    %v2413 = vmax.f32 %v2371, 0.0
    %v2414 = vmax.f32 %v2376, 0.0
    %v2415 = vmax.f32 %v2379, 0.0
    %v2416 = vmax.f32 %v2384, 0.0
    %v2417 = vmax.f32 %v2387, 0.0
    %v2418 = vmax.f32 %v2392, 0.0
    %v2419 = vmax.f32 %v2395, 0.0
    %v2420 = vmax.f32 %v2400, 0.0
    %v2421 = vmax.f32 %v2403, 0.0
    %2422 = vmatprep.subr.mxu0 0.0
    %2423 = vmatpush1.msra.mxu0 %v2406
    %2424 = vmatprep.subr.mxu0 0.0
    %2425 = vmatpush1.msra.mxu0 %v2407
    %2426 = vmatprep.subr.mxu0 0.0
    %2427 = vmatpush1.msra.mxu0 %v2408
    %2428 = vmatprep.subr.mxu0 0.0
    %2429 = vmatpush1.msra.mxu0 %v2409
    %2430 = vmatprep.subr.mxu0 0.0
    %2431 = vmatpush1.msra.mxu0 %v2410
    %2432 = vmatprep.subr.mxu0 0.0
    %2433 = vmatpush1.msra.mxu0 %v2411
    %2434 = vmatprep.subr.mxu0 0.0
    %2435 = vmatpush1.msra.mxu0 %v2412
    %2436 = vmatprep.subr.mxu0 0.0
    %2437 = vmatpush1.msra.mxu0 %v2413
    %2438 = vmatprep.subr.mxu0 0.0
    %2439 = vmatpush1.msra.mxu0 %v2414
    %2440 = vmatprep.subr.mxu0 0.0
    %2441 = vmatpush1.msra.mxu0 %v2415
    %2442 = vmatprep.subr.mxu0 0.0
    %2443 = vmatpush1.msra.mxu0 %v2416
    %2444 = vmatprep.subr.mxu0 0.0
    %2445 = vmatpush1.msra.mxu0 %v2417
    %2446 = vmatprep.subr.mxu0 0.0
    %2447 = vmatpush1.msra.mxu0 %v2418
    %2448 = vmatprep.subr.mxu0 0.0
    %2449 = vmatpush1.msra.mxu0 %v2419
    %2450 = vmatprep.subr.mxu0 0.0
    %2451 = vmatpush1.msra.mxu0 %v2420
    %2452 = vmatprep.subr.mxu0 0.0
    %2453 = vmatpush1.msra.mxu0 %v2421
    %2454 = vmatprep.subr.mxu0 0.0
    %2455 = vmatpush1.msra.mxu0 0.0
    %2456 = vmatprep.subr.mxu0 0.0
    %2457 = vmatpush1.msra.mxu0 0.0
    %2458 = vmatprep.subr.mxu0 0.0
    %2459 = vmatpush1.msra.mxu0 0.0
    %2460 = vmatprep.subr.mxu0 0.0
    %2461 = vmatpush1.msra.mxu0 0.0
    %2462 = vmatprep.subr.mxu0 0.0
    %2463 = vmatpush1.msra.mxu0 0.0
    %2464 = vmatprep.subr.mxu0 0.0
    %2465 = vmatpush1.msra.mxu0 0.0
    %2466 = vmatprep.subr.mxu0 0.0
    %2467 = vmatpush1.msra.mxu0 0.0
    %2468 = vmatprep.subr.mxu0 0.0
    %2469 = vmatpush1.msra.mxu0 0.0
    %2470 = vmatprep.subr.mxu0 0.0
    %2471 = vmatpush1.msra.mxu0 0.0
    %2472 = vmatprep.subr.mxu0 0.0
    %2473 = vmatpush1.msra.mxu0 0.0
    %2474 = vmatprep.subr.mxu0 0.0
    %2475 = vmatpush1.msra.mxu0 0.0
    %2476 = vmatprep.subr.mxu0 0.0
    %2477 = vmatpush1.msra.mxu0 0.0
    %2478 = vmatprep.subr.mxu0 0.0
    %2479 = vmatpush1.msra.mxu0 0.0
    %2480 = vmatprep.subr.mxu0 0.0
    %2481 = vmatpush1.msra.mxu0 0.0
    %2482 = vmatprep.subr.mxu0 0.0
    %2483 = vmatpush1.msra.mxu0 0.0
    %2484 = vmatprep.subr.mxu0 0.0
    %2485 = vmatpush1.msra.mxu0 0.0
    %2486 = vmatprep.mubr.f32.mxu0 0.0
    %2487 = vmatmul.mubr.f32.gmra.mrb[0].mxu0 %v352
    %v2488 = vpop.f32.mrb[0].mxu0
    %v2489 = vadd.f32 0.0, %v2488
    %v2490 = vpop.f32.mrb[0].mxu0
    %2491 = vdwg.mxu0
    %v2492 = vmul.f32 %v2489, 0.0625
    %v2493 = vlaneseq
    %v2494 = vshrl.u32 %v2493, 7
    %v2495 = vsub.s32 0, %v2494
    %v2496 = vrot.slane %v2492, %v2495
    %v2497 = vsub.f32 %v2406, %v2496
    %v2498 = vsub.f32 %v2407, %v2496
    %v2499 = vsub.f32 %v2408, %v2496
    %v2500 = vsub.f32 %v2409, %v2496
    %v2501 = vsub.f32 %v2410, %v2496
    %v2502 = vsub.f32 %v2411, %v2496
    %v2503 = vsub.f32 %v2412, %v2496
    %v2504 = vsub.f32 %v2413, %v2496
    %v2505 = vsub.f32 %v2414, %v2496
    %v2506 = vsub.f32 %v2415, %v2496
    %v2507 = vsub.f32 %v2416, %v2496
    %v2508 = vsub.f32 %v2417, %v2496
    %v2509 = vsub.f32 %v2418, %v2496
    %v2510 = vsub.f32 %v2419, %v2496
    %v2511 = vsub.f32 %v2420, %v2496
    %v2512 = vsub.f32 %v2421, %v2496
    %v2513 = vmul.f32 %v2497, %v2497
    %v2514 = vmul.f32 %v2498, %v2498
    %v2515 = vmul.f32 %v2499, %v2499
    %v2516 = vmul.f32 %v2500, %v2500
    %v2517 = vmul.f32 %v2501, %v2501
    %v2518 = vmul.f32 %v2502, %v2502
    %v2519 = vmul.f32 %v2503, %v2503
    %v2520 = vmul.f32 %v2504, %v2504
    %v2521 = vmul.f32 %v2505, %v2505
    %v2522 = vmul.f32 %v2506, %v2506
    %v2523 = vmul.f32 %v2507, %v2507
    %v2524 = vmul.f32 %v2508, %v2508
    %v2525 = vmul.f32 %v2509, %v2509
    %v2526 = vmul.f32 %v2510, %v2510
    %v2527 = vmul.f32 %v2511, %v2511
    %v2528 = vmul.f32 %v2512, %v2512
    %2529 = vmatprep.subr.mxu0 0.0
    %2530 = vmatpush1.msra.mxu0 %v2513
    %2531 = vmatprep.subr.mxu0 0.0
    %2532 = vmatpush1.msra.mxu0 %v2514
    %2533 = vmatprep.subr.mxu0 0.0
    %2534 = vmatpush1.msra.mxu0 %v2515
    %2535 = vmatprep.subr.mxu0 0.0
    %2536 = vmatpush1.msra.mxu0 %v2516
    %2537 = vmatprep.subr.mxu0 0.0
    %2538 = vmatpush1.msra.mxu0 %v2517
    %2539 = vmatprep.subr.mxu0 0.0
    %2540 = vmatpush1.msra.mxu0 %v2518
    %2541 = vmatprep.subr.mxu0 0.0
    %2542 = vmatpush1.msra.mxu0 %v2519
    %2543 = vmatprep.subr.mxu0 0.0
    %2544 = vmatpush1.msra.mxu0 %v2520
    %2545 = vmatprep.subr.mxu0 0.0
    %2546 = vmatpush1.msra.mxu0 %v2521
    %2547 = vmatprep.subr.mxu0 0.0
    %2548 = vmatpush1.msra.mxu0 %v2522
    %2549 = vmatprep.subr.mxu0 0.0
    %2550 = vmatpush1.msra.mxu0 %v2523
    %2551 = vmatprep.subr.mxu0 0.0
    %2552 = vmatpush1.msra.mxu0 %v2524
    %2553 = vmatprep.subr.mxu0 0.0
    %2554 = vmatpush1.msra.mxu0 %v2525
    %2555 = vmatprep.subr.mxu0 0.0
    %2556 = vmatpush1.msra.mxu0 %v2526
    %2557 = vmatprep.subr.mxu0 0.0
    %2558 = vmatpush1.msra.mxu0 %v2527
    %2559 = vmatprep.subr.mxu0 0.0
    %2560 = vmatpush1.msra.mxu0 %v2528
    %2561 = vmatprep.subr.mxu0 0.0
    %2562 = vmatpush1.msra.mxu0 0.0
    %2563 = vmatprep.subr.mxu0 0.0
    %2564 = vmatpush1.msra.mxu0 0.0
    %2565 = vmatprep.subr.mxu0 0.0
    %2566 = vmatpush1.msra.mxu0 0.0
    %2567 = vmatprep.subr.mxu0 0.0
    %2568 = vmatpush1.msra.mxu0 0.0
    %2569 = vmatprep.subr.mxu0 0.0
    %2570 = vmatpush1.msra.mxu0 0.0
    %2571 = vmatprep.subr.mxu0 0.0
    %2572 = vmatpush1.msra.mxu0 0.0
    %2573 = vmatprep.subr.mxu0 0.0
    %2574 = vmatpush1.msra.mxu0 0.0
    %2575 = vmatprep.subr.mxu0 0.0
    %2576 = vmatpush1.msra.mxu0 0.0
    %2577 = vmatprep.subr.mxu0 0.0
    %2578 = vmatpush1.msra.mxu0 0.0
    %2579 = vmatprep.subr.mxu0 0.0
    %2580 = vmatpush1.msra.mxu0 0.0
    %2581 = vmatprep.subr.mxu0 0.0
    %2582 = vmatpush1.msra.mxu0 0.0
    %2583 = vmatprep.subr.mxu0 0.0
    %2584 = vmatpush1.msra.mxu0 0.0
    %2585 = vmatprep.subr.mxu0 0.0
    %2586 = vmatpush1.msra.mxu0 0.0
    %2587 = vmatprep.subr.mxu0 0.0
    %2588 = vmatpush1.msra.mxu0 0.0
    %2589 = vmatprep.subr.mxu0 0.0
    %2590 = vmatpush1.msra.mxu0 0.0
    %2591 = vmatprep.subr.mxu0 0.0
    %2592 = vmatpush1.msra.mxu0 0.0
    %2593 = vmatprep.mubr.f32.mxu0 0.0
    %2594 = vmatmul.mubr.f32.gmra.mrb[0].mxu0 %v352
    %v2595 = vpop.f32.mrb[0].mxu0
    %v2596 = vadd.f32 0.0, %v2595
    %v2597 = vpop.f32.mrb[0].mxu0
    %2598 = vdwg.mxu0
    %v2599 = vmul.f32 %v2596, 0.0625
    %v2600 = vld [vmem:[#allocation31] sm:$0x1]
    %v2602 = vlaneseq
    %v2603 = vshrl.u32 %v2602, 7
    %v2604 = vsub.s32 0, %v2603
    %v2605 = vrot.slane %v2600, %v2604
    %v2607 = vmul.f32 %v2605, %v2497
    %v2608 = vmul.f32 %v2605, %v2498
    %v2609 = vmul.f32 %v2605, %v2499
    %v2610 = vmul.f32 %v2605, %v2500
    %v2611 = vmul.f32 %v2605, %v2501
    %v2612 = vmul.f32 %v2605, %v2502
    %v2613 = vmul.f32 %v2605, %v2503
    %v2614 = vmul.f32 %v2605, %v2504
    %v2615 = vmul.f32 %v2605, %v2505
    %v2616 = vmul.f32 %v2605, %v2506
    %v2617 = vmul.f32 %v2605, %v2507
    %v2618 = vmul.f32 %v2605, %v2508
    %v2619 = vmul.f32 %v2605, %v2509
    %v2620 = vmul.f32 %v2605, %v2510
    %v2621 = vmul.f32 %v2605, %v2511
    %v2622 = vmul.f32 %v2605, %v2512
    %v2623 = vadd.f32 %v2599, 1e-05
    %v2624 = vrsqrt.pop %v2623
    %v2625 = vlaneseq
    %v2626 = vshrl.u32 %v2625, 7
    %v2627 = vsub.s32 0, %v2626
    %v2628 = vrot.slane %v2624, %v2627
    %v2629 = vmul.f32 %v2607, %v2628
    %v2630 = vmul.f32 %v2608, %v2628
    %v2631 = vmul.f32 %v2609, %v2628
    %v2632 = vmul.f32 %v2610, %v2628
    %v2633 = vmul.f32 %v2611, %v2628
    %v2634 = vmul.f32 %v2612, %v2628
    %v2635 = vmul.f32 %v2613, %v2628
    %v2636 = vmul.f32 %v2614, %v2628
    %v2637 = vmul.f32 %v2615, %v2628
    %v2638 = vmul.f32 %v2616, %v2628
    %v2639 = vmul.f32 %v2617, %v2628
    %v2640 = vmul.f32 %v2618, %v2628
    %v2641 = vmul.f32 %v2619, %v2628
    %v2642 = vmul.f32 %v2620, %v2628
    %v2643 = vmul.f32 %v2621, %v2628
    %v2644 = vmul.f32 %v2622, %v2628
    %v2645 = vld [vmem:[#allocation32] sm:$0x1]
    %v2647 = vlaneseq
    %v2648 = vshrl.u32 %v2647, 7
    %v2649 = vsub.s32 0, %v2648
    %v2650 = vrot.slane %v2645, %v2649
    %v2652 = vadd.f32 %v2629, %v2650
    %v2653 = vadd.f32 %v2630, %v2650
    %v2654 = vadd.f32 %v2631, %v2650
    %v2655 = vadd.f32 %v2632, %v2650
    %v2656 = vadd.f32 %v2633, %v2650
    %v2657 = vadd.f32 %v2634, %v2650
    %v2658 = vadd.f32 %v2635, %v2650
    %v2659 = vadd.f32 %v2636, %v2650
    %v2660 = vadd.f32 %v2637, %v2650
    %v2661 = vadd.f32 %v2638, %v2650
    %v2662 = vadd.f32 %v2639, %v2650
    %v2663 = vadd.f32 %v2640, %v2650
    %v2664 = vadd.f32 %v2641, %v2650
    %v2665 = vadd.f32 %v2642, %v2650
    %v2666 = vadd.f32 %v2643, %v2650
    %v2667 = vadd.f32 %v2644, %v2650
    %v2668 = vunpack.c.l.bf16 %v330
    %v2669 = vunpack.c.l.bf16 %v331
    %2670 = vmatprep.subr.mxu0 0.0
    %2671 = vmatpush1.msra.mxu0 %v2652
    %2672 = vmatprep.subr.mxu0 0.0
    %2673 = vmatpush1.msra.mxu0 %v2653
    %2674 = vmatprep.subr.mxu0 0.0
    %2675 = vmatpush1.msra.mxu0 %v2654
    %2676 = vmatprep.subr.mxu0 0.0
    %2677 = vmatpush1.msra.mxu0 %v2655
    %2678 = vmatprep.subr.mxu0 0.0
    %2679 = vmatpush1.msra.mxu0 %v2656
    %2680 = vmatprep.subr.mxu0 0.0
    %2681 = vmatpush1.msra.mxu0 %v2657
    %2682 = vmatprep.subr.mxu0 0.0
    %2683 = vmatpush1.msra.mxu0 %v2658
    %2684 = vmatprep.subr.mxu0 0.0
    %2685 = vmatpush1.msra.mxu0 %v2659
    %2686 = vmatprep.subr.mxu0 0.0
    %2687 = vmatpush1.msra.mxu0 %v2660
    %2688 = vmatprep.subr.mxu0 0.0
    %2689 = vmatpush1.msra.mxu0 %v2661
    %2690 = vmatprep.subr.mxu0 0.0
    %2691 = vmatpush1.msra.mxu0 %v2662
    %2692 = vmatprep.subr.mxu0 0.0
    %2693 = vmatpush1.msra.mxu0 %v2663
    %2694 = vmatprep.subr.mxu0 0.0
    %2695 = vmatpush1.msra.mxu0 %v2664
    %2696 = vmatprep.subr.mxu0 0.0
    %2697 = vmatpush1.msra.mxu0 %v2665
    %2698 = vmatprep.subr.mxu0 0.0
    %2699 = vmatpush1.msra.mxu0 %v2666
    %2700 = vmatprep.subr.mxu0 0.0
    %2701 = vmatpush1.msra.mxu0 %v2667
    %2702 = vmatprep.subr.mxu0 0.0
    %2703 = vmatpush1.msra.mxu0 0.0
    %2704 = vmatprep.subr.mxu0 0.0
    %2705 = vmatpush1.msra.mxu0 0.0
    %2706 = vmatprep.subr.mxu0 0.0
    %2707 = vmatpush1.msra.mxu0 0.0
    %2708 = vmatprep.subr.mxu0 0.0
    %2709 = vmatpush1.msra.mxu0 0.0
    %2710 = vmatprep.subr.mxu0 0.0
    %2711 = vmatpush1.msra.mxu0 0.0
    %2712 = vmatprep.subr.mxu0 0.0
    %2713 = vmatpush1.msra.mxu0 0.0
    %2714 = vmatprep.subr.mxu0 0.0
    %2715 = vmatpush1.msra.mxu0 0.0
    %2716 = vmatprep.subr.mxu0 0.0
    %2717 = vmatpush1.msra.mxu0 0.0
    %2718 = vmatprep.subr.mxu0 0.0
    %2719 = vmatpush1.msra.mxu0 0.0
    %2720 = vmatprep.subr.mxu0 0.0
    %2721 = vmatpush1.msra.mxu0 0.0
    %2722 = vmatprep.subr.mxu0 0.0
    %2723 = vmatpush1.msra.mxu0 0.0
    %2724 = vmatprep.subr.mxu0 0.0
    %2725 = vmatpush1.msra.mxu0 0.0
    %2726 = vmatprep.subr.mxu0 0.0
    %2727 = vmatpush1.msra.mxu0 0.0
    %2728 = vmatprep.subr.mxu0 0.0
    %2729 = vmatpush1.msra.mxu0 0.0
    %2730 = vmatprep.subr.mxu0 0.0
    %2731 = vmatpush1.msra.mxu0 0.0
    %2732 = vmatprep.subr.mxu0 0.0
    %2733 = vmatpush1.msra.mxu0 0.0
    %2734 = vmatprep.mubr.f32.mxu0 0.0
    %2735 = vmatmul.mubr.f32.gmra.mrb[0].mxu0 %v2668
    %v2736 = vpop.f32.mrb[0].mxu0
    %v2737 = vadd.f32 0.0, %v2736
    %v2738 = vpop.f32.mrb[0].mxu0
    %2739 = vmatprep.mubr.f32.mxu0 0.0
    %2740 = vmatmul.mubr.f32.gmra.mrb[0].mxu0 %v2669
    %v2741 = vpop.f32.mrb[0].mxu0
    %v2742 = vadd.f32 0.0, %v2741
    %v2743 = vpop.f32.mrb[0].mxu0
    %2744 = vdwg.mxu0
    %v2745 = vmul.f32 %v1289, %v1289
    %v2746 = vmul.f32 %v1292, %v1292
    %v2747 = vmul.f32 %v2032, %v2032
    %v2748 = vmul.f32 %v2035, %v2035
    %v2749 = vadd.f32 %v2745, %v2747
    %v2750 = vadd.f32 %v2746, %v2748
    %v2751 = vmul.f32 %v2737, %v2737
    %v2752 = vmul.f32 %v2742, %v2742
    %v2753 = vadd.f32 %v2749, %v2751
    %v2754 = vadd.f32 %v2750, %v2752
    %2755 = vadd.xlane.f32.xlu0 %v2753
    %v2756 = vpop.xlane.xlu0 %2755
    %2757 = vadd.xlane.f32.xlu0 %v2754
    %v2758 = vpop.xlane.xlu0 %2757
    %v2759 = vmax.f32 %v2756, 1e-24
    %v2760 = vmax.f32 %v2758, 1e-24
    %v2761 = vrsqrt.pop %v2759
    %v2762 = vrsqrt.pop %v2760
    %v2763 = vmul.f32 %v1289, %v2761
    %v2764 = vmul.f32 %v1292, %v2762
    %2765 = vst [vmem:[#allocation34] sm:$0xff] %v2763
    %2766 = vst [vmem:[#allocation34 + $0x18] sm:$0xff] %v2764
    %v2767 = vmul.f32 %v2032, %v2761
    %v2768 = vmul.f32 %v2035, %v2762
    %2769 = vst [vmem:[#allocation34 + $0x8] sm:$0xff] %v2767
    %2770 = vst [vmem:[#allocation34 + $0x20] sm:$0xff] %v2768
    %v2771 = vmul.f32 %v2737, %v2761
    %v2772 = vmul.f32 %v2742, %v2762
    %2773 = vst [vmem:[#allocation34 + $0x10] sm:$0xff] %v2771
    %2774 = vst [vmem:[#allocation34 + $0x28] sm:$0xff] %v2772
    // Predicated region
    $region162: #{_forward_batch.1} parent=1 // pred_check
      _
    $region163: #{_forward_batch.1} parent=1 // pred_check_branch
      %2776 = sbr.rel (0) target = $region165
    $region164: #{_forward_batch.1} parent=1 // pred_region
      %s2778 = ssub.s32 768, 768
      %2779 = vsyncadd [#allocation4], %s2778
      %s2780 = sshll.u32 [#allocation34], 4
      %s2781 = int_to_ptr.vmem [resolvable:$true] %s2780
      %2786 = dma.vmem_to_hbm [thread:$0]  %s2781, 768, %s20, [#allocation4], 384, 384, 24
    $region165: #{_forward_batch.1} parent=1 // pred_fallthru
      _
    // Predicated region
    $region166: #{_forward_batch.1} parent=1 // pred_check
      _
    $region167: #{_forward_batch.1} parent=1 // pred_check_branch
      %2788 = sbr.rel (0) target = $region169
    $region168: #{_forward_batch.1} parent=1 // pred_region
      %2789 = dma.done [#allocation4], 768
    $region169: #{_forward_batch.1} parent=1 // pred_fallthru
      _
    %2790 = vsyncpa [#allocation3], 1
    %2791 = vsyncpa [#allocation6], 1
    %2792 = vsyncpa [#allocation9], 1
    %2793 = vsyncpa [#allocation12], 1
    %2794 = vsyncpa [#allocation15], 1
    %2795 = vsyncpa [#allocation18], 1
    %2796 = vsyncpa [#allocation21], 1
    %2797 = vsyncpa [#allocation24], 1
    %2798 = vsyncpa [#allocation27], 1
    %2799 = vsyncpa [#allocation30], 1
    %2800 = vsyncpa [#allocation33], 1
    %2801 = vsyncpa [#allocation4], 1

</llo_original>
